<compile_context>
chip_gen: v6e
topology: v6e:2x2x1
jax: 0.10.0
libtpu: 0.0.40
codegen_flags: <defaults>
</compile_context>

<pallas_src>
import functools

import jax
import jax.numpy as jnp
import numpy as np
from jax.experimental import pallas as pl
from jax.experimental.pallas import tpu as pltpu


# ---------------------------------------------------------------------------
# Fused kernel: GroupNorm apply + qkv proj + qk-norm + causal SDPA + out proj
#               + bias + residual, for one (batch, spatial-row-tile) block.
# Block shapes seen by the kernel:
#   x_ref     : (bn, T, C)   un-normalized activations, sequence-major
#   scale_ref : (T, C)       rstd * gamma           (for the current batch)
#   shift_ref : (T, C)       beta - mean * rstd * gamma
#   wqkv_ref  : (C, 3C)      bf16, columns pre-permuted to head-major [nh, 3, hd]
#   wout_ref  : (C, C)       bf16
#   bout_ref  : (1, C)       f32
#   o_ref     : (bn, T, C)   x + attn(groupnorm(x))
# ---------------------------------------------------------------------------
def _fused_gn_attention_kernel(x_ref, scale_ref, shift_ref, wqkv_ref, wout_ref,
                               bout_ref, o_ref, *, num_heads, head_dim, attn_scale):
    bn, T, C = x_ref.shape
    f32 = jnp.float32
    bf16 = jnp.bfloat16
    hp = 3 * head_dim

    # GroupNorm apply (per-(T, C) scale/shift precomputed in the wrapper).  The f32
    # view of x is NOT kept live across the kernel: it is consumed right here and
    # x_ref is re-read at the final residual add (smaller live range -> bigger bn).
    xn = x_ref[...].astype(f32) * scale_ref[...][None] + shift_ref[...][None]

    # qkv projection: bf16 inputs, f32 accumulation (MXU-native path).
    qkv = jnp.dot(xn.reshape(bn * T, C).astype(bf16), wqkv_ref[...],
                  preferred_element_type=f32)                     # (bn*T, 3C)
    qkv = qkv.astype(bf16)        # halves the relayout traffic of the head regroup

    # Head regroup (lanes -> leading batch axis): ONE contiguous (3*hd)-wide slice
    # per head (weights are head-major), cheap axis-0 concat, then q/k/v split off
    # with three lane slices total.
    per_head = [qkv[:, h * hp:(h + 1) * hp].reshape(bn, T, hp)
                for h in range(num_heads)]
    qkv_h = jnp.concatenate(per_head, axis=0)                     # (nh*bn, T, 3*hd)
    q = qkv_h[..., 0:head_dim].astype(f32)
    k = qkv_h[..., head_dim:2 * head_dim].astype(f32)
    v = qkv_h[..., 2 * head_dim:3 * head_dim]                     # stays bf16

    # F.normalize(p=2, dim=-1) with eps=1e-12 (rsqrt -> EUP); fold the attention
    # scale into q so the (T, T) scores never get an extra multiply.  Sums/rsqrt in
    # f32, matmul operands downcast to bf16 for the MXU.
    q = (q * (jax.lax.rsqrt(jnp.maximum(jnp.sum(q * q, axis=-1, keepdims=True),
                                        1e-24)) * attn_scale)).astype(bf16)
    k = (k * jax.lax.rsqrt(jnp.maximum(jnp.sum(k * k, axis=-1, keepdims=True),
                                       1e-24))).astype(bf16)

    # Causal softmax attention over the (short) temporal axis, all heads batched.
    row = jax.lax.broadcasted_iota(jnp.int32, (T, T), 0)
    col = jax.lax.broadcasted_iota(jnp.int32, (T, T), 1)
    s = jnp.einsum('bqd,bkd->bqk', q, k, preferred_element_type=f32)
    # Finite sentinel is safe: qk-normalized scores are bounded by attn_scale.
    s = jnp.where((col <= row)[None], s, jnp.float32(-1e30))
    m = jnp.max(s, axis=-1, keepdims=True)
    p = jnp.exp(s - m)
    # Deliberate decision: approx reciprocal (<0.1% softmax-weight error) is far
    # below the bf16 matmul noise and the decoder's output quantization.
    p = p * pl.reciprocal(jnp.sum(p, axis=-1, keepdims=True), approx=True)
    o = jnp.einsum('bqk,bkd->bqd', p.astype(bf16), v,
                   preferred_element_type=f32)                    # (nh*bn, T, hd)

    # Heads back into lanes, head-major (== torch .transpose(1, 2).flatten(2)).
    o = o.astype(bf16)
    attn = jnp.concatenate([o[h * bn:(h + 1) * bn] for h in range(num_heads)],
                           axis=-1)                               # (bn, T, C)

    # Output projection (bf16 / f32 acc) + bias + fused residual (x_ref re-read).
    y = jnp.dot(attn.reshape(bn * T, C), wout_ref[...], preferred_element_type=f32)
    y = y + bout_ref[...]
    o_ref[...] = (x_ref[...].astype(f32) + y.reshape(bn, T, C)).astype(o_ref.dtype)


# ---------------------------------------------------------------------------
# Generation-aware sizing helpers.
# ---------------------------------------------------------------------------
def _vmem_capacity_bytes():
    try:
        return int(pltpu.get_tpu_info().vmem_capacity_bytes)
    except Exception:
        return 64 * 2 ** 20          # conservative default (v7x-sized)


def _mxu_row_alignment():
    try:
        kind = jax.devices()[0].device_kind.lower()
        if 'v5 lite' in kind or 'v5e' in kind or 'v5litepod' in kind:
            return 128               # v5e MXU rows
    except Exception:
        pass
    return 256                       # v6e / v7x MXU rows


def _pick_spatial_tile(HW, T, C, num_heads, B, x_itemsize, budget_bytes, row_align,
                       min_steps=4):
    """Largest divisor of H*W whose per-step working set fits the budget, preferring
    tiles that keep >= min_steps grid steps (pipeline + both v7x TensorCores busy)
    and MXU-aligned bn*T rows."""
    divisors = [d for d in range(1, HW + 1) if HW % d == 0]

    def working_set(bn):
        rows = bn * T
        io = 4 * rows * C * x_itemsize               # double-buffered in + out tiles
        f32_interm = 4 * rows * C * 4                # xn / qkv / y in f32
        bf16_interm = 6 * rows * C * 2               # bf16 copies around the regroup
        scores = 3 * num_heads * bn * T * T * 4      # s / p / exp temporaries
        return io + f32_interm + bf16_interm + scores

    feasible = [d for d in divisors if working_set(d) <= budget_bytes] or [1]
    steps = lambda d: B * (HW // d)
    with_steps = [d for d in feasible if steps(d) >= min_steps] or feasible
    aligned = [d for d in with_steps if (d * T) % row_align == 0] or with_steps
    return max(aligned)


def _call_fused(x_seq, scale, shift, wqkv, wout, bout, *, bn, num_heads, head_dim,
                vmem_limit, single_buffer_weights):
    B, HW, T, C = x_seq.shape
    kernel = functools.partial(_fused_gn_attention_kernel,
                               num_heads=num_heads, head_dim=head_dim,
                               attn_scale=float(head_dim) ** -0.5)

    def const_spec(shape):
        idx = lambda b, j, _n=len(shape): (0,) * _n
        if single_buffer_weights:
            # Constant-index weights: double-buffering them is pure VMEM waste.
            return pl.BlockSpec(shape, idx, pipeline_mode=pl.Buffered(1))
        return pl.BlockSpec(shape, idx)

    return pl.pallas_call(
        kernel,
        out_shape=jax.ShapeDtypeStruct((B, HW, T, C), x_seq.dtype),
        grid_spec=pltpu.PrefetchScalarGridSpec(
            num_scalar_prefetch=0,
            grid=(B, HW // bn),
            in_specs=[
                pl.BlockSpec((None, bn, T, C), lambda b, j: (b, j, 0, 0)),
                pl.BlockSpec((None, T, C), lambda b, j: (b, 0, 0)),
                pl.BlockSpec((None, T, C), lambda b, j: (b, 0, 0)),
                const_spec((C, 3 * C)),
                const_spec((C, C)),
                const_spec((1, C)),
            ],
            out_specs=pl.BlockSpec((None, bn, T, C), lambda b, j: (b, j, 0, 0)),
        ),
        compiler_params=pltpu.CompilerParams(
            dimension_semantics=("parallel", "parallel"),
            vmem_limit_bytes=int(vmem_limit),
        ),
    )(x_seq, scale, shift, wqkv, wout, bout)


# ---------------------------------------------------------------------------
# One-time parameter preparation (hoisted out of the per-call path).
# ---------------------------------------------------------------------------
def prepare_attention_params(params):
    """bf16 weights + head-major wqkv column permutation, done once per model."""
    gamma = jnp.asarray(params['gn_gamma'], jnp.float32)
    beta = jnp.asarray(params['gn_beta'], jnp.float32)
    wqkv = jnp.asarray(params['wqkv'], jnp.float32)          # (C, 3C), cols [3, nh, hd]
    wout = jnp.asarray(params['wout'], jnp.float32)          # (C, C)
    bout = jnp.asarray(params['bout'], jnp.float32)
    C = wqkv.shape[0]
    head_dim = int(params['head_dim'])
    nh = C // head_dim
    # columns [3, nh, hd] -> head-major [nh, 3, hd]
    wqkv_hm = wqkv.reshape(C, 3, nh, head_dim).transpose(0, 2, 1, 3).reshape(C, 3 * C)
    return {
        'gn_gamma': gamma,
        'gn_beta': beta,
        'wqkv': wqkv_hm.astype(jnp.bfloat16),
        'wout': wout.astype(jnp.bfloat16),
        'bout': bout.reshape(1, C),
        'head_dim': head_dim,
    }


def attention_block_forward(x, prepared, *, num_groups=32, eps=1e-5):
    """AttentionBlock.forward: x + Attention(GroupNormSpatial(x)); x: (B, C, T, H, W).

    `prepared` must come from prepare_attention_params (bf16, head-major wqkv)."""
    B, C, T, H, W = x.shape
    head_dim = int(prepared['head_dim'])
    num_heads = C // head_dim
    HW = H * W
    G = num_groups
    Cg = C // G

    # TODO(synk): the PyTorch T == 1 fast path (v pass-through + out proj) is not
    # special-cased; the general causal path below is mathematically identical.

    # ---- GroupNormSpatial statistics: tiny (B, G, T) two-pass reduction (safe vs
    #      E[x^2]-E[x]^2 cancellation), left to XLA; only their application runs in
    #      the Pallas kernel, so gamma/beta never get broadcast to frame size.
    gamma = prepared['gn_gamma']
    beta = prepared['gn_beta']
    xf = x.astype(jnp.float32).reshape(B, G, Cg, T, HW)
    mean = jnp.mean(xf, axis=(2, 4))                                   # (B, G, T)
    var = jnp.mean(jnp.square(xf - mean[:, :, None, :, None]), axis=(2, 4))
    rstd = jax.lax.rsqrt(var + eps)                                    # (B, G, T)
    scale_c = rstd[:, :, None, :] * gamma.reshape(1, G, Cg, 1)         # (B, G, Cg, T)
    shift_c = beta.reshape(1, G, Cg, 1) - mean[:, :, None, :] * scale_c
    scale = jnp.transpose(scale_c.reshape(B, C, T), (0, 2, 1))         # (B, T, C)
    shift = jnp.transpose(shift_c.reshape(B, C, T), (0, 2, 1))         # (B, T, C)

    # TODO(synk): on v5e the two wrapper-side layout transposes (here and at the end)
    # cost ~2 extra HBM round trips of the activation; folding them into the kernel
    # needs a lane-friendly original-layout trailing dim (W multiple of 128), which
    # real decoder shapes do not guarantee, so they stay in XLA.
    x_seq = jnp.transpose(x, (0, 3, 4, 2, 1)).reshape(B, HW, T, C)     # B C t h w -> B (hw) t C

    wqkv = prepared['wqkv']          # (C, 3C) bf16, head-major columns
    wout = prepared['wout']          # (C, C)  bf16
    bout = prepared['bout']          # (1, C)  f32

    # One consistent, generation-aware VMEM number for both the tile picker and the
    # compiler: 3/4 of physical VMEM (48 MiB on v7x, 96 MiB on v5e/v6e), minus the
    # single-buffered weight residency and the per-batch scale/shift tiles.
    vmem_phys = _vmem_capacity_bytes()
    vmem_limit = (vmem_phys * 3) // 4
    weight_bytes = int(wqkv.size) * 2 + int(wout.size) * 2 + int(bout.size) * 4
    tile_budget = max(vmem_limit - weight_bytes - 4 * T * C * 4 - (4 << 20), 4 << 20)

    bn = _pick_spatial_tile(HW, T, C, num_heads, B, x.dtype.itemsize, tile_budget,
                            _mxu_row_alignment())

    common = dict(bn=bn, num_heads=num_heads, head_dim=head_dim, vmem_limit=vmem_limit)
    try:
        out = _call_fused(x_seq, scale, shift, wqkv, wout, bout,
                          single_buffer_weights=True, **common)
    except Exception:
        # Fallback for Pallas versions without pipeline_mode=pl.Buffered(1) support.
        out = _call_fused(x_seq, scale, shift, wqkv, wout, bout,
                          single_buffer_weights=False, **common)

    # 'B (h w) t C -> B C t h w'
    return jnp.transpose(out.reshape(B, H, W, T, C), (0, 4, 3, 1, 2))


# ---------------------------------------------------------------------------
# Pure-JAX (f32) reference for correctness check.
# ---------------------------------------------------------------------------
def reference_forward(x, params, *, head_dim=32, eps=1e-5, num_groups=32):
    B, C, T, H, W = x.shape
    G = num_groups
    Cg = C // G
    xr = x.reshape(B, G, Cg, T, H, W)
    mean = xr.mean(axis=(2, 4, 5), keepdims=True)
    var = ((xr - mean) ** 2).mean(axis=(2, 4, 5), keepdims=True)
    xn = ((xr - mean) / jnp.sqrt(var + eps)).reshape(B, C, T, H, W)
    xn = xn * params['gn_gamma'].reshape(1, C, 1, 1, 1) + params['gn_beta'].reshape(1, C, 1, 1, 1)

    x_seq = jnp.transpose(xn, (0, 3, 4, 2, 1)).reshape(B * H * W, T, C)
    qkv = x_seq @ params['wqkv']
    nh = C // head_dim
    qkv = qkv.reshape(B * H * W, T, 3, nh, head_dim)
    q = jnp.transpose(qkv[:, :, 0], (0, 2, 1, 3))
    k = jnp.transpose(qkv[:, :, 1], (0, 2, 1, 3))
    v = jnp.transpose(qkv[:, :, 2], (0, 2, 1, 3))
    q = q / jnp.maximum(jnp.linalg.norm(q, axis=-1, keepdims=True), 1e-12)
    k = k / jnp.maximum(jnp.linalg.norm(k, axis=-1, keepdims=True), 1e-12)
    s = jnp.einsum('bhqd,bhkd->bhqk', q, k) * float(head_dim) ** -0.5
    mask = jnp.tril(jnp.ones((T, T), bool))
    s = jnp.where(mask, s, -jnp.inf)
    p = jax.nn.softmax(s, axis=-1)
    o = jnp.einsum('bhqk,bhkd->bhqd', p, v)
    o = jnp.transpose(o, (0, 2, 1, 3)).reshape(B * H * W, T, C)
    y = o @ params['wout'] + params['bout']
    y = jnp.transpose(y.reshape(B, H, W, T, C), (0, 4, 3, 1, 2))
    return x + y


if __name__ == "__main__":
    B, C, T, H, W = 2, 64, 8, 4, 4      # dim=64 -> 32 groups of 2, num_heads = 64/32 = 2
    head_dim = 32

    key = jax.random.PRNGKey(0)
    ks = jax.random.split(key, 6)
    x = jax.random.normal(ks[0], (B, C, T, H, W), jnp.float32)
    params = {
        'gn_gamma': 1.0 + 0.1 * jax.random.normal(ks[1], (C,), jnp.float32),
        'gn_beta': 0.1 * jax.random.normal(ks[2], (C,), jnp.float32),
        'wqkv': 0.05 * jax.random.normal(ks[3], (C, 3 * C), jnp.float32),  # (in, out), no bias
        'wout': 0.05 * jax.random.normal(ks[4], (C, C), jnp.float32),
        'bout': 0.05 * jax.random.normal(ks[5], (C,), jnp.float32),
        'head_dim': head_dim,
    }

    prepared = prepare_attention_params(params)   # one-time: bf16 + head-major wqkv
    out = jax.block_until_ready(attention_block_forward(x, prepared))
    ref = jax.block_until_ready(reference_forward(x, params, head_dim=head_dim))
    np.testing.assert_allclose(np.asarray(out), np.asarray(ref), atol=2e-2, rtol=2e-2)
    print("KERNEL_OK")
</pallas_src>

<mosaic_0001>
module attributes {stable_mosaic.version = 11 : i64} {
  func.func @_fused_gn_attention_kernel(%arg0: i32, %arg1: i32, %arg2: memref<1x8x8x64xf32, #tpu.memory_space<vmem>>, %arg3: memref<1x8x64xf32, #tpu.memory_space<vmem>>, %arg4: memref<1x8x64xf32, #tpu.memory_space<vmem>>, %arg5: memref<64x192xbf16, #tpu.memory_space<vmem>>, %arg6: memref<64x64xbf16, #tpu.memory_space<vmem>>, %arg7: memref<1x64xf32, #tpu.memory_space<vmem>>, %arg8: memref<1x8x8x64xf32, #tpu.memory_space<vmem>>) attributes {dimension_semantics = [#tpu.dimension_semantics<parallel>, #tpu.dimension_semantics<parallel>], iteration_bounds = array<i64: 2, 2>, scalar_prefetch = 0 : i64, scratch_operands = 0 : i64, tpu.core_type = #tpu.core_type<tc>, window_params = [{transform_indices = @transform_0, window_bounds = array<i64: 1, 8, 8, 64>}, {transform_indices = @transform_1, window_bounds = array<i64: 1, 8, 64>}, {transform_indices = @transform_2, window_bounds = array<i64: 1, 8, 64>}, {pipeline_mode = #tpu.pipeline_mode<synchronous>, transform_indices = @transform_3, window_bounds = array<i64: 64, 192>}, {pipeline_mode = #tpu.pipeline_mode<synchronous>, transform_indices = @transform_4, window_bounds = array<i64: 64, 64>}, {pipeline_mode = #tpu.pipeline_mode<synchronous>, transform_indices = @transform_5, window_bounds = array<i64: 1, 64>}, {transform_indices = @transform_6, window_bounds = array<i64: 1, 8, 8, 64>}]} {
    %c0 = arith.constant 0 : index
    %c0_0 = arith.constant 0 : index
    %c0_1 = arith.constant 0 : index
    %c0_2 = arith.constant 0 : index
    %0 = vector.load %arg2[%c0, %c0_0, %c0_1, %c0_2] : memref<1x8x8x64xf32, #tpu.memory_space<vmem>>, vector<1x8x8x64xf32>
    %1 = vector.shape_cast %0 : vector<1x8x8x64xf32> to vector<8x8x64xf32>
    %c0_3 = arith.constant 0 : index
    %c0_4 = arith.constant 0 : index
    %c0_5 = arith.constant 0 : index
    %2 = vector.load %arg3[%c0_3, %c0_4, %c0_5] : memref<1x8x64xf32, #tpu.memory_space<vmem>>, vector<1x8x64xf32>
    %3 = vector.shape_cast %2 : vector<1x8x64xf32> to vector<8x64xf32>
    %4 = vector.shape_cast %3 : vector<8x64xf32> to vector<1x8x64xf32>
    %5 = vector.broadcast %4 : vector<1x8x64xf32> to vector<8x8x64xf32>
    %6 = arith.mulf %1, %5 : vector<8x8x64xf32>
    %c0_6 = arith.constant 0 : index
    %c0_7 = arith.constant 0 : index
    %c0_8 = arith.constant 0 : index
    %7 = vector.load %arg4[%c0_6, %c0_7, %c0_8] : memref<1x8x64xf32, #tpu.memory_space<vmem>>, vector<1x8x64xf32>
    %8 = vector.shape_cast %7 : vector<1x8x64xf32> to vector<8x64xf32>
    %9 = vector.shape_cast %8 : vector<8x64xf32> to vector<1x8x64xf32>
    %10 = vector.broadcast %9 : vector<1x8x64xf32> to vector<8x8x64xf32>
    %11 = arith.addf %6, %10 : vector<8x8x64xf32>
    %12 = vector.shape_cast %11 : vector<8x8x64xf32> to vector<64x64xf32>
    %13 = arith.truncf %12 : vector<64x64xf32> to vector<64x64xbf16>
    %c0_9 = arith.constant 0 : index
    %c0_10 = arith.constant 0 : index
    %14 = vector.load %arg5[%c0_9, %c0_10] : memref<64x192xbf16, #tpu.memory_space<vmem>>, vector<64x192xbf16>
    %cst = arith.constant dense<0.000000e+00> : vector<64x192xf32>
    %15 = tpu.matmul %13, %14, %cst {dimension_numbers = #tpu.dot_dimension_numbers<[1], [0], [0], [1], [0, 0, 1, 1], [], []>} : vector<64x64xbf16>, vector<64x192xbf16>, vector<64x192xf32> -> vector<64x192xf32>
    %16 = arith.truncf %15 : vector<64x192xf32> to vector<64x192xbf16>
    %17 = vector.extract_strided_slice %16 {offsets = [0, 0], sizes = [64, 96], strides = [1, 1]} : vector<64x192xbf16> to vector<64x96xbf16>
    %18 = vector.shape_cast %17 : vector<64x96xbf16> to vector<8x8x96xbf16>
    %19 = vector.extract_strided_slice %16 {offsets = [0, 96], sizes = [64, 96], strides = [1, 1]} : vector<64x192xbf16> to vector<64x96xbf16>
    %20 = vector.shape_cast %19 : vector<64x96xbf16> to vector<8x8x96xbf16>
    %21 = tpu.concatenate %18, %20 in 0 : vector<8x8x96xbf16>, vector<8x8x96xbf16> -> vector<16x8x96xbf16>
    %22 = vector.extract_strided_slice %21 {offsets = [0, 0, 0], sizes = [16, 8, 32], strides = [1, 1, 1]} : vector<16x8x96xbf16> to vector<16x8x32xbf16>
    %23 = arith.extf %22 : vector<16x8x32xbf16> to vector<16x8x32xf32>
    %24 = vector.extract_strided_slice %21 {offsets = [0, 0, 32], sizes = [16, 8, 32], strides = [1, 1, 1]} : vector<16x8x96xbf16> to vector<16x8x32xbf16>
    %25 = arith.extf %24 : vector<16x8x32xbf16> to vector<16x8x32xf32>
    %26 = vector.extract_strided_slice %21 {offsets = [0, 0, 64], sizes = [16, 8, 32], strides = [1, 1, 1]} : vector<16x8x96xbf16> to vector<16x8x32xbf16>
    %27 = arith.mulf %23, %23 : vector<16x8x32xf32>
    %cst_11 = arith.constant dense<0.000000e+00> : vector<16x8xf32>
    %28 = vector.multi_reduction <add>, %27, %cst_11 [2] : vector<16x8x32xf32> to vector<16x8xf32>
    %29 = vector.shape_cast %28 : vector<16x8xf32> to vector<16x8x1xf32>
    %cst_12 = arith.constant 1.000000e-24 : f32
    %30 = vector.broadcast %cst_12 : f32 to vector<16x8x1xf32>
    %31 = arith.maximumf %29, %30 : vector<16x8x1xf32>
    %32 = math.rsqrt %31 : vector<16x8x1xf32>
    %cst_13 = arith.constant 0.176776692 : f32
    %33 = vector.broadcast %cst_13 : f32 to vector<16x8x1xf32>
    %34 = arith.mulf %32, %33 : vector<16x8x1xf32>
    %35 = vector.broadcast %34 : vector<16x8x1xf32> to vector<16x8x32xf32>
    %36 = arith.mulf %23, %35 : vector<16x8x32xf32>
    %37 = arith.truncf %36 : vector<16x8x32xf32> to vector<16x8x32xbf16>
    %38 = arith.mulf %25, %25 : vector<16x8x32xf32>
    %cst_14 = arith.constant dense<0.000000e+00> : vector<16x8xf32>
    %39 = vector.multi_reduction <add>, %38, %cst_14 [2] : vector<16x8x32xf32> to vector<16x8xf32>
    %40 = vector.shape_cast %39 : vector<16x8xf32> to vector<16x8x1xf32>
    %cst_15 = arith.constant 1.000000e-24 : f32
    %41 = vector.broadcast %cst_15 : f32 to vector<16x8x1xf32>
    %42 = arith.maximumf %40, %41 : vector<16x8x1xf32>
    %43 = math.rsqrt %42 : vector<16x8x1xf32>
    %44 = vector.broadcast %43 : vector<16x8x1xf32> to vector<16x8x32xf32>
    %45 = arith.mulf %25, %44 : vector<16x8x32xf32>
    %46 = arith.truncf %45 : vector<16x8x32xf32> to vector<16x8x32xbf16>
    %47 = tpu.iota {dimensions = array<i32: 0>} : vector<8x8xi32>
    %48 = tpu.iota {dimensions = array<i32: 1>} : vector<8x8xi32>
    "tpu.trace_start"() <{level = 10 : i32, message = "bqd,bkd->bqk"}> : () -> ()
    %cst_16 = arith.constant dense<0.000000e+00> : vector<16x8x8xf32>
    %49 = tpu.matmul %37, %46, %cst_16 {dimension_numbers = #tpu.dot_dimension_numbers<[2], [2], [1], [1], [0, 0, 0, 1, 1, 1], [0], [0]>} : vector<16x8x32xbf16>, vector<16x8x32xbf16>, vector<16x8x8xf32> -> vector<16x8x8xf32>
    "tpu.trace_stop"() : () -> ()
    %50 = arith.cmpi sle, %48, %47 : vector<8x8xi32>
    %51 = vector.shape_cast %50 : vector<8x8xi1> to vector<1x8x8xi1>
    %cst_17 = arith.constant -1.000000e+30 : f32
    %52 = vector.shape_cast %51 : vector<1x8x8xi1> to vector<1x8x8xi1>
    %53 = vector.broadcast %52 : vector<1x8x8xi1> to vector<16x8x8xi1>
    %54 = vector.broadcast %cst_17 : f32 to vector<16x8x8xf32>
    %55 = arith.select %53, %49, %54 : vector<16x8x8xi1>, vector<16x8x8xf32>
    %cst_18 = arith.constant dense<0xFF800000> : vector<16x8xf32>
    %56 = vector.multi_reduction <maximumf>, %55, %cst_18 [2] : vector<16x8x8xf32> to vector<16x8xf32>
    %57 = vector.shape_cast %56 : vector<16x8xf32> to vector<16x8x1xf32>
    %58 = vector.broadcast %57 : vector<16x8x1xf32> to vector<16x8x8xf32>
    %59 = arith.subf %55, %58 : vector<16x8x8xf32>
    %60 = math.exp %59 : vector<16x8x8xf32>
    %cst_19 = arith.constant dense<0.000000e+00> : vector<16x8xf32>
    %61 = vector.multi_reduction <add>, %60, %cst_19 [2] : vector<16x8x8xf32> to vector<16x8xf32>
    %62 = vector.shape_cast %61 : vector<16x8xf32> to vector<16x8x1xf32>
    %63 = tpu.reciprocal %62 {approx = true} : vector<16x8x1xf32> -> vector<16x8x1xf32>
    %64 = vector.broadcast %63 : vector<16x8x1xf32> to vector<16x8x8xf32>
    %65 = arith.mulf %60, %64 : vector<16x8x8xf32>
    %66 = arith.truncf %65 : vector<16x8x8xf32> to vector<16x8x8xbf16>
    "tpu.trace_start"() <{level = 10 : i32, message = "bqk,bkd->bqd"}> : () -> ()
    %cst_20 = arith.constant dense<0.000000e+00> : vector<16x8x32xf32>
    %67 = tpu.matmul %66, %26, %cst_20 {dimension_numbers = #tpu.dot_dimension_numbers<[2], [1], [1], [2], [0, 0, 0, 1, 1, 2], [0], [0]>} : vector<16x8x8xbf16>, vector<16x8x32xbf16>, vector<16x8x32xf32> -> vector<16x8x32xf32>
    "tpu.trace_stop"() : () -> ()
    %68 = arith.truncf %67 : vector<16x8x32xf32> to vector<16x8x32xbf16>
    %69 = vector.extract_strided_slice %68 {offsets = [0, 0, 0], sizes = [8, 8, 32], strides = [1, 1, 1]} : vector<16x8x32xbf16> to vector<8x8x32xbf16>
    %70 = vector.extract_strided_slice %68 {offsets = [8, 0, 0], sizes = [8, 8, 32], strides = [1, 1, 1]} : vector<16x8x32xbf16> to vector<8x8x32xbf16>
    %71 = tpu.concatenate %69, %70 in 2 : vector<8x8x32xbf16>, vector<8x8x32xbf16> -> vector<8x8x64xbf16>
    %72 = vector.shape_cast %71 : vector<8x8x64xbf16> to vector<64x64xbf16>
    %c0_21 = arith.constant 0 : index
    %c0_22 = arith.constant 0 : index
    %73 = vector.load %arg6[%c0_21, %c0_22] : memref<64x64xbf16, #tpu.memory_space<vmem>>, vector<64x64xbf16>
    %cst_23 = arith.constant dense<0.000000e+00> : vector<64x64xf32>
    %74 = tpu.matmul %72, %73, %cst_23 {dimension_numbers = #tpu.dot_dimension_numbers<[1], [0], [0], [1], [0, 0, 1, 1], [], []>} : vector<64x64xbf16>, vector<64x64xbf16>, vector<64x64xf32> -> vector<64x64xf32>
    %c0_24 = arith.constant 0 : index
    %c0_25 = arith.constant 0 : index
    %75 = vector.load %arg7[%c0_24, %c0_25] : memref<1x64xf32, #tpu.memory_space<vmem>>, vector<1x64xf32>
    %76 = vector.broadcast %75 : vector<1x64xf32> to vector<64x64xf32>
    %77 = arith.addf %74, %76 : vector<64x64xf32>
    %c0_26 = arith.constant 0 : index
    %c0_27 = arith.constant 0 : index
    %c0_28 = arith.constant 0 : index
    %c0_29 = arith.constant 0 : index
    %78 = vector.load %arg2[%c0_26, %c0_27, %c0_28, %c0_29] : memref<1x8x8x64xf32, #tpu.memory_space<vmem>>, vector<1x8x8x64xf32>
    %79 = vector.shape_cast %78 : vector<1x8x8x64xf32> to vector<8x8x64xf32>
    %80 = vector.shape_cast %77 : vector<64x64xf32> to vector<8x8x64xf32>
    %81 = arith.addf %79, %80 : vector<8x8x64xf32>
    %c0_30 = arith.constant 0 : index
    %c0_31 = arith.constant 0 : index
    %c0_32 = arith.constant 0 : index
    %c0_33 = arith.constant 0 : index
    %82 = vector.load %arg8[%c0_30, %c0_31, %c0_32, %c0_33] : memref<1x8x8x64xf32, #tpu.memory_space<vmem>>, vector<1x8x8x64xf32>
    %83 = vector.shape_cast %82 : vector<1x8x8x64xf32> to vector<8x8x64xf32>
    %84 = vector.shape_cast %81 : vector<8x8x64xf32> to vector<1x8x8x64xf32>
    tpu.vector_store %arg8[%c0_30, %c0_31, %c0_32, %c0_33], %84 {strides = array<i32>} : memref<1x8x8x64xf32, #tpu.memory_space<vmem>>, vector<1x8x8x64xf32>,
    return
  }
  func.func @transform_0(%arg0: i32, %arg1: i32) -> (i32, i32, i32, i32) {
    %c0_i32 = arith.constant 0 : i32
    %c0_i32_0 = arith.constant 0 : i32
    %c0_i32_1 = arith.constant 0 : i32
    return %arg0, %arg1, %c0_i32, %c0_i32_0 : i32, i32, i32, i32
  }
  func.func @transform_1(%arg0: i32, %arg1: i32) -> (i32, i32, i32) {
    %c0_i32 = arith.constant 0 : i32
    %c0_i32_0 = arith.constant 0 : i32
    %c0_i32_1 = arith.constant 0 : i32
    return %arg0, %c0_i32, %c0_i32_0 : i32, i32, i32
  }
  func.func @transform_2(%arg0: i32, %arg1: i32) -> (i32, i32, i32) {
    %c0_i32 = arith.constant 0 : i32
    %c0_i32_0 = arith.constant 0 : i32
    %c0_i32_1 = arith.constant 0 : i32
    return %arg0, %c0_i32, %c0_i32_0 : i32, i32, i32
  }
  func.func @transform_3(%arg0: i32, %arg1: i32) -> (i32, i32) {
    %c0_i32 = arith.constant 0 : i32
    %c0_i32_0 = arith.constant 0 : i32
    %c0_i32_1 = arith.constant 0 : i32
    return %c0_i32, %c0_i32_0 : i32, i32
  }
  func.func @transform_4(%arg0: i32, %arg1: i32) -> (i32, i32) {
    %c0_i32 = arith.constant 0 : i32
    %c0_i32_0 = arith.constant 0 : i32
    %c0_i32_1 = arith.constant 0 : i32
    return %c0_i32, %c0_i32_0 : i32, i32
  }
  func.func @transform_5(%arg0: i32, %arg1: i32) -> (i32, i32) {
    %c0_i32 = arith.constant 0 : i32
    %c0_i32_0 = arith.constant 0 : i32
    %c0_i32_1 = arith.constant 0 : i32
    return %c0_i32, %c0_i32_0 : i32, i32
  }
  func.func @transform_6(%arg0: i32, %arg1: i32) -> (i32, i32, i32, i32) {
    %c0_i32 = arith.constant 0 : i32
    %c0_i32_0 = arith.constant 0 : i32
    %c0_i32_1 = arith.constant 0 : i32
    return %arg0, %arg1, %c0_i32, %c0_i32_0 : i32, i32, i32, i32
  }
}

module attributes {stable_mosaic.version = 11 : i64} {
  func.func @_fused_gn_attention_kernel(%arg0: i32, %arg1: i32, %arg2: memref<1x8x8x64xf32, #tpu.memory_space<vmem>>, %arg3: memref<1x8x64xf32, #tpu.memory_space<vmem>>, %arg4: memref<1x8x64xf32, #tpu.memory_space<vmem>>, %arg5: memref<64x192xbf16, #tpu.memory_space<vmem>>, %arg6: memref<64x64xbf16, #tpu.memory_space<vmem>>, %arg7: memref<1x64xf32, #tpu.memory_space<vmem>>, %arg8: memref<1x8x8x64xf32, #tpu.memory_space<vmem>>) attributes {dimension_semantics = [#tpu.dimension_semantics<parallel>, #tpu.dimension_semantics<parallel>], iteration_bounds = array<i64: 2, 2>, scalar_prefetch = 0 : i64, scratch_operands = 0 : i64, tpu.core_type = #tpu.core_type<tc>, window_params = [{transform_indices = @transform_0, window_bounds = array<i64: 1, 8, 8, 64>}, {transform_indices = @transform_1, window_bounds = array<i64: 1, 8, 64>}, {transform_indices = @transform_2, window_bounds = array<i64: 1, 8, 64>}, {pipeline_mode = #tpu.pipeline_mode<synchronous>, transform_indices = @transform_3, window_bounds = array<i64: 64, 192>}, {pipeline_mode = #tpu.pipeline_mode<synchronous>, transform_indices = @transform_4, window_bounds = array<i64: 64, 64>}, {pipeline_mode = #tpu.pipeline_mode<synchronous>, transform_indices = @transform_5, window_bounds = array<i64: 1, 64>}, {transform_indices = @transform_6, window_bounds = array<i64: 1, 8, 8, 64>}]} {
    %c0 = arith.constant 0 : index
    %c0_0 = arith.constant 0 : index
    %c0_1 = arith.constant 0 : index
    %c0_2 = arith.constant 0 : index
    %0 = vector.load %arg2[%c0, %c0_0, %c0_1, %c0_2] : memref<1x8x8x64xf32, #tpu.memory_space<vmem>>, vector<1x8x8x64xf32>
    %1 = vector.shape_cast %0 : vector<1x8x8x64xf32> to vector<8x8x64xf32>
    %c0_3 = arith.constant 0 : index
    %c0_4 = arith.constant 0 : index
    %c0_5 = arith.constant 0 : index
    %2 = vector.load %arg3[%c0_3, %c0_4, %c0_5] : memref<1x8x64xf32, #tpu.memory_space<vmem>>, vector<1x8x64xf32>
    %3 = vector.shape_cast %2 : vector<1x8x64xf32> to vector<8x64xf32>
    %4 = vector.shape_cast %3 : vector<8x64xf32> to vector<1x8x64xf32>
    %5 = vector.broadcast %4 : vector<1x8x64xf32> to vector<8x8x64xf32>
    %6 = arith.mulf %1, %5 : vector<8x8x64xf32>
    %c0_6 = arith.constant 0 : index
    %c0_7 = arith.constant 0 : index
    %c0_8 = arith.constant 0 : index
    %7 = vector.load %arg4[%c0_6, %c0_7, %c0_8] : memref<1x8x64xf32, #tpu.memory_space<vmem>>, vector<1x8x64xf32>
    %8 = vector.shape_cast %7 : vector<1x8x64xf32> to vector<8x64xf32>
    %9 = vector.shape_cast %8 : vector<8x64xf32> to vector<1x8x64xf32>
    %10 = vector.broadcast %9 : vector<1x8x64xf32> to vector<8x8x64xf32>
    %11 = arith.addf %6, %10 : vector<8x8x64xf32>
    %12 = vector.shape_cast %11 : vector<8x8x64xf32> to vector<64x64xf32>
    %13 = arith.truncf %12 : vector<64x64xf32> to vector<64x64xbf16>
    %c0_9 = arith.constant 0 : index
    %c0_10 = arith.constant 0 : index
    %14 = vector.load %arg5[%c0_9, %c0_10] : memref<64x192xbf16, #tpu.memory_space<vmem>>, vector<64x192xbf16>
    %cst = arith.constant dense<0.000000e+00> : vector<64x192xf32>
    %15 = tpu.matmul %13, %14, %cst {dimension_numbers = #tpu.dot_dimension_numbers<[1], [0], [0], [1], [0, 0, 1, 1], [], []>} : vector<64x64xbf16>, vector<64x192xbf16>, vector<64x192xf32> -> vector<64x192xf32>
    %16 = arith.truncf %15 : vector<64x192xf32> to vector<64x192xbf16>
    %17 = vector.extract_strided_slice %16 {offsets = [0, 0], sizes = [64, 96], strides = [1, 1]} : vector<64x192xbf16> to vector<64x96xbf16>
    %18 = vector.shape_cast %17 : vector<64x96xbf16> to vector<8x8x96xbf16>
    %19 = vector.extract_strided_slice %16 {offsets = [0, 96], sizes = [64, 96], strides = [1, 1]} : vector<64x192xbf16> to vector<64x96xbf16>
    %20 = vector.shape_cast %19 : vector<64x96xbf16> to vector<8x8x96xbf16>
    %21 = tpu.concatenate %18, %20 in 0 : vector<8x8x96xbf16>, vector<8x8x96xbf16> -> vector<16x8x96xbf16>
    %22 = vector.extract_strided_slice %21 {offsets = [0, 0, 0], sizes = [16, 8, 32], strides = [1, 1, 1]} : vector<16x8x96xbf16> to vector<16x8x32xbf16>
    %23 = arith.extf %22 : vector<16x8x32xbf16> to vector<16x8x32xf32>
    %24 = vector.extract_strided_slice %21 {offsets = [0, 0, 32], sizes = [16, 8, 32], strides = [1, 1, 1]} : vector<16x8x96xbf16> to vector<16x8x32xbf16>
    %25 = arith.extf %24 : vector<16x8x32xbf16> to vector<16x8x32xf32>
    %26 = vector.extract_strided_slice %21 {offsets = [0, 0, 64], sizes = [16, 8, 32], strides = [1, 1, 1]} : vector<16x8x96xbf16> to vector<16x8x32xbf16>
    %27 = arith.mulf %23, %23 : vector<16x8x32xf32>
    %cst_11 = arith.constant dense<0.000000e+00> : vector<16x8xf32>
    %28 = vector.multi_reduction <add>, %27, %cst_11 [2] : vector<16x8x32xf32> to vector<16x8xf32>
    %29 = vector.shape_cast %28 : vector<16x8xf32> to vector<16x8x1xf32>
    %cst_12 = arith.constant 1.000000e-24 : f32
    %30 = vector.broadcast %cst_12 : f32 to vector<16x8x1xf32>
    %31 = arith.maximumf %29, %30 : vector<16x8x1xf32>
    %32 = math.rsqrt %31 : vector<16x8x1xf32>
    %cst_13 = arith.constant 0.176776692 : f32
    %33 = vector.broadcast %cst_13 : f32 to vector<16x8x1xf32>
    %34 = arith.mulf %32, %33 : vector<16x8x1xf32>
    %35 = vector.broadcast %34 : vector<16x8x1xf32> to vector<16x8x32xf32>
    %36 = arith.mulf %23, %35 : vector<16x8x32xf32>
    %37 = arith.truncf %36 : vector<16x8x32xf32> to vector<16x8x32xbf16>
    %38 = arith.mulf %25, %25 : vector<16x8x32xf32>
    %cst_14 = arith.constant dense<0.000000e+00> : vector<16x8xf32>
    %39 = vector.multi_reduction <add>, %38, %cst_14 [2] : vector<16x8x32xf32> to vector<16x8xf32>
    %40 = vector.shape_cast %39 : vector<16x8xf32> to vector<16x8x1xf32>
    %cst_15 = arith.constant 1.000000e-24 : f32
    %41 = vector.broadcast %cst_15 : f32 to vector<16x8x1xf32>
    %42 = arith.maximumf %40, %41 : vector<16x8x1xf32>
    %43 = math.rsqrt %42 : vector<16x8x1xf32>
    %44 = vector.broadcast %43 : vector<16x8x1xf32> to vector<16x8x32xf32>
    %45 = arith.mulf %25, %44 : vector<16x8x32xf32>
    %46 = arith.truncf %45 : vector<16x8x32xf32> to vector<16x8x32xbf16>
    %47 = tpu.iota {dimensions = array<i32: 0>} : vector<8x8xi32>
    %48 = tpu.iota {dimensions = array<i32: 1>} : vector<8x8xi32>
    "tpu.trace_start"() <{level = 10 : i32, message = "bqd,bkd->bqk"}> : () -> ()
    %cst_16 = arith.constant dense<0.000000e+00> : vector<16x8x8xf32>
    %49 = tpu.matmul %37, %46, %cst_16 {dimension_numbers = #tpu.dot_dimension_numbers<[2], [2], [1], [1], [0, 0, 0, 1, 1, 1], [0], [0]>} : vector<16x8x32xbf16>, vector<16x8x32xbf16>, vector<16x8x8xf32> -> vector<16x8x8xf32>
    "tpu.trace_stop"() : () -> ()
    %50 = arith.cmpi sle, %48, %47 : vector<8x8xi32>
    %51 = vector.shape_cast %50 : vector<8x8xi1> to vector<1x8x8xi1>
    %cst_17 = arith.constant -1.000000e+30 : f32
    %52 = vector.shape_cast %51 : vector<1x8x8xi1> to vector<1x8x8xi1>
    %53 = vector.broadcast %52 : vector<1x8x8xi1> to vector<16x8x8xi1>
    %54 = vector.broadcast %cst_17 : f32 to vector<16x8x8xf32>
    %55 = arith.select %53, %49, %54 : vector<16x8x8xi1>, vector<16x8x8xf32>
    %cst_18 = arith.constant dense<0xFF800000> : vector<16x8xf32>
    %56 = vector.multi_reduction <maximumf>, %55, %cst_18 [2] : vector<16x8x8xf32> to vector<16x8xf32>
    %57 = vector.shape_cast %56 : vector<16x8xf32> to vector<16x8x1xf32>
    %58 = vector.broadcast %57 : vector<16x8x1xf32> to vector<16x8x8xf32>
    %59 = arith.subf %55, %58 : vector<16x8x8xf32>
    %60 = math.exp %59 : vector<16x8x8xf32>
    %cst_19 = arith.constant dense<0.000000e+00> : vector<16x8xf32>
    %61 = vector.multi_reduction <add>, %60, %cst_19 [2] : vector<16x8x8xf32> to vector<16x8xf32>
    %62 = vector.shape_cast %61 : vector<16x8xf32> to vector<16x8x1xf32>
    %63 = tpu.reciprocal %62 {approx = true} : vector<16x8x1xf32> -> vector<16x8x1xf32>
    %64 = vector.broadcast %63 : vector<16x8x1xf32> to vector<16x8x8xf32>
    %65 = arith.mulf %60, %64 : vector<16x8x8xf32>
    %66 = arith.truncf %65 : vector<16x8x8xf32> to vector<16x8x8xbf16>
    "tpu.trace_start"() <{level = 10 : i32, message = "bqk,bkd->bqd"}> : () -> ()
    %cst_20 = arith.constant dense<0.000000e+00> : vector<16x8x32xf32>
    %67 = tpu.matmul %66, %26, %cst_20 {dimension_numbers = #tpu.dot_dimension_numbers<[2], [1], [1], [2], [0, 0, 0, 1, 1, 2], [0], [0]>} : vector<16x8x8xbf16>, vector<16x8x32xbf16>, vector<16x8x32xf32> -> vector<16x8x32xf32>
    "tpu.trace_stop"() : () -> ()
    %68 = arith.truncf %67 : vector<16x8x32xf32> to vector<16x8x32xbf16>
    %69 = vector.extract_strided_slice %68 {offsets = [0, 0, 0], sizes = [8, 8, 32], strides = [1, 1, 1]} : vector<16x8x32xbf16> to vector<8x8x32xbf16>
    %70 = vector.extract_strided_slice %68 {offsets = [8, 0, 0], sizes = [8, 8, 32], strides = [1, 1, 1]} : vector<16x8x32xbf16> to vector<8x8x32xbf16>
    %71 = tpu.concatenate %69, %70 in 2 : vector<8x8x32xbf16>, vector<8x8x32xbf16> -> vector<8x8x64xbf16>
    %72 = vector.shape_cast %71 : vector<8x8x64xbf16> to vector<64x64xbf16>
    %c0_21 = arith.constant 0 : index
    %c0_22 = arith.constant 0 : index
    %73 = vector.load %arg6[%c0_21, %c0_22] : memref<64x64xbf16, #tpu.memory_space<vmem>>, vector<64x64xbf16>
    %cst_23 = arith.constant dense<0.000000e+00> : vector<64x64xf32>
    %74 = tpu.matmul %72, %73, %cst_23 {dimension_numbers = #tpu.dot_dimension_numbers<[1], [0], [0], [1], [0, 0, 1, 1], [], []>} : vector<64x64xbf16>, vector<64x64xbf16>, vector<64x64xf32> -> vector<64x64xf32>
    %c0_24 = arith.constant 0 : index
    %c0_25 = arith.constant 0 : index
    %75 = vector.load %arg7[%c0_24, %c0_25] : memref<1x64xf32, #tpu.memory_space<vmem>>, vector<1x64xf32>
    %76 = vector.broadcast %75 : vector<1x64xf32> to vector<64x64xf32>
    %77 = arith.addf %74, %76 : vector<64x64xf32>
    %c0_26 = arith.constant 0 : index
    %c0_27 = arith.constant 0 : index
    %c0_28 = arith.constant 0 : index
    %c0_29 = arith.constant 0 : index
    %78 = vector.load %arg2[%c0_26, %c0_27, %c0_28, %c0_29] : memref<1x8x8x64xf32, #tpu.memory_space<vmem>>, vector<1x8x8x64xf32>
    %79 = vector.shape_cast %78 : vector<1x8x8x64xf32> to vector<8x8x64xf32>
    %80 = vector.shape_cast %77 : vector<64x64xf32> to vector<8x8x64xf32>
    %81 = arith.addf %79, %80 : vector<8x8x64xf32>
    %c0_30 = arith.constant 0 : index
    %c0_31 = arith.constant 0 : index
    %c0_32 = arith.constant 0 : index
    %c0_33 = arith.constant 0 : index
    %82 = vector.load %arg8[%c0_30, %c0_31, %c0_32, %c0_33] : memref<1x8x8x64xf32, #tpu.memory_space<vmem>>, vector<1x8x8x64xf32>
    %83 = vector.shape_cast %82 : vector<1x8x8x64xf32> to vector<8x8x64xf32>
    %84 = vector.shape_cast %81 : vector<8x8x64xf32> to vector<1x8x8x64xf32>
    tpu.vector_store %arg8[%c0_30, %c0_31, %c0_32, %c0_33], %84 {strides = array<i32>} : memref<1x8x8x64xf32, #tpu.memory_space<vmem>>, vector<1x8x8x64xf32>,
    return
  }
  func.func @transform_0(%arg0: i32, %arg1: i32) -> (i32, i32, i32, i32) {
    %c0_i32 = arith.constant 0 : i32
    %c0_i32_0 = arith.constant 0 : i32
    %c0_i32_1 = arith.constant 0 : i32
    return %arg0, %arg1, %c0_i32, %c0_i32_0 : i32, i32, i32, i32
  }
  func.func @transform_1(%arg0: i32, %arg1: i32) -> (i32, i32, i32) {
    %c0_i32 = arith.constant 0 : i32
    %c0_i32_0 = arith.constant 0 : i32
    %c0_i32_1 = arith.constant 0 : i32
    return %arg0, %c0_i32, %c0_i32_0 : i32, i32, i32
  }
  func.func @transform_2(%arg0: i32, %arg1: i32) -> (i32, i32, i32) {
    %c0_i32 = arith.constant 0 : i32
    %c0_i32_0 = arith.constant 0 : i32
    %c0_i32_1 = arith.constant 0 : i32
    return %arg0, %c0_i32, %c0_i32_0 : i32, i32, i32
  }
  func.func @transform_3(%arg0: i32, %arg1: i32) -> (i32, i32) {
    %c0_i32 = arith.constant 0 : i32
    %c0_i32_0 = arith.constant 0 : i32
    %c0_i32_1 = arith.constant 0 : i32
    return %c0_i32, %c0_i32_0 : i32, i32
  }
  func.func @transform_4(%arg0: i32, %arg1: i32) -> (i32, i32) {
    %c0_i32 = arith.constant 0 : i32
    %c0_i32_0 = arith.constant 0 : i32
    %c0_i32_1 = arith.constant 0 : i32
    return %c0_i32, %c0_i32_0 : i32, i32
  }
  func.func @transform_5(%arg0: i32, %arg1: i32) -> (i32, i32) {
    %c0_i32 = arith.constant 0 : i32
    %c0_i32_0 = arith.constant 0 : i32
    %c0_i32_1 = arith.constant 0 : i32
    return %c0_i32, %c0_i32_0 : i32, i32
  }
  func.func @transform_6(%arg0: i32, %arg1: i32) -> (i32, i32, i32, i32) {
    %c0_i32 = arith.constant 0 : i32
    %c0_i32_0 = arith.constant 0 : i32
    %c0_i32_1 = arith.constant 0 : i32
    return %arg0, %arg1, %c0_i32, %c0_i32_0 : i32, i32, i32, i32
  }
}

</mosaic_0001>

<llo_original>
// kernel: tpu_custom_call.1
$region0: #{tpu_custom_call.1}
  #allocation0 [shape = 'u32[]', space=smem, size = 0x4, offset = 0x4, fixed_abs, tag = 'smem constant byte address 0x4 - core index']
  #allocation1 [shape = 'u32[144,128]{1,0:T(1,128)}', space=vmem, size = 0x12000, scoped, tag = 'internal scratch']
  %s0 = inlined_call_operand.hbm [shape: f32[2,16,8,64], index: 0, kind: input, shape index: {}]
  %s1 = inlined_call_operand.hbm [shape: f32[2,8,64], index: 1, kind: input, shape index: {}]
  %s2 = inlined_call_operand.hbm [shape: f32[2,8,64], index: 2, kind: input, shape index: {}]
  %s3 = inlined_call_operand.hbm [shape: bf16[64,192], index: 3, kind: input, shape index: {}]
  %s4 = inlined_call_operand.hbm [shape: bf16[64,64], index: 4, kind: input, shape index: {}]
  %s5 = inlined_call_operand.vmem [shape: f32[1,64], index: 5, kind: input, shape index: {}]
  %s6 = inlined_call_operand.hbm [shape: f32[2,16,8,64], index: 6, kind: output, shape index: {}]
  %s7 = sld [smem:[#allocation0]]
  $region77: #{tpu_custom_call.1} parent=0
    _
  %s9 = ssub.s32 1, %s7
  %s10 = scalar_select 0, %s9, %s7
  $region1: #{tpu_custom_call.1} parent=0
    #allocation2 [shape = 'u8[65536]{0}', space=vmem, size = 0x10000, scoped, tag = 'input window, operand 0']
    #allocation3 [shape = 's32[2]{0}', space=sflag, size = 0x8, scoped, tag = 'scoped memory for tpu_custom_call.1']
    #allocation4 [shape = 's32[2]{0}', space=sflag, size = 0x8, scoped, tag = 'scoped memory for tpu_custom_call.1']
    #allocation5 [shape = 'u8[8192]{0}', space=vmem, size = 0x2000, scoped, tag = 'input window, operand 1']
    #allocation6 [shape = 's32[2]{0}', space=sflag, size = 0x8, scoped, tag = 'scoped memory for tpu_custom_call.1']
    #allocation7 [shape = 'u8[8192]{0}', space=vmem, size = 0x2000, scoped, tag = 'input window, operand 2']
    #allocation8 [shape = 'u8[32768]{0}', space=vmem, size = 0x8000, scoped, tag = 'input window, operand 3, single buffered']
    #allocation9 [shape = 's32[1]{0}', space=sflag, size = 0x4, scoped, tag = 'scoped memory for tpu_custom_call.1']
    #allocation10 [shape = 'u8[16384]{0}', space=vmem, size = 0x4000, scoped, tag = 'input window, operand 4, single buffered']
    #allocation11 [shape = 'u8[65536]{0}', space=vmem, size = 0x10000, scoped, tag = 'output window, operand 0']
    %11 = vsyncpa [#allocation3], 0
    %s12 = scalar_lea.sflag [#allocation3], 1
    %13 = vsyncpa %s12, 0
    %14 = vsyncpa [#allocation6], 0
    %s15 = scalar_lea.sflag [#allocation6], 1
    %16 = vsyncpa %s15, 0
    %17 = vsyncpa [#allocation9], 0
    %18 = vsyncpa [#allocation4], 0
    %s19 = scalar_lea.sflag [#allocation4], 1
    %20 = vsyncpa %s19, 0
    loop: start=0, step=1, limit=6
    $region2: #{tpu_custom_call.1} parent=1 // loop_pre_header
      _
    $region3: #{tpu_custom_call.1} parent=1 // loop_header
      %s22 = sphi 0, %s26
      %p23 = scmp.ge.s32.totalorder %s22, 6
      %s29 = sphi 0, %s41
      %s30 = sphi 0, %s37
      %s31 = sphi 0, %s29
      %s32 = sphi 0, %s30
      %s33 = sphi 0, %s31
      %s34 = sphi 0, %s32
      %s46 = sphi 0, %s48
      %s49 = sphi 0, %s46
      %s50 = sphi 0, %s49
      %s66 = sphi 0, %s50
      %s72 = sphi 0, %s74
      %s75 = sphi 0, %s72
      %s76 = sphi 0, %s75
      %s92 = sphi 0, %s76
      %s98 = sphi 0, %s100
      %s101 = sphi 0, %s98
      %s102 = sphi 0, %s101
      %s118 = sphi 0, %s102
      %s122 = sphi 0, %s122
      %s124 = sphi 0, %s122
      %s125 = sphi 0, %s124
      %s139 = sphi 0, %s125
      %s143 = sphi 0, %s143
      %s145 = sphi 0, %s143
      %s146 = sphi 0, %s145
      %s160 = sphi 0, %s146
      %s164 = sphi 0, %s164
      %s166 = sphi 0, %s164
      %s167 = sphi 0, %s166
      %s181 = sphi 0, %s167
      %s189 = sphi 0, %s191
      %s192 = sphi 0, %s189
      %s193 = sphi 0, %s192
      %s209 = sphi 0, %s193
    $region4: #{tpu_custom_call.1} parent=1 // loop_header_branch
      %25 = sbr.rel (%p23) target = $region8
    $region5: #{tpu_custom_call.1} parent=1 // loop_body
      %s27 = ssub.s32 %s22, 1
      %s28 = ssub.s32 %s22, 2
      %s35 = sadd.s32 1, %s30
      %p36 = scmp.ge.s32.totalorder %s35, 2
      %s37 = scalar_select %p36, 0, %s35
      %s38 = sadd.s32 1, %s29
      %s39 = scalar_select %p36, %s38, %s29
      %p40 = scmp.ge.s32.totalorder %s39, 2
      %s41 = scalar_select %p40, 0, %s39
      %s42 = ssub.s32 %s29, %s41
      %s43 = ssub.s32 %s30, %s37
      %s44 = sor.u32 %s42, %s43
      %p45 = scmp.eq.s32.totalorder %s44, 0
      %s47 = sadd.s32 %s46, 1
      %s48 = scalar_select %p45, %s46, %s47
      %p51 = pneg %p45
      %p52 = scmp.eq.s32.totalorder %s22, 3
      %p53 = por %p51, %p52
      %p54 = scmp.ne.s32.totalorder %s46, %s49
      %p55 = scmp.eq.s32.totalorder %s22, 0
      %p56 = por %p54, %p55
      %p57 = scmp.ne.s32.totalorder %s46, %s49
      %p58 = scmp.eq.s32.totalorder %s27, 3
      %p59 = por %p57, %p58
      %p60 = scmp.ne.s32.totalorder %s49, %s50
      %p61 = scmp.eq.s32.totalorder %s27, 0
      %p62 = por %p60, %p61
      %p63 = scmp.ne.s32.totalorder %s49, %s50
      %p64 = scmp.eq.s32.totalorder %s28, 3
      %p65 = por %p63, %p64
      %p67 = scmp.ne.s32.totalorder %s50, %s66
      %p68 = scmp.eq.s32.totalorder %s28, 0
      %p69 = por %p67, %p68
      %s70 = ssub.s32 %s29, %s41
      %p71 = scmp.eq.s32.totalorder %s70, 0
      %s73 = sadd.s32 %s72, 1
      %s74 = scalar_select %p71, %s72, %s73
      %p77 = pneg %p71
      %p78 = scmp.eq.s32.totalorder %s22, 3
      %p79 = por %p77, %p78
      %p80 = scmp.ne.s32.totalorder %s72, %s75
      %p81 = scmp.eq.s32.totalorder %s22, 0
      %p82 = por %p80, %p81
      %p83 = scmp.ne.s32.totalorder %s72, %s75
      %p84 = scmp.eq.s32.totalorder %s27, 3
      %p85 = por %p83, %p84
      %p86 = scmp.ne.s32.totalorder %s75, %s76
      %p87 = scmp.eq.s32.totalorder %s27, 0
      %p88 = por %p86, %p87
      %p89 = scmp.ne.s32.totalorder %s75, %s76
      %p90 = scmp.eq.s32.totalorder %s28, 3
      %p91 = por %p89, %p90
      %p93 = scmp.ne.s32.totalorder %s76, %s92
      %p94 = scmp.eq.s32.totalorder %s28, 0
      %p95 = por %p93, %p94
      %s96 = ssub.s32 %s29, %s41
      %p97 = scmp.eq.s32.totalorder %s96, 0
      %s99 = sadd.s32 %s98, 1
      %s100 = scalar_select %p97, %s98, %s99
      %p103 = pneg %p97
      %p104 = scmp.eq.s32.totalorder %s22, 3
      %p105 = por %p103, %p104
      %p106 = scmp.ne.s32.totalorder %s98, %s101
      %p107 = scmp.eq.s32.totalorder %s22, 0
      %p108 = por %p106, %p107
      %p109 = scmp.ne.s32.totalorder %s98, %s101
      %p110 = scmp.eq.s32.totalorder %s27, 3
      %p111 = por %p109, %p110
      %p112 = scmp.ne.s32.totalorder %s101, %s102
      %p113 = scmp.eq.s32.totalorder %s27, 0
      %p114 = por %p112, %p113
      %p115 = scmp.ne.s32.totalorder %s101, %s102
      %p116 = scmp.eq.s32.totalorder %s28, 3
      %p117 = por %p115, %p116
      %p119 = scmp.ne.s32.totalorder %s102, %s118
      %p120 = scmp.eq.s32.totalorder %s28, 0
      %p121 = por %p119, %p120
      %s123 = sadd.s32 %s122, 1
      %p126 = scmp.eq.s32.totalorder %s22, 3
      %p127 = scmp.ne.s32.totalorder %s122, %s124
      %p128 = scmp.eq.s32.totalorder %s22, 0
      %p129 = por %p127, %p128
      %p130 = scmp.ne.s32.totalorder %s122, %s124
      %p131 = scmp.eq.s32.totalorder %s27, 3
      %p132 = por %p130, %p131
      %p133 = scmp.ne.s32.totalorder %s124, %s125
      %p134 = scmp.eq.s32.totalorder %s27, 0
      %p135 = por %p133, %p134
      %p136 = scmp.ne.s32.totalorder %s124, %s125
      %p137 = scmp.eq.s32.totalorder %s28, 3
      %p138 = por %p136, %p137
      %p140 = scmp.ne.s32.totalorder %s125, %s139
      %p141 = scmp.eq.s32.totalorder %s28, 0
      %p142 = por %p140, %p141
      %s144 = sadd.s32 %s143, 1
      %p147 = scmp.eq.s32.totalorder %s22, 3
      %p148 = scmp.ne.s32.totalorder %s143, %s145
      %p149 = scmp.eq.s32.totalorder %s22, 0
      %p150 = por %p148, %p149
      %p151 = scmp.ne.s32.totalorder %s143, %s145
      %p152 = scmp.eq.s32.totalorder %s27, 3
      %p153 = por %p151, %p152
      %p154 = scmp.ne.s32.totalorder %s145, %s146
      %p155 = scmp.eq.s32.totalorder %s27, 0
      %p156 = por %p154, %p155
      %p157 = scmp.ne.s32.totalorder %s145, %s146
      %p158 = scmp.eq.s32.totalorder %s28, 3
      %p159 = por %p157, %p158
      %p161 = scmp.ne.s32.totalorder %s146, %s160
      %p162 = scmp.eq.s32.totalorder %s28, 0
      %p163 = por %p161, %p162
      %s165 = sadd.s32 %s164, 1
      %p168 = scmp.eq.s32.totalorder %s22, 3
      %p169 = scmp.ne.s32.totalorder %s164, %s166
      %p170 = scmp.eq.s32.totalorder %s22, 0
      %p171 = por %p169, %p170
      %p172 = scmp.ne.s32.totalorder %s164, %s166
      %p173 = scmp.eq.s32.totalorder %s27, 3
      %p174 = por %p172, %p173
      %p175 = scmp.ne.s32.totalorder %s166, %s167
      %p176 = scmp.eq.s32.totalorder %s27, 0
      %p177 = por %p175, %p176
      %p178 = scmp.ne.s32.totalorder %s166, %s167
      %p179 = scmp.eq.s32.totalorder %s28, 3
      %p180 = por %p178, %p179
      %p182 = scmp.ne.s32.totalorder %s167, %s181
      %p183 = scmp.eq.s32.totalorder %s28, 0
      %p184 = por %p182, %p183
      %s185 = ssub.s32 %s29, %s41
      %s186 = ssub.s32 %s30, %s37
      %s187 = sor.u32 %s185, %s186
      %p188 = scmp.eq.s32.totalorder %s187, 0
      %s190 = sadd.s32 %s189, 1
      %s191 = scalar_select %p188, %s189, %s190
      %p194 = pneg %p188
      %p195 = scmp.eq.s32.totalorder %s22, 3
      %p196 = por %p194, %p195
      %p197 = scmp.ne.s32.totalorder %s189, %s192
      %p198 = scmp.eq.s32.totalorder %s22, 0
      %p199 = por %p197, %p198
      %p200 = scmp.ne.s32.totalorder %s189, %s192
      %p201 = scmp.eq.s32.totalorder %s27, 3
      %p202 = por %p200, %p201
      %p203 = scmp.ne.s32.totalorder %s192, %s193
      %p204 = scmp.eq.s32.totalorder %s27, 0
      %p205 = por %p203, %p204
      %p206 = scmp.ne.s32.totalorder %s192, %s193
      %p207 = scmp.eq.s32.totalorder %s28, 3
      %p208 = por %p206, %p207
      %p210 = scmp.ne.s32.totalorder %s193, %s209
      %p211 = scmp.eq.s32.totalorder %s28, 0
      %p212 = por %p210, %p211
      %p213 = scmp.le.s32.totalorder 1, %s22
      %p214 = scmp.lt.s32.totalorder %s22, 5
      %p215 = pnand %p213, %p214
      %p216 = pneg %p215
      // Predicated region
      $region9: #{tpu_custom_call.1} parent=5 // pred_check
        _
      $region10: #{tpu_custom_call.1} parent=5 // pred_check_branch
        %218 = sbr.rel (%p215) target = $region12
      $region11: #{tpu_custom_call.1} parent=5 // pred_region
        %s219 = ssub.s32 %s22, 1
        // Predicated region
        $region13: #{tpu_custom_call.1} parent=11 // pred_check
          %p220 = pneg %p135
        $region14: #{tpu_custom_call.1} parent=11 // pred_check_branch
          %222 = sbr.rel (%p220) target = $region16
        $region15: #{tpu_custom_call.1} parent=11 // pred_region
          %s224 = ssub.s32 1024, 1024
          %225 = vsyncadd [#allocation9], %s224
          %s226 = sshll.u32 [#allocation8], 4
          %s227 = int_to_ptr.vmem [resolvable:$true] %s226
          %232 = dma.hbm_to_vmem [thread:$0]  %s3, 1024, %s227, [#allocation9], 128, 128, 8
        $region16: #{tpu_custom_call.1} parent=11 // pred_fallthru
          _
        // Predicated region
        $region17: #{tpu_custom_call.1} parent=11 // pred_check
          %p233 = pneg %p156
        $region18: #{tpu_custom_call.1} parent=11 // pred_check_branch
          %235 = sbr.rel (%p233) target = $region20
        $region19: #{tpu_custom_call.1} parent=11 // pred_region
          %s237 = ssub.s32 512, 512
          %238 = vsyncadd [#allocation9], %s237
          %s239 = sshll.u32 [#allocation10], 4
          %s240 = int_to_ptr.vmem [resolvable:$true] %s239
          %245 = dma.hbm_to_vmem [thread:$0]  %s4, 512, %s240, [#allocation9], 64, 64, 4
        $region20: #{tpu_custom_call.1} parent=11 // pred_fallthru
          _
        // Predicated region
        $region21: #{tpu_custom_call.1} parent=11 // pred_check
          %p246 = pneg %p177
        $region22: #{tpu_custom_call.1} parent=11 // pred_check_branch
          %248 = sbr.rel (%p246) target = $region24
        $region23: #{tpu_custom_call.1} parent=11 // pred_region
          _
        $region24: #{tpu_custom_call.1} parent=11 // pred_fallthru
          _
      $region12: #{tpu_custom_call.1} parent=5 // pred_fallthru
        _
      %p249 = scmp.lt.s32.totalorder %s22, 4
      // Predicated region
      $region25: #{tpu_custom_call.1} parent=5 // pred_check
        %p250 = pneg %p249
      $region26: #{tpu_custom_call.1} parent=5 // pred_check_branch
        %252 = sbr.rel (%p250) target = $region28
      $region27: #{tpu_custom_call.1} parent=5 // pred_region
        // Predicated region
        $region29: #{tpu_custom_call.1} parent=27 // pred_check
          %p253 = pneg %p56
        $region30: #{tpu_custom_call.1} parent=27 // pred_check_branch
          %255 = sbr.rel (%p253) target = $region32
        $region31: #{tpu_custom_call.1} parent=27 // pred_region
          %s256 = sand.u32 %s46, 1
          %s257 = scalar_lea.sflag [#allocation3], %s256
          %s258 = sand.u32 %s46, 1
          %s259 = smul.addr %s258, 64
          %s260 = scalar_lea.vmem [#allocation2], %s259
          %s261 = smul.u32 8, %s30
          %s263 = ssub.s32 1024, 1024
          %264 = vsyncadd %s257, %s263
          %s265 = smul.addr %s29, 16
          %s266 = sadd.s32 %s261, %s265
          %s267 = smul.addr %s266, 128
          %s268 = scalar_lea.hbm %s0, %s267
          %s269 = sshll.u32 %s260, 4
          %s270 = int_to_ptr.vmem [resolvable:$true] %s269
          %275 = dma.hbm_to_vmem [thread:$0]  %s268, 1024, %s270, %s257, 128, 128, 8
        $region32: #{tpu_custom_call.1} parent=27 // pred_fallthru
          _
        // Predicated region
        $region33: #{tpu_custom_call.1} parent=27 // pred_check
          %p276 = pneg %p82
        $region34: #{tpu_custom_call.1} parent=27 // pred_check_branch
          %278 = sbr.rel (%p276) target = $region36
        $region35: #{tpu_custom_call.1} parent=27 // pred_region
          %s279 = sand.u32 %s22, 1
          %s280 = scalar_lea.sflag [#allocation6], %s279
          %s281 = sand.u32 %s72, 1
          %s282 = smul.addr %s281, 8
          %s283 = scalar_lea.vmem [#allocation5], %s282
          %s285 = ssub.s32 128, 128
          %286 = vsyncadd %s280, %s285
          %s287 = smul.addr %s29, 128
          %s288 = scalar_lea.hbm %s1, %s287
          %s290 = sshll.u32 %s283, 4
          %s291 = int_to_ptr.vmem [resolvable:$true] %s290
          %293 = dma.hbm_to_vmem [thread:$0]  %s288, 128, %s291, %s280
        $region36: #{tpu_custom_call.1} parent=27 // pred_fallthru
          _
        // Predicated region
        $region37: #{tpu_custom_call.1} parent=27 // pred_check
          %p294 = pneg %p108
        $region38: #{tpu_custom_call.1} parent=27 // pred_check_branch
          %296 = sbr.rel (%p294) target = $region40
        $region39: #{tpu_custom_call.1} parent=27 // pred_region
          %s297 = sand.u32 %s22, 1
          %s298 = scalar_lea.sflag [#allocation6], %s297
          %s299 = sand.u32 %s98, 1
          %s300 = smul.addr %s299, 8
          %s301 = scalar_lea.vmem [#allocation7], %s300
          %s303 = ssub.s32 128, 128
          %304 = vsyncadd %s298, %s303
          %s305 = smul.addr %s29, 128
          %s306 = scalar_lea.hbm %s2, %s305
          %s308 = sshll.u32 %s301, 4
          %s309 = int_to_ptr.vmem [resolvable:$true] %s308
          %311 = dma.hbm_to_vmem [thread:$0]  %s306, 128, %s309, %s298
        $region40: #{tpu_custom_call.1} parent=27 // pred_fallthru
          _
      $region28: #{tpu_custom_call.1} parent=5 // pred_fallthru
        _
      %p312 = scmp.le.s32.totalorder 1, %s22
      %p313 = scmp.lt.s32.totalorder %s22, 5
      %p314 = pnand %p312, %p313
      %p315 = pneg %p314
      // Predicated region
      $region41: #{tpu_custom_call.1} parent=5 // pred_check
        _
      $region42: #{tpu_custom_call.1} parent=5 // pred_check_branch
        %317 = sbr.rel (%p314) target = $region44
      $region43: #{tpu_custom_call.1} parent=5 // pred_region
        %s318 = ssub.s32 %s22, 1
        %s319 = sand.u32 %s49, 1
        %s320 = scalar_lea.sflag [#allocation3], %s319
        %s321 = sand.u32 %s49, 1
        %s322 = smul.addr %s321, 64
        %s323 = scalar_lea.vmem [#allocation2], %s322
        // Predicated region
        $region45: #{tpu_custom_call.1} parent=43 // pred_check
          %p324 = pneg %p62
        $region46: #{tpu_custom_call.1} parent=43 // pred_check_branch
          %326 = sbr.rel (%p324) target = $region48
        $region47: #{tpu_custom_call.1} parent=43 // pred_region
          %327 = dma.done %s320, 1024
        $region48: #{tpu_custom_call.1} parent=43 // pred_fallthru
          _
        %s328 = sand.u32 %s27, 1
        %s329 = scalar_lea.sflag [#allocation6], %s328
        %s330 = sand.u32 %s75, 1
        %s331 = smul.addr %s330, 8
        %s332 = scalar_lea.vmem [#allocation5], %s331
        // Predicated region
        $region49: #{tpu_custom_call.1} parent=43 // pred_check
          %p333 = pneg %p88
        $region50: #{tpu_custom_call.1} parent=43 // pred_check_branch
          %335 = sbr.rel (%p333) target = $region52
        $region51: #{tpu_custom_call.1} parent=43 // pred_region
          %336 = dma.done %s329, 128
        $region52: #{tpu_custom_call.1} parent=43 // pred_fallthru
          _
        %s337 = sand.u32 %s27, 1
        %s338 = scalar_lea.sflag [#allocation6], %s337
        %s339 = sand.u32 %s101, 1
        %s340 = smul.addr %s339, 8
        %s341 = scalar_lea.vmem [#allocation7], %s340
        // Predicated region
        $region53: #{tpu_custom_call.1} parent=43 // pred_check
          %p342 = pneg %p114
        $region54: #{tpu_custom_call.1} parent=43 // pred_check_branch
          %344 = sbr.rel (%p342) target = $region56
        $region55: #{tpu_custom_call.1} parent=43 // pred_region
          %345 = dma.done %s338, 128
        $region56: #{tpu_custom_call.1} parent=43 // pred_fallthru
          _
        // Predicated region
        $region57: #{tpu_custom_call.1} parent=43 // pred_check
          %p346 = pneg %p135
        $region58: #{tpu_custom_call.1} parent=43 // pred_check_branch
          %348 = sbr.rel (%p346) target = $region60
        $region59: #{tpu_custom_call.1} parent=43 // pred_region
          %349 = dma.done [#allocation9], 1024
        $region60: #{tpu_custom_call.1} parent=43 // pred_fallthru
          _
        // Predicated region
        $region61: #{tpu_custom_call.1} parent=43 // pred_check
          %p350 = pneg %p156
        $region62: #{tpu_custom_call.1} parent=43 // pred_check_branch
          %352 = sbr.rel (%p350) target = $region64
        $region63: #{tpu_custom_call.1} parent=43 // pred_region
          %353 = dma.done [#allocation9], 512
        $region64: #{tpu_custom_call.1} parent=43 // pred_fallthru
          _
        %s354 = sand.u32 %s49, 1
        %s355 = scalar_lea.sflag [#allocation3], %s354
        %s356 = sand.u32 %s49, 1
        %s357 = smul.addr %s356, 64
        %s358 = scalar_lea.vmem [#allocation2], %s357
        %p359 = pneg %p62
        %p360 = pneg %p59
        %s361 = sand.u32 %s27, 1
        %s362 = scalar_lea.sflag [#allocation6], %s361
        %s363 = sand.u32 %s75, 1
        %s364 = smul.addr %s363, 8
        %s365 = scalar_lea.vmem [#allocation5], %s364
        %p366 = pneg %p88
        %p367 = pneg %p85
        %s368 = sand.u32 %s27, 1
        %s369 = scalar_lea.sflag [#allocation6], %s368
        %s370 = sand.u32 %s101, 1
        %s371 = smul.addr %s370, 8
        %s372 = scalar_lea.vmem [#allocation7], %s371
        %p373 = pneg %p114
        %p374 = pneg %p111
        %p375 = pneg %p135
        %p376 = pneg %p132
        %p377 = pneg %p156
        %p378 = pneg %p153
        %p379 = pneg %p177
        %p380 = pneg %p174
        %p381 = pneg %p205
        %p382 = pneg %p202
        %s383 = sand.u32 %s192, 1
        %s384 = scalar_lea.sflag [#allocation4], %s383
        %s385 = sand.u32 %s192, 1
        %s386 = smul.addr %s385, 64
        %s387 = scalar_lea.vmem [#allocation11], %s386
        %s388 = smul.u32 8, %s32
        %s389 = smul.u32 8, %s32
        %v391 = vld [vmem:[%s323] sm:$0xff]
        %v392 = vld [vmem:[%s323 + $0x8] sm:$0xff]
        %v393 = vld [vmem:[%s323 + $0x10] sm:$0xff]
        %v394 = vld [vmem:[%s323 + $0x18] sm:$0xff]
        %v395 = vld [vmem:[%s323 + $0x20] sm:$0xff]
        %v396 = vld [vmem:[%s323 + $0x28] sm:$0xff]
        %v397 = vld [vmem:[%s323 + $0x30] sm:$0xff]
        %v398 = vld [vmem:[%s323 + $0x38] sm:$0xff]
        %v399 = vld [vmem:[%s332] sm:$0xff]
        %v400 = vmul.f32 %v391, %v399
        %v401 = vmul.f32 %v392, %v399
        %v402 = vmul.f32 %v393, %v399
        %v403 = vmul.f32 %v394, %v399
        %v404 = vmul.f32 %v395, %v399
        %v405 = vmul.f32 %v396, %v399
        %v406 = vmul.f32 %v397, %v399
        %v407 = vmul.f32 %v398, %v399
        %v408 = vld [vmem:[%s341] sm:$0xff]
        %v409 = vadd.f32 %v400, %v408
        %v410 = vadd.f32 %v401, %v408
        %v411 = vadd.f32 %v402, %v408
        %v412 = vadd.f32 %v403, %v408
        %v413 = vadd.f32 %v404, %v408
        %v414 = vadd.f32 %v405, %v408
        %v415 = vadd.f32 %v406, %v408
        %v416 = vadd.f32 %v407, %v408
        %v417 = vpack.c.bf16 %v410, %v409
        %v418 = vpack.c.bf16 %v412, %v411
        %v419 = vpack.c.bf16 %v414, %v413
        %v420 = vpack.c.bf16 %v416, %v415
        %v421 = vld [vmem:[#allocation8] sm:$0xff]
        %v422 = vld [vmem:[#allocation8 + $0x8] sm:$0xff]
        %v423 = vld [vmem:[#allocation8 + $0x10] sm:$0xff]
        %v424 = vld [vmem:[#allocation8 + $0x18] sm:$0xff]
        %v425 = vld [vmem:[#allocation8 + $0x20] sm:$0xff]
        %v426 = vld [vmem:[#allocation8 + $0x28] sm:$0xff]
        %v427 = vld [vmem:[#allocation8 + $0x30] sm:$0xff]
        %v428 = vld [vmem:[#allocation8 + $0x38] sm:$0xff]
        %v437 = vunpack.c.l.b16 %v421
        %v438 = vunpack.c.h.b16 %v421
        %v439 = vunpack.c.l.b16 %v422
        %v440 = vunpack.c.h.b16 %v422
        %v441 = vunpack.c.l.b16 %v423
        %v442 = vunpack.c.h.b16 %v423
        %v443 = vunpack.c.l.b16 %v424
        %v444 = vunpack.c.h.b16 %v424
        %v445 = vunpack.c.l.b16 %v425
        %v446 = vunpack.c.h.b16 %v425
        %v447 = vunpack.c.l.b16 %v426
        %v448 = vunpack.c.h.b16 %v426
        %v449 = vunpack.c.l.b16 %v427
        %v450 = vunpack.c.h.b16 %v427
        %v451 = vunpack.c.l.b16 %v428
        %v452 = vunpack.c.h.b16 %v428
        %v453 = vpack.c.b16 %v439, %v437
        %v454 = vpack.c.b16 %v440, %v438
        %v455 = vpack.c.b16 %v443, %v441
        %v456 = vpack.c.b16 %v444, %v442
        %v457 = vpack.c.b16 %v447, %v445
        %v458 = vpack.c.b16 %v448, %v446
        %v459 = vpack.c.b16 %v451, %v449
        %v460 = vpack.c.b16 %v452, %v450
        %vm469 = vcmask 523264
        %v471 = vsel %vm469, %v417, 0
        %v474 = vsel %vm469, %v418, 0
        %v477 = vsel %vm469, %v419, 0
        %v480 = vsel %vm469, %v420, 0
        %482 = vmatprep.subr.bf16.mxu0 0
        %483 = vmatpush1.bf16.msra.mxu0 0
        %484 = vmatprep.subr.bf16.mxu0 0
        %485 = vmatpush1.bf16.msra.mxu0 0
        %486 = vmatprep.subr.bf16.mxu0 0
        %487 = vmatpush1.bf16.msra.mxu0 0
        %488 = vmatprep.subr.bf16.mxu0 0
        %489 = vmatpush1.bf16.msra.mxu0 0
        %490 = vmatprep.subr.bf16.mxu0 %v460
        %491 = vmatpush1.bf16.msra.mxu0 %v459
        %492 = vmatprep.subr.bf16.mxu0 %v458
        %493 = vmatpush1.bf16.msra.mxu0 %v457
        %494 = vmatprep.subr.bf16.mxu0 %v456
        %495 = vmatpush1.bf16.msra.mxu0 %v455
        %496 = vmatprep.subr.bf16.mxu0 %v454
        %497 = vmatpush1.bf16.msra.mxu0 %v453
        %498 = vmatprep.subr.bf16.mxu0 0
        %499 = vmatpush2.bf16.msra.mxu0 0
        %500 = vmatprep.subr.bf16.mxu0 0
        %501 = vmatpush2.bf16.msra.mxu0 0
        %502 = vmatprep.subr.bf16.mxu0 0
        %503 = vmatpush2.bf16.msra.mxu0 0
        %504 = vmatprep.subr.bf16.mxu0 0
        %505 = vmatpush2.bf16.msra.mxu0 0
        %506 = vmatprep.subr.bf16.mxu0 0
        %507 = vmatpush2.bf16.msra.mxu0 0
        %508 = vmatprep.subr.bf16.mxu0 0
        %509 = vmatpush2.bf16.msra.mxu0 0
        %510 = vmatprep.subr.bf16.mxu0 0
        %511 = vmatpush2.bf16.msra.mxu0 0
        %512 = vmatprep.subr.bf16.mxu0 0
        %513 = vmatpush2.bf16.msra.mxu0 0
        %514 = vmatprep.mubr.bf16.mxu0 0
        %515 = vmatmul.mubr.bf16.gmra.mxu0 %v471
        %v516 = vpop.f32.mrf.mxu0
        %v517 = vadd.f32 0.0, %v516
        %v518 = vpop.f32.mrf.mxu0
        %v519 = vadd.f32 0.0, %v518
        %v520 = vpop.f32.mrf.mxu0
        %v521 = vadd.f32 0.0, %v520
        %v522 = vpop.f32.mrf.mxu0
        %v523 = vadd.f32 0.0, %v522
        %524 = vmatprep.mubr.bf16.mxu0 0
        %525 = vmatmul.mubr.bf16.gmra.mxu0 %v474
        %v526 = vpop.f32.mrf.mxu0
        %v527 = vadd.f32 0.0, %v526
        %v528 = vpop.f32.mrf.mxu0
        %v529 = vadd.f32 0.0, %v528
        %v530 = vpop.f32.mrf.mxu0
        %v531 = vadd.f32 0.0, %v530
        %v532 = vpop.f32.mrf.mxu0
        %v533 = vadd.f32 0.0, %v532
        %534 = vmatprep.mubr.bf16.mxu0 0
        %535 = vmatmul.mubr.bf16.gmra.mxu0 %v477
        %v536 = vpop.f32.mrf.mxu0
        %v537 = vadd.f32 0.0, %v536
        %v538 = vpop.f32.mrf.mxu0
        %v539 = vadd.f32 0.0, %v538
        %v540 = vpop.f32.mrf.mxu0
        %v541 = vadd.f32 0.0, %v540
        %v542 = vpop.f32.mrf.mxu0
        %v543 = vadd.f32 0.0, %v542
        %544 = vmatprep.mubr.bf16.mxu0 0
        %545 = vmatmul.mubr.bf16.gmra.mxu0 %v480
        %v546 = vpop.f32.mrf.mxu0
        %v547 = vadd.f32 0.0, %v546
        %v548 = vpop.f32.mrf.mxu0
        %v549 = vadd.f32 0.0, %v548
        %v550 = vpop.f32.mrf.mxu0
        %v551 = vadd.f32 0.0, %v550
        %v552 = vpop.f32.mrf.mxu0
        %v553 = vadd.f32 0.0, %v552
        %554 = vdwg.mxu0
        %v555 = vpack.c.bf16 %v521, %v517
        %v556 = vpack.c.bf16 %v523, %v519
        %v557 = vpack.c.bf16 %v531, %v527
        %v558 = vpack.c.bf16 %v533, %v529
        %v559 = vpack.c.bf16 %v541, %v537
        %v560 = vpack.c.bf16 %v543, %v539
        %v561 = vpack.c.bf16 %v551, %v547
        %v562 = vpack.c.bf16 %v553, %v549
        %v567 = vunpack.c.l.b16 %v555
        %v568 = vunpack.c.h.b16 %v555
        %v569 = vunpack.c.l.b16 %v557
        %v570 = vunpack.c.h.b16 %v557
        %v571 = vunpack.c.l.b16 %v559
        %v572 = vunpack.c.h.b16 %v559
        %v573 = vunpack.c.l.b16 %v561
        %v574 = vunpack.c.h.b16 %v561
        %v575 = vpack.c.b16 %v567, %v567
        %v576 = vpack.c.b16 %v568, %v568
        %v577 = vpack.c.b16 %v569, %v569
        %v578 = vpack.c.b16 %v570, %v570
        %v579 = vpack.c.b16 %v571, %v571
        %v580 = vpack.c.b16 %v572, %v572
        %v581 = vpack.c.b16 %v573, %v573
        %v582 = vpack.c.b16 %v574, %v574
        %v595 = vunpack.c.l.b16 %v556
        %v596 = vunpack.c.h.b16 %v556
        %v597 = vunpack.c.l.b16 %v558
        %v598 = vunpack.c.h.b16 %v558
        %v599 = vunpack.c.l.b16 %v560
        %v600 = vunpack.c.h.b16 %v560
        %v601 = vunpack.c.l.b16 %v562
        %v602 = vunpack.c.h.b16 %v562
        %v603 = vpack.c.b16 %v595, %v567
        %v604 = vpack.c.b16 %v596, %v568
        %v605 = vpack.c.b16 %v597, %v569
        %v606 = vpack.c.b16 %v598, %v570
        %v607 = vpack.c.b16 %v599, %v571
        %v608 = vpack.c.b16 %v600, %v572
        %v609 = vpack.c.b16 %v601, %v573
        %v610 = vpack.c.b16 %v602, %v574
        %611 = vrot.lane.b32.xlu0 %v603, 32
        %v612 = vpop.permute.xlu0 %611
        %613 = vrot.lane.b32.xlu0 %v604, 32
        %v614 = vpop.permute.xlu0 %613
        %615 = vrot.lane.b32.xlu0 %v605, 32
        %v616 = vpop.permute.xlu0 %615
        %617 = vrot.lane.b32.xlu0 %v606, 32
        %v618 = vpop.permute.xlu0 %617
        %619 = vrot.lane.b32.xlu0 %v607, 32
        %v620 = vpop.permute.xlu0 %619
        %621 = vrot.lane.b32.xlu0 %v608, 32
        %v622 = vpop.permute.xlu0 %621
        %623 = vrot.lane.b32.xlu0 %v609, 32
        %v624 = vpop.permute.xlu0 %623
        %625 = vrot.lane.b32.xlu0 %v610, 32
        %v626 = vpop.permute.xlu0 %625
        %v627 = vrot.slane %v612, 4
        %v628 = vrot.slane %v614, 4
        %v629 = vrot.slane %v616, 4
        %v630 = vrot.slane %v618, 4
        %v631 = vrot.slane %v620, 4
        %v632 = vrot.slane %v622, 4
        %v633 = vrot.slane %v624, 4
        %v634 = vrot.slane %v626, 4
        %vm635 = vcmask 261120
        %v636 = vsel %vm635, %v612, %v627
        %v637 = vsel %vm635, %v614, %v628
        %v638 = vsel %vm635, %v616, %v629
        %v639 = vsel %vm635, %v618, %v630
        %v640 = vsel %vm635, %v620, %v631
        %v641 = vsel %vm635, %v622, %v632
        %v642 = vsel %vm635, %v624, %v633
        %v643 = vsel %vm635, %v626, %v634
        %v652 = vunpack.c.l.bf16 %v575
        %v653 = vunpack.c.l.bf16 %v576
        %v654 = vunpack.c.l.bf16 %v577
        %v655 = vunpack.c.l.bf16 %v578
        %v656 = vunpack.c.l.bf16 %v579
        %v657 = vunpack.c.l.bf16 %v580
        %v658 = vunpack.c.l.bf16 %v581
        %v659 = vunpack.c.l.bf16 %v582
        %v660 = vunpack.c.l.bf16 %v636
        %v661 = vunpack.c.l.bf16 %v637
        %v662 = vunpack.c.l.bf16 %v638
        %v663 = vunpack.c.l.bf16 %v639
        %v664 = vunpack.c.l.bf16 %v640
        %v665 = vunpack.c.l.bf16 %v641
        %v666 = vunpack.c.l.bf16 %v642
        %v667 = vunpack.c.l.bf16 %v643
        %v668 = vmul.f32 %v652, %v652
        %v669 = vmul.f32 %v653, %v653
        %v670 = vmul.f32 %v654, %v654
        %v671 = vmul.f32 %v655, %v655
        %v672 = vmul.f32 %v656, %v656
        %v673 = vmul.f32 %v657, %v657
        %v674 = vmul.f32 %v658, %v658
        %v675 = vmul.f32 %v659, %v659
        %v676 = vmul.f32 %v660, %v660
        %v677 = vmul.f32 %v661, %v661
        %v678 = vmul.f32 %v662, %v662
        %v679 = vmul.f32 %v663, %v663
        %v680 = vmul.f32 %v664, %v664
        %v681 = vmul.f32 %v665, %v665
        %v682 = vmul.f32 %v666, %v666
        %v683 = vmul.f32 %v667, %v667
        %vm684 = vcmask 261120
        %v685 = vsel %vm684, %v668, 0.0
        %686 = vadd.xlane.f32.xlu0 %v685
        %v687 = vpop.xlane.xlu0 %686
        %v688 = vsel %vm684, %v669, 0.0
        %689 = vadd.xlane.f32.xlu0 %v688
        %v690 = vpop.xlane.xlu0 %689
        %v691 = vsel %vm684, %v670, 0.0
        %692 = vadd.xlane.f32.xlu0 %v691
        %v693 = vpop.xlane.xlu0 %692
        %v694 = vsel %vm684, %v671, 0.0
        %695 = vadd.xlane.f32.xlu0 %v694
        %v696 = vpop.xlane.xlu0 %695
        %v697 = vsel %vm684, %v672, 0.0
        %698 = vadd.xlane.f32.xlu0 %v697
        %v699 = vpop.xlane.xlu0 %698
        %v700 = vsel %vm684, %v673, 0.0
        %701 = vadd.xlane.f32.xlu0 %v700
        %v702 = vpop.xlane.xlu0 %701
        %v703 = vsel %vm684, %v674, 0.0
        %704 = vadd.xlane.f32.xlu0 %v703
        %v705 = vpop.xlane.xlu0 %704
        %v706 = vsel %vm684, %v675, 0.0
        %707 = vadd.xlane.f32.xlu0 %v706
        %v708 = vpop.xlane.xlu0 %707
        %v709 = vsel %vm684, %v676, 0.0
        %710 = vadd.xlane.f32.xlu0 %v709
        %v711 = vpop.xlane.xlu0 %710
        %v712 = vsel %vm684, %v677, 0.0
        %713 = vadd.xlane.f32.xlu0 %v712
        %v714 = vpop.xlane.xlu0 %713
        %v715 = vsel %vm684, %v678, 0.0
        %716 = vadd.xlane.f32.xlu0 %v715
        %v717 = vpop.xlane.xlu0 %716
        %v718 = vsel %vm684, %v679, 0.0
        %719 = vadd.xlane.f32.xlu0 %v718
        %v720 = vpop.xlane.xlu0 %719
        %v721 = vsel %vm684, %v680, 0.0
        %722 = vadd.xlane.f32.xlu0 %v721
        %v723 = vpop.xlane.xlu0 %722
        %v724 = vsel %vm684, %v681, 0.0
        %725 = vadd.xlane.f32.xlu0 %v724
        %v726 = vpop.xlane.xlu0 %725
        %v727 = vsel %vm684, %v682, 0.0
        %728 = vadd.xlane.f32.xlu0 %v727
        %v729 = vpop.xlane.xlu0 %728
        %v730 = vsel %vm684, %v683, 0.0
        %731 = vadd.xlane.f32.xlu0 %v730
        %v732 = vpop.xlane.xlu0 %731
        %v733 = vmax.f32 %v687, 1e-24
        %v734 = vmax.f32 %v690, 1e-24
        %v735 = vmax.f32 %v693, 1e-24
        %v736 = vmax.f32 %v696, 1e-24
        %v737 = vmax.f32 %v699, 1e-24
        %v738 = vmax.f32 %v702, 1e-24
        %v739 = vmax.f32 %v705, 1e-24
        %v740 = vmax.f32 %v708, 1e-24
        %v741 = vmax.f32 %v711, 1e-24
        %v742 = vmax.f32 %v714, 1e-24
        %v743 = vmax.f32 %v717, 1e-24
        %v744 = vmax.f32 %v720, 1e-24
        %v745 = vmax.f32 %v723, 1e-24
        %v746 = vmax.f32 %v726, 1e-24
        %v747 = vmax.f32 %v729, 1e-24
        %v748 = vmax.f32 %v732, 1e-24
        %v749 = vrsqrt.pop %v733
        %v750 = vrsqrt.pop %v734
        %v751 = vrsqrt.pop %v735
        %v752 = vrsqrt.pop %v736
        %v753 = vrsqrt.pop %v737
        %v754 = vrsqrt.pop %v738
        %v755 = vrsqrt.pop %v739
        %v756 = vrsqrt.pop %v740
        %v757 = vrsqrt.pop %v741
        %v758 = vrsqrt.pop %v742
        %v759 = vrsqrt.pop %v743
        %v760 = vrsqrt.pop %v744
        %v761 = vrsqrt.pop %v745
        %v762 = vrsqrt.pop %v746
        %v763 = vrsqrt.pop %v747
        %v764 = vrsqrt.pop %v748
        %v765 = vmul.f32 %v749, 0.17677669
        %v766 = vmul.f32 %v750, 0.17677669
        %v767 = vmul.f32 %v751, 0.17677669
        %v768 = vmul.f32 %v752, 0.17677669
        %v769 = vmul.f32 %v753, 0.17677669
        %v770 = vmul.f32 %v754, 0.17677669
        %v771 = vmul.f32 %v755, 0.17677669
        %v772 = vmul.f32 %v756, 0.17677669
        %v773 = vmul.f32 %v757, 0.17677669
        %v774 = vmul.f32 %v758, 0.17677669
        %v775 = vmul.f32 %v759, 0.17677669
        %v776 = vmul.f32 %v760, 0.17677669
        %v777 = vmul.f32 %v761, 0.17677669
        %v778 = vmul.f32 %v762, 0.17677669
        %v779 = vmul.f32 %v763, 0.17677669
        %v780 = vmul.f32 %v764, 0.17677669
        %v781 = vmul.f32 %v652, %v765
        %v782 = vmul.f32 %v653, %v766
        %v783 = vmul.f32 %v654, %v767
        %v784 = vmul.f32 %v655, %v768
        %v785 = vmul.f32 %v656, %v769
        %v786 = vmul.f32 %v657, %v770
        %v787 = vmul.f32 %v658, %v771
        %v788 = vmul.f32 %v659, %v772
        %v789 = vmul.f32 %v660, %v773
        %v790 = vmul.f32 %v661, %v774
        %v791 = vmul.f32 %v662, %v775
        %v792 = vmul.f32 %v663, %v776
        %v793 = vmul.f32 %v664, %v777
        %v794 = vmul.f32 %v665, %v778
        %v795 = vmul.f32 %v666, %v779
        %v796 = vmul.f32 %v667, %v780
        %v797 = vpack.c.bf16 %v781, %v781
        %v798 = vpack.c.bf16 %v782, %v782
        %v799 = vpack.c.bf16 %v783, %v783
        %v800 = vpack.c.bf16 %v784, %v784
        %v801 = vpack.c.bf16 %v785, %v785
        %v802 = vpack.c.bf16 %v786, %v786
        %v803 = vpack.c.bf16 %v787, %v787
        %v804 = vpack.c.bf16 %v788, %v788
        %v805 = vpack.c.bf16 %v789, %v789
        %v806 = vpack.c.bf16 %v790, %v790
        %v807 = vpack.c.bf16 %v791, %v791
        %v808 = vpack.c.bf16 %v792, %v792
        %v809 = vpack.c.bf16 %v793, %v793
        %v810 = vpack.c.bf16 %v794, %v794
        %v811 = vpack.c.bf16 %v795, %v795
        %v812 = vpack.c.bf16 %v796, %v796
        %829 = vrot.lane.b32.xlu0 %v668, 96
        %v830 = vpop.permute.xlu0 %829
        %831 = vrot.lane.b32.xlu0 %v669, 96
        %v832 = vpop.permute.xlu0 %831
        %833 = vrot.lane.b32.xlu0 %v670, 96
        %v834 = vpop.permute.xlu0 %833
        %835 = vrot.lane.b32.xlu0 %v671, 96
        %v836 = vpop.permute.xlu0 %835
        %837 = vrot.lane.b32.xlu0 %v672, 96
        %v838 = vpop.permute.xlu0 %837
        %839 = vrot.lane.b32.xlu0 %v673, 96
        %v840 = vpop.permute.xlu0 %839
        %841 = vrot.lane.b32.xlu0 %v674, 96
        %v842 = vpop.permute.xlu0 %841
        %843 = vrot.lane.b32.xlu0 %v675, 96
        %v844 = vpop.permute.xlu0 %843
        %845 = vrot.lane.b32.xlu0 %v676, 96
        %v846 = vpop.permute.xlu0 %845
        %847 = vrot.lane.b32.xlu0 %v677, 96
        %v848 = vpop.permute.xlu0 %847
        %849 = vrot.lane.b32.xlu0 %v678, 96
        %v850 = vpop.permute.xlu0 %849
        %851 = vrot.lane.b32.xlu0 %v679, 96
        %v852 = vpop.permute.xlu0 %851
        %853 = vrot.lane.b32.xlu0 %v680, 96
        %v854 = vpop.permute.xlu0 %853
        %855 = vrot.lane.b32.xlu0 %v681, 96
        %v856 = vpop.permute.xlu0 %855
        %857 = vrot.lane.b32.xlu0 %v682, 96
        %v858 = vpop.permute.xlu0 %857
        %859 = vrot.lane.b32.xlu0 %v683, 96
        %v860 = vpop.permute.xlu0 %859
        %v877 = vsel %vm684, %v830, 0.0
        %878 = vadd.xlane.f32.xlu0 %v877
        %v879 = vpop.xlane.xlu0 %878
        %v880 = vsel %vm684, %v832, 0.0
        %881 = vadd.xlane.f32.xlu0 %v880
        %v882 = vpop.xlane.xlu0 %881
        %v883 = vsel %vm684, %v834, 0.0
        %884 = vadd.xlane.f32.xlu0 %v883
        %v885 = vpop.xlane.xlu0 %884
        %v886 = vsel %vm684, %v836, 0.0
        %887 = vadd.xlane.f32.xlu0 %v886
        %v888 = vpop.xlane.xlu0 %887
        %v889 = vsel %vm684, %v838, 0.0
        %890 = vadd.xlane.f32.xlu0 %v889
        %v891 = vpop.xlane.xlu0 %890
        %v892 = vsel %vm684, %v840, 0.0
        %893 = vadd.xlane.f32.xlu0 %v892
        %v894 = vpop.xlane.xlu0 %893
        %v895 = vsel %vm684, %v842, 0.0
        %896 = vadd.xlane.f32.xlu0 %v895
        %v897 = vpop.xlane.xlu0 %896
        %v898 = vsel %vm684, %v844, 0.0
        %899 = vadd.xlane.f32.xlu0 %v898
        %v900 = vpop.xlane.xlu0 %899
        %v901 = vsel %vm684, %v846, 0.0
        %902 = vadd.xlane.f32.xlu0 %v901
        %v903 = vpop.xlane.xlu0 %902
        %v904 = vsel %vm684, %v848, 0.0
        %905 = vadd.xlane.f32.xlu0 %v904
        %v906 = vpop.xlane.xlu0 %905
        %v907 = vsel %vm684, %v850, 0.0
        %908 = vadd.xlane.f32.xlu0 %v907
        %v909 = vpop.xlane.xlu0 %908
        %v910 = vsel %vm684, %v852, 0.0
        %911 = vadd.xlane.f32.xlu0 %v910
        %v912 = vpop.xlane.xlu0 %911
        %v913 = vsel %vm684, %v854, 0.0
        %914 = vadd.xlane.f32.xlu0 %v913
        %v915 = vpop.xlane.xlu0 %914
        %v916 = vsel %vm684, %v856, 0.0
        %917 = vadd.xlane.f32.xlu0 %v916
        %v918 = vpop.xlane.xlu0 %917
        %v919 = vsel %vm684, %v858, 0.0
        %920 = vadd.xlane.f32.xlu0 %v919
        %v921 = vpop.xlane.xlu0 %920
        %v922 = vsel %vm684, %v860, 0.0
        %923 = vadd.xlane.f32.xlu0 %v922
        %v924 = vpop.xlane.xlu0 %923
        %v925 = vmax.f32 %v879, 1e-24
        %v926 = vmax.f32 %v882, 1e-24
        %v927 = vmax.f32 %v885, 1e-24
        %v928 = vmax.f32 %v888, 1e-24
        %v929 = vmax.f32 %v891, 1e-24
        %v930 = vmax.f32 %v894, 1e-24
        %v931 = vmax.f32 %v897, 1e-24
        %v932 = vmax.f32 %v900, 1e-24
        %v933 = vmax.f32 %v903, 1e-24
        %v934 = vmax.f32 %v906, 1e-24
        %v935 = vmax.f32 %v909, 1e-24
        %v936 = vmax.f32 %v912, 1e-24
        %v937 = vmax.f32 %v915, 1e-24
        %v938 = vmax.f32 %v918, 1e-24
        %v939 = vmax.f32 %v921, 1e-24
        %v940 = vmax.f32 %v924, 1e-24
        %v941 = vrsqrt.pop %v925
        %v942 = vrsqrt.pop %v926
        %v943 = vrsqrt.pop %v927
        %v944 = vrsqrt.pop %v928
        %v945 = vrsqrt.pop %v929
        %v946 = vrsqrt.pop %v930
        %v947 = vrsqrt.pop %v931
        %v948 = vrsqrt.pop %v932
        %v949 = vrsqrt.pop %v933
        %v950 = vrsqrt.pop %v934
        %v951 = vrsqrt.pop %v935
        %v952 = vrsqrt.pop %v936
        %v953 = vrsqrt.pop %v937
        %v954 = vrsqrt.pop %v938
        %v955 = vrsqrt.pop %v939
        %v956 = vrsqrt.pop %v940
        %v957 = vmul.f32 %v652, %v941
        %v958 = vmul.f32 %v653, %v942
        %v959 = vmul.f32 %v654, %v943
        %v960 = vmul.f32 %v655, %v944
        %v961 = vmul.f32 %v656, %v945
        %v962 = vmul.f32 %v657, %v946
        %v963 = vmul.f32 %v658, %v947
        %v964 = vmul.f32 %v659, %v948
        %v965 = vmul.f32 %v660, %v949
        %v966 = vmul.f32 %v661, %v950
        %v967 = vmul.f32 %v662, %v951
        %v968 = vmul.f32 %v663, %v952
        %v969 = vmul.f32 %v664, %v953
        %v970 = vmul.f32 %v665, %v954
        %v971 = vmul.f32 %v666, %v955
        %v972 = vmul.f32 %v667, %v956
        %v973 = vpack.c.bf16 %v957, %v957
        %v974 = vpack.c.bf16 %v958, %v958
        %v975 = vpack.c.bf16 %v959, %v959
        %v976 = vpack.c.bf16 %v960, %v960
        %v977 = vpack.c.bf16 %v961, %v961
        %v978 = vpack.c.bf16 %v962, %v962
        %v979 = vpack.c.bf16 %v963, %v963
        %v980 = vpack.c.bf16 %v964, %v964
        %v981 = vpack.c.bf16 %v965, %v965
        %v982 = vpack.c.bf16 %v966, %v966
        %v983 = vpack.c.bf16 %v967, %v967
        %v984 = vpack.c.bf16 %v968, %v968
        %v985 = vpack.c.bf16 %v969, %v969
        %v986 = vpack.c.bf16 %v970, %v970
        %v987 = vpack.c.bf16 %v971, %v971
        %v988 = vpack.c.bf16 %v972, %v972
        %v989 = vlaneseq
        %v990 = vshrl.u32 %v989, 7
        %v991 = vlaneseq
        %v992 = vand.u32 %v991, 127
        %994 = vrot.lane.b32.xlu0 %v973, 96
        %v995 = vpop.permute.xlu0 %994
        %v997 = vsel %vm684, %v797, 0
        %v1000 = vsel %vm684, %v995, 0
        %1002 = vmatprep.subr.bf16.mxu0 0
        %1003 = vmatpush1.bf16.xpose.msra.mxu0 0
        %1004 = vmatprep.subr.bf16.mxu0 0
        %1005 = vmatpush1.bf16.xpose.msra.mxu0 0
        %1006 = vmatprep.subr.bf16.mxu0 0
        %1007 = vmatpush1.bf16.xpose.msra.mxu0 0
        %1008 = vmatprep.subr.bf16.mxu0 0
        %1009 = vmatpush1.bf16.xpose.msra.mxu0 0
        %1010 = vmatprep.subr.bf16.mxu0 0
        %1011 = vmatpush1.bf16.xpose.msra.mxu0 0
        %1012 = vmatprep.subr.bf16.mxu0 0
        %1013 = vmatpush1.bf16.xpose.msra.mxu0 0
        %1014 = vmatprep.subr.bf16.mxu0 0
        %1015 = vmatpush1.bf16.xpose.msra.mxu0 0
        %1016 = vmatprep.subr.bf16.mxu0 0
        %1017 = vmatpush1.bf16.xpose.msra.mxu0 %v1000
        %1018 = vmatprep.subr.bf16.mxu0 0
        %1019 = vmatpush2.bf16.xpose.msra.mxu0 0
        %1020 = vmatprep.subr.bf16.mxu0 0
        %1021 = vmatpush2.bf16.xpose.msra.mxu0 0
        %1022 = vmatprep.subr.bf16.mxu0 0
        %1023 = vmatpush2.bf16.xpose.msra.mxu0 0
        %1024 = vmatprep.subr.bf16.mxu0 0
        %1025 = vmatpush2.bf16.xpose.msra.mxu0 0
        %1026 = vmatprep.subr.bf16.mxu0 0
        %1027 = vmatpush2.bf16.xpose.msra.mxu0 0
        %1028 = vmatprep.subr.bf16.mxu0 0
        %1029 = vmatpush2.bf16.xpose.msra.mxu0 0
        %1030 = vmatprep.subr.bf16.mxu0 0
        %1031 = vmatpush2.bf16.xpose.msra.mxu0 0
        %1032 = vmatprep.subr.bf16.mxu0 0
        %1033 = vmatpush2.bf16.xpose.msra.mxu0 0
        %1034 = vmatprep.mubr.bf16.mxu0 0
        %1035 = vmatmul.mubr.bf16.gmra.mxu0 %v997
        %v1036 = vpop.f32.mrf.mxu0
        %v1037 = vadd.f32 0.0, %v1036
        %v1038 = vpop.f32.mrf.mxu0
        %v1039 = vpop.f32.mrf.mxu0
        %v1040 = vpop.f32.mrf.mxu0
        %1041 = vdwg.mxu0
        %1043 = vrot.lane.b32.xlu0 %v974, 96
        %v1044 = vpop.permute.xlu0 %1043
        %v1046 = vsel %vm684, %v798, 0
        %v1049 = vsel %vm684, %v1044, 0
        %1051 = vmatprep.subr.bf16.mxu0 0
        %1052 = vmatpush1.bf16.xpose.msra.mxu0 0
        %1053 = vmatprep.subr.bf16.mxu0 0
        %1054 = vmatpush1.bf16.xpose.msra.mxu0 0
        %1055 = vmatprep.subr.bf16.mxu0 0
        %1056 = vmatpush1.bf16.xpose.msra.mxu0 0
        %1057 = vmatprep.subr.bf16.mxu0 0
        %1058 = vmatpush1.bf16.xpose.msra.mxu0 0
        %1059 = vmatprep.subr.bf16.mxu0 0
        %1060 = vmatpush1.bf16.xpose.msra.mxu0 0
        %1061 = vmatprep.subr.bf16.mxu0 0
        %1062 = vmatpush1.bf16.xpose.msra.mxu0 0
        %1063 = vmatprep.subr.bf16.mxu0 0
        %1064 = vmatpush1.bf16.xpose.msra.mxu0 0
        %1065 = vmatprep.subr.bf16.mxu0 0
        %1066 = vmatpush1.bf16.xpose.msra.mxu0 %v1049
        %1067 = vmatprep.subr.bf16.mxu0 0
        %1068 = vmatpush2.bf16.xpose.msra.mxu0 0
        %1069 = vmatprep.subr.bf16.mxu0 0
        %1070 = vmatpush2.bf16.xpose.msra.mxu0 0
        %1071 = vmatprep.subr.bf16.mxu0 0
        %1072 = vmatpush2.bf16.xpose.msra.mxu0 0
        %1073 = vmatprep.subr.bf16.mxu0 0
        %1074 = vmatpush2.bf16.xpose.msra.mxu0 0
        %1075 = vmatprep.subr.bf16.mxu0 0
        %1076 = vmatpush2.bf16.xpose.msra.mxu0 0
        %1077 = vmatprep.subr.bf16.mxu0 0
        %1078 = vmatpush2.bf16.xpose.msra.mxu0 0
        %1079 = vmatprep.subr.bf16.mxu0 0
        %1080 = vmatpush2.bf16.xpose.msra.mxu0 0
        %1081 = vmatprep.subr.bf16.mxu0 0
        %1082 = vmatpush2.bf16.xpose.msra.mxu0 0
        %1083 = vmatprep.mubr.bf16.mxu0 0
        %1084 = vmatmul.mubr.bf16.gmra.mxu0 %v1046
        %v1085 = vpop.f32.mrf.mxu0
        %v1086 = vadd.f32 0.0, %v1085
        %v1087 = vpop.f32.mrf.mxu0
        %v1088 = vpop.f32.mrf.mxu0
        %v1089 = vpop.f32.mrf.mxu0
        %1090 = vdwg.mxu0
        %1092 = vrot.lane.b32.xlu0 %v975, 96
        %v1093 = vpop.permute.xlu0 %1092
        %v1095 = vsel %vm684, %v799, 0
        %v1098 = vsel %vm684, %v1093, 0
        %1100 = vmatprep.subr.bf16.mxu0 0
        %1101 = vmatpush1.bf16.xpose.msra.mxu0 0
        %1102 = vmatprep.subr.bf16.mxu0 0
        %1103 = vmatpush1.bf16.xpose.msra.mxu0 0
        %1104 = vmatprep.subr.bf16.mxu0 0
        %1105 = vmatpush1.bf16.xpose.msra.mxu0 0
        %1106 = vmatprep.subr.bf16.mxu0 0
        %1107 = vmatpush1.bf16.xpose.msra.mxu0 0
        %1108 = vmatprep.subr.bf16.mxu0 0
        %1109 = vmatpush1.bf16.xpose.msra.mxu0 0
        %1110 = vmatprep.subr.bf16.mxu0 0
        %1111 = vmatpush1.bf16.xpose.msra.mxu0 0
        %1112 = vmatprep.subr.bf16.mxu0 0
        %1113 = vmatpush1.bf16.xpose.msra.mxu0 0
        %1114 = vmatprep.subr.bf16.mxu0 0
        %1115 = vmatpush1.bf16.xpose.msra.mxu0 %v1098
        %1116 = vmatprep.subr.bf16.mxu0 0
        %1117 = vmatpush2.bf16.xpose.msra.mxu0 0
        %1118 = vmatprep.subr.bf16.mxu0 0
        %1119 = vmatpush2.bf16.xpose.msra.mxu0 0
        %1120 = vmatprep.subr.bf16.mxu0 0
        %1121 = vmatpush2.bf16.xpose.msra.mxu0 0
        %1122 = vmatprep.subr.bf16.mxu0 0
        %1123 = vmatpush2.bf16.xpose.msra.mxu0 0
        %1124 = vmatprep.subr.bf16.mxu0 0
        %1125 = vmatpush2.bf16.xpose.msra.mxu0 0
        %1126 = vmatprep.subr.bf16.mxu0 0
        %1127 = vmatpush2.bf16.xpose.msra.mxu0 0
        %1128 = vmatprep.subr.bf16.mxu0 0
        %1129 = vmatpush2.bf16.xpose.msra.mxu0 0
        %1130 = vmatprep.subr.bf16.mxu0 0
        %1131 = vmatpush2.bf16.xpose.msra.mxu0 0
        %1132 = vmatprep.mubr.bf16.mxu0 0
        %1133 = vmatmul.mubr.bf16.gmra.mxu0 %v1095
        %v1134 = vpop.f32.mrf.mxu0
        %v1135 = vadd.f32 0.0, %v1134
        %v1136 = vpop.f32.mrf.mxu0
        %v1137 = vpop.f32.mrf.mxu0
        %v1138 = vpop.f32.mrf.mxu0
        %1139 = vdwg.mxu0
        %1141 = vrot.lane.b32.xlu0 %v976, 96
        %v1142 = vpop.permute.xlu0 %1141
        %v1144 = vsel %vm684, %v800, 0
        %v1147 = vsel %vm684, %v1142, 0
        %1149 = vmatprep.subr.bf16.mxu0 0
        %1150 = vmatpush1.bf16.xpose.msra.mxu0 0
        %1151 = vmatprep.subr.bf16.mxu0 0
        %1152 = vmatpush1.bf16.xpose.msra.mxu0 0
        %1153 = vmatprep.subr.bf16.mxu0 0
        %1154 = vmatpush1.bf16.xpose.msra.mxu0 0
        %1155 = vmatprep.subr.bf16.mxu0 0
        %1156 = vmatpush1.bf16.xpose.msra.mxu0 0
        %1157 = vmatprep.subr.bf16.mxu0 0
        %1158 = vmatpush1.bf16.xpose.msra.mxu0 0
        %1159 = vmatprep.subr.bf16.mxu0 0
        %1160 = vmatpush1.bf16.xpose.msra.mxu0 0
        %1161 = vmatprep.subr.bf16.mxu0 0
        %1162 = vmatpush1.bf16.xpose.msra.mxu0 0
        %1163 = vmatprep.subr.bf16.mxu0 0
        %1164 = vmatpush1.bf16.xpose.msra.mxu0 %v1147
        %1165 = vmatprep.subr.bf16.mxu0 0
        %1166 = vmatpush2.bf16.xpose.msra.mxu0 0
        %1167 = vmatprep.subr.bf16.mxu0 0
        %1168 = vmatpush2.bf16.xpose.msra.mxu0 0
        %1169 = vmatprep.subr.bf16.mxu0 0
        %1170 = vmatpush2.bf16.xpose.msra.mxu0 0
        %1171 = vmatprep.subr.bf16.mxu0 0
        %1172 = vmatpush2.bf16.xpose.msra.mxu0 0
        %1173 = vmatprep.subr.bf16.mxu0 0
        %1174 = vmatpush2.bf16.xpose.msra.mxu0 0
        %1175 = vmatprep.subr.bf16.mxu0 0
        %1176 = vmatpush2.bf16.xpose.msra.mxu0 0
        %1177 = vmatprep.subr.bf16.mxu0 0
        %1178 = vmatpush2.bf16.xpose.msra.mxu0 0
        %1179 = vmatprep.subr.bf16.mxu0 0
        %1180 = vmatpush2.bf16.xpose.msra.mxu0 0
        %1181 = vmatprep.mubr.bf16.mxu0 0
        %1182 = vmatmul.mubr.bf16.gmra.mxu0 %v1144
        %v1183 = vpop.f32.mrf.mxu0
        %v1184 = vadd.f32 0.0, %v1183
        %v1185 = vpop.f32.mrf.mxu0
        %v1186 = vpop.f32.mrf.mxu0
        %v1187 = vpop.f32.mrf.mxu0
        %1188 = vdwg.mxu0
        %1190 = vrot.lane.b32.xlu0 %v977, 96
        %v1191 = vpop.permute.xlu0 %1190
        %v1193 = vsel %vm684, %v801, 0
        %v1196 = vsel %vm684, %v1191, 0
        %1198 = vmatprep.subr.bf16.mxu0 0
        %1199 = vmatpush1.bf16.xpose.msra.mxu0 0
        %1200 = vmatprep.subr.bf16.mxu0 0
        %1201 = vmatpush1.bf16.xpose.msra.mxu0 0
        %1202 = vmatprep.subr.bf16.mxu0 0
        %1203 = vmatpush1.bf16.xpose.msra.mxu0 0
        %1204 = vmatprep.subr.bf16.mxu0 0
        %1205 = vmatpush1.bf16.xpose.msra.mxu0 0
        %1206 = vmatprep.subr.bf16.mxu0 0
        %1207 = vmatpush1.bf16.xpose.msra.mxu0 0
        %1208 = vmatprep.subr.bf16.mxu0 0
        %1209 = vmatpush1.bf16.xpose.msra.mxu0 0
        %1210 = vmatprep.subr.bf16.mxu0 0
        %1211 = vmatpush1.bf16.xpose.msra.mxu0 0
        %1212 = vmatprep.subr.bf16.mxu0 0
        %1213 = vmatpush1.bf16.xpose.msra.mxu0 %v1196
        %1214 = vmatprep.subr.bf16.mxu0 0
        %1215 = vmatpush2.bf16.xpose.msra.mxu0 0
        %1216 = vmatprep.subr.bf16.mxu0 0
        %1217 = vmatpush2.bf16.xpose.msra.mxu0 0
        %1218 = vmatprep.subr.bf16.mxu0 0
        %1219 = vmatpush2.bf16.xpose.msra.mxu0 0
        %1220 = vmatprep.subr.bf16.mxu0 0
        %1221 = vmatpush2.bf16.xpose.msra.mxu0 0
        %1222 = vmatprep.subr.bf16.mxu0 0
        %1223 = vmatpush2.bf16.xpose.msra.mxu0 0
        %1224 = vmatprep.subr.bf16.mxu0 0
        %1225 = vmatpush2.bf16.xpose.msra.mxu0 0
        %1226 = vmatprep.subr.bf16.mxu0 0
        %1227 = vmatpush2.bf16.xpose.msra.mxu0 0
        %1228 = vmatprep.subr.bf16.mxu0 0
        %1229 = vmatpush2.bf16.xpose.msra.mxu0 0
        %1230 = vmatprep.mubr.bf16.mxu0 0
        %1231 = vmatmul.mubr.bf16.gmra.mxu0 %v1193
        %v1232 = vpop.f32.mrf.mxu0
        %v1233 = vadd.f32 0.0, %v1232
        %v1234 = vpop.f32.mrf.mxu0
        %v1235 = vpop.f32.mrf.mxu0
        %v1236 = vpop.f32.mrf.mxu0
        %1237 = vdwg.mxu0
        %1239 = vrot.lane.b32.xlu0 %v978, 96
        %v1240 = vpop.permute.xlu0 %1239
        %v1242 = vsel %vm684, %v802, 0
        %v1245 = vsel %vm684, %v1240, 0
        %1247 = vmatprep.subr.bf16.mxu0 0
        %1248 = vmatpush1.bf16.xpose.msra.mxu0 0
        %1249 = vmatprep.subr.bf16.mxu0 0
        %1250 = vmatpush1.bf16.xpose.msra.mxu0 0
        %1251 = vmatprep.subr.bf16.mxu0 0
        %1252 = vmatpush1.bf16.xpose.msra.mxu0 0
        %1253 = vmatprep.subr.bf16.mxu0 0
        %1254 = vmatpush1.bf16.xpose.msra.mxu0 0
        %1255 = vmatprep.subr.bf16.mxu0 0
        %1256 = vmatpush1.bf16.xpose.msra.mxu0 0
        %1257 = vmatprep.subr.bf16.mxu0 0
        %1258 = vmatpush1.bf16.xpose.msra.mxu0 0
        %1259 = vmatprep.subr.bf16.mxu0 0
        %1260 = vmatpush1.bf16.xpose.msra.mxu0 0
        %1261 = vmatprep.subr.bf16.mxu0 0
        %1262 = vmatpush1.bf16.xpose.msra.mxu0 %v1245
        %1263 = vmatprep.subr.bf16.mxu0 0
        %1264 = vmatpush2.bf16.xpose.msra.mxu0 0
        %1265 = vmatprep.subr.bf16.mxu0 0
        %1266 = vmatpush2.bf16.xpose.msra.mxu0 0
        %1267 = vmatprep.subr.bf16.mxu0 0
        %1268 = vmatpush2.bf16.xpose.msra.mxu0 0
        %1269 = vmatprep.subr.bf16.mxu0 0
        %1270 = vmatpush2.bf16.xpose.msra.mxu0 0
        %1271 = vmatprep.subr.bf16.mxu0 0
        %1272 = vmatpush2.bf16.xpose.msra.mxu0 0
        %1273 = vmatprep.subr.bf16.mxu0 0
        %1274 = vmatpush2.bf16.xpose.msra.mxu0 0
        %1275 = vmatprep.subr.bf16.mxu0 0
        %1276 = vmatpush2.bf16.xpose.msra.mxu0 0
        %1277 = vmatprep.subr.bf16.mxu0 0
        %1278 = vmatpush2.bf16.xpose.msra.mxu0 0
        %1279 = vmatprep.mubr.bf16.mxu0 0
        %1280 = vmatmul.mubr.bf16.gmra.mxu0 %v1242
        %v1281 = vpop.f32.mrf.mxu0
        %v1282 = vadd.f32 0.0, %v1281
        %v1283 = vpop.f32.mrf.mxu0
        %v1284 = vpop.f32.mrf.mxu0
        %v1285 = vpop.f32.mrf.mxu0
        %1286 = vdwg.mxu0
        %1288 = vrot.lane.b32.xlu0 %v979, 96
        %v1289 = vpop.permute.xlu0 %1288
        %v1291 = vsel %vm684, %v803, 0
        %v1294 = vsel %vm684, %v1289, 0
        %1296 = vmatprep.subr.bf16.mxu0 0
        %1297 = vmatpush1.bf16.xpose.msra.mxu0 0
        %1298 = vmatprep.subr.bf16.mxu0 0
        %1299 = vmatpush1.bf16.xpose.msra.mxu0 0
        %1300 = vmatprep.subr.bf16.mxu0 0
        %1301 = vmatpush1.bf16.xpose.msra.mxu0 0
        %1302 = vmatprep.subr.bf16.mxu0 0
        %1303 = vmatpush1.bf16.xpose.msra.mxu0 0
        %1304 = vmatprep.subr.bf16.mxu0 0
        %1305 = vmatpush1.bf16.xpose.msra.mxu0 0
        %1306 = vmatprep.subr.bf16.mxu0 0
        %1307 = vmatpush1.bf16.xpose.msra.mxu0 0
        %1308 = vmatprep.subr.bf16.mxu0 0
        %1309 = vmatpush1.bf16.xpose.msra.mxu0 0
        %1310 = vmatprep.subr.bf16.mxu0 0
        %1311 = vmatpush1.bf16.xpose.msra.mxu0 %v1294
        %1312 = vmatprep.subr.bf16.mxu0 0
        %1313 = vmatpush2.bf16.xpose.msra.mxu0 0
        %1314 = vmatprep.subr.bf16.mxu0 0
        %1315 = vmatpush2.bf16.xpose.msra.mxu0 0
        %1316 = vmatprep.subr.bf16.mxu0 0
        %1317 = vmatpush2.bf16.xpose.msra.mxu0 0
        %1318 = vmatprep.subr.bf16.mxu0 0
        %1319 = vmatpush2.bf16.xpose.msra.mxu0 0
        %1320 = vmatprep.subr.bf16.mxu0 0
        %1321 = vmatpush2.bf16.xpose.msra.mxu0 0
        %1322 = vmatprep.subr.bf16.mxu0 0
        %1323 = vmatpush2.bf16.xpose.msra.mxu0 0
        %1324 = vmatprep.subr.bf16.mxu0 0
        %1325 = vmatpush2.bf16.xpose.msra.mxu0 0
        %1326 = vmatprep.subr.bf16.mxu0 0
        %1327 = vmatpush2.bf16.xpose.msra.mxu0 0
        %1328 = vmatprep.mubr.bf16.mxu0 0
        %1329 = vmatmul.mubr.bf16.gmra.mxu0 %v1291
        %v1330 = vpop.f32.mrf.mxu0
        %v1331 = vadd.f32 0.0, %v1330
        %v1332 = vpop.f32.mrf.mxu0
        %v1333 = vpop.f32.mrf.mxu0
        %v1334 = vpop.f32.mrf.mxu0
        %1335 = vdwg.mxu0
        %1337 = vrot.lane.b32.xlu0 %v980, 96
        %v1338 = vpop.permute.xlu0 %1337
        %v1340 = vsel %vm684, %v804, 0
        %v1343 = vsel %vm684, %v1338, 0
        %1345 = vmatprep.subr.bf16.mxu0 0
        %1346 = vmatpush1.bf16.xpose.msra.mxu0 0
        %1347 = vmatprep.subr.bf16.mxu0 0
        %1348 = vmatpush1.bf16.xpose.msra.mxu0 0
        %1349 = vmatprep.subr.bf16.mxu0 0
        %1350 = vmatpush1.bf16.xpose.msra.mxu0 0
        %1351 = vmatprep.subr.bf16.mxu0 0
        %1352 = vmatpush1.bf16.xpose.msra.mxu0 0
        %1353 = vmatprep.subr.bf16.mxu0 0
        %1354 = vmatpush1.bf16.xpose.msra.mxu0 0
        %1355 = vmatprep.subr.bf16.mxu0 0
        %1356 = vmatpush1.bf16.xpose.msra.mxu0 0
        %1357 = vmatprep.subr.bf16.mxu0 0
        %1358 = vmatpush1.bf16.xpose.msra.mxu0 0
        %1359 = vmatprep.subr.bf16.mxu0 0
        %1360 = vmatpush1.bf16.xpose.msra.mxu0 %v1343
        %1361 = vmatprep.subr.bf16.mxu0 0
        %1362 = vmatpush2.bf16.xpose.msra.mxu0 0
        %1363 = vmatprep.subr.bf16.mxu0 0
        %1364 = vmatpush2.bf16.xpose.msra.mxu0 0
        %1365 = vmatprep.subr.bf16.mxu0 0
        %1366 = vmatpush2.bf16.xpose.msra.mxu0 0
        %1367 = vmatprep.subr.bf16.mxu0 0
        %1368 = vmatpush2.bf16.xpose.msra.mxu0 0
        %1369 = vmatprep.subr.bf16.mxu0 0
        %1370 = vmatpush2.bf16.xpose.msra.mxu0 0
        %1371 = vmatprep.subr.bf16.mxu0 0
        %1372 = vmatpush2.bf16.xpose.msra.mxu0 0
        %1373 = vmatprep.subr.bf16.mxu0 0
        %1374 = vmatpush2.bf16.xpose.msra.mxu0 0
        %1375 = vmatprep.subr.bf16.mxu0 0
        %1376 = vmatpush2.bf16.xpose.msra.mxu0 0
        %1377 = vmatprep.mubr.bf16.mxu0 0
        %1378 = vmatmul.mubr.bf16.gmra.mxu0 %v1340
        %v1379 = vpop.f32.mrf.mxu0
        %v1380 = vadd.f32 0.0, %v1379
        %v1381 = vpop.f32.mrf.mxu0
        %v1382 = vpop.f32.mrf.mxu0
        %v1383 = vpop.f32.mrf.mxu0
        %1384 = vdwg.mxu0
        %1386 = vrot.lane.b32.xlu0 %v981, 96
        %v1387 = vpop.permute.xlu0 %1386
        %v1389 = vsel %vm684, %v805, 0
        %v1392 = vsel %vm684, %v1387, 0
        %1394 = vmatprep.subr.bf16.mxu0 0
        %1395 = vmatpush1.bf16.xpose.msra.mxu0 0
        %1396 = vmatprep.subr.bf16.mxu0 0
        %1397 = vmatpush1.bf16.xpose.msra.mxu0 0
        %1398 = vmatprep.subr.bf16.mxu0 0
        %1399 = vmatpush1.bf16.xpose.msra.mxu0 0
        %1400 = vmatprep.subr.bf16.mxu0 0
        %1401 = vmatpush1.bf16.xpose.msra.mxu0 0
        %1402 = vmatprep.subr.bf16.mxu0 0
        %1403 = vmatpush1.bf16.xpose.msra.mxu0 0
        %1404 = vmatprep.subr.bf16.mxu0 0
        %1405 = vmatpush1.bf16.xpose.msra.mxu0 0
        %1406 = vmatprep.subr.bf16.mxu0 0
        %1407 = vmatpush1.bf16.xpose.msra.mxu0 0
        %1408 = vmatprep.subr.bf16.mxu0 0
        %1409 = vmatpush1.bf16.xpose.msra.mxu0 %v1392
        %1410 = vmatprep.subr.bf16.mxu0 0
        %1411 = vmatpush2.bf16.xpose.msra.mxu0 0
        %1412 = vmatprep.subr.bf16.mxu0 0
        %1413 = vmatpush2.bf16.xpose.msra.mxu0 0
        %1414 = vmatprep.subr.bf16.mxu0 0
        %1415 = vmatpush2.bf16.xpose.msra.mxu0 0
        %1416 = vmatprep.subr.bf16.mxu0 0
        %1417 = vmatpush2.bf16.xpose.msra.mxu0 0
        %1418 = vmatprep.subr.bf16.mxu0 0
        %1419 = vmatpush2.bf16.xpose.msra.mxu0 0
        %1420 = vmatprep.subr.bf16.mxu0 0
        %1421 = vmatpush2.bf16.xpose.msra.mxu0 0
        %1422 = vmatprep.subr.bf16.mxu0 0
        %1423 = vmatpush2.bf16.xpose.msra.mxu0 0
        %1424 = vmatprep.subr.bf16.mxu0 0
        %1425 = vmatpush2.bf16.xpose.msra.mxu0 0
        %1426 = vmatprep.mubr.bf16.mxu0 0
        %1427 = vmatmul.mubr.bf16.gmra.mxu0 %v1389
        %v1428 = vpop.f32.mrf.mxu0
        %v1429 = vadd.f32 0.0, %v1428
        %v1430 = vpop.f32.mrf.mxu0
        %v1431 = vpop.f32.mrf.mxu0
        %v1432 = vpop.f32.mrf.mxu0
        %1433 = vdwg.mxu0
        %1435 = vrot.lane.b32.xlu0 %v982, 96
        %v1436 = vpop.permute.xlu0 %1435
        %v1438 = vsel %vm684, %v806, 0
        %v1441 = vsel %vm684, %v1436, 0
        %1443 = vmatprep.subr.bf16.mxu0 0
        %1444 = vmatpush1.bf16.xpose.msra.mxu0 0
        %1445 = vmatprep.subr.bf16.mxu0 0
        %1446 = vmatpush1.bf16.xpose.msra.mxu0 0
        %1447 = vmatprep.subr.bf16.mxu0 0
        %1448 = vmatpush1.bf16.xpose.msra.mxu0 0
        %1449 = vmatprep.subr.bf16.mxu0 0
        %1450 = vmatpush1.bf16.xpose.msra.mxu0 0
        %1451 = vmatprep.subr.bf16.mxu0 0
        %1452 = vmatpush1.bf16.xpose.msra.mxu0 0
        %1453 = vmatprep.subr.bf16.mxu0 0
        %1454 = vmatpush1.bf16.xpose.msra.mxu0 0
        %1455 = vmatprep.subr.bf16.mxu0 0
        %1456 = vmatpush1.bf16.xpose.msra.mxu0 0
        %1457 = vmatprep.subr.bf16.mxu0 0
        %1458 = vmatpush1.bf16.xpose.msra.mxu0 %v1441
        %1459 = vmatprep.subr.bf16.mxu0 0
        %1460 = vmatpush2.bf16.xpose.msra.mxu0 0
        %1461 = vmatprep.subr.bf16.mxu0 0
        %1462 = vmatpush2.bf16.xpose.msra.mxu0 0
        %1463 = vmatprep.subr.bf16.mxu0 0
        %1464 = vmatpush2.bf16.xpose.msra.mxu0 0
        %1465 = vmatprep.subr.bf16.mxu0 0
        %1466 = vmatpush2.bf16.xpose.msra.mxu0 0
        %1467 = vmatprep.subr.bf16.mxu0 0
        %1468 = vmatpush2.bf16.xpose.msra.mxu0 0
        %1469 = vmatprep.subr.bf16.mxu0 0
        %1470 = vmatpush2.bf16.xpose.msra.mxu0 0
        %1471 = vmatprep.subr.bf16.mxu0 0
        %1472 = vmatpush2.bf16.xpose.msra.mxu0 0
        %1473 = vmatprep.subr.bf16.mxu0 0
        %1474 = vmatpush2.bf16.xpose.msra.mxu0 0
        %1475 = vmatprep.mubr.bf16.mxu0 0
        %1476 = vmatmul.mubr.bf16.gmra.mxu0 %v1438
        %v1477 = vpop.f32.mrf.mxu0
        %v1478 = vadd.f32 0.0, %v1477
        %v1479 = vpop.f32.mrf.mxu0
        %v1480 = vpop.f32.mrf.mxu0
        %v1481 = vpop.f32.mrf.mxu0
        %1482 = vdwg.mxu0
        %1484 = vrot.lane.b32.xlu0 %v983, 96
        %v1485 = vpop.permute.xlu0 %1484
        %v1487 = vsel %vm684, %v807, 0
        %v1490 = vsel %vm684, %v1485, 0
        %1492 = vmatprep.subr.bf16.mxu0 0
        %1493 = vmatpush1.bf16.xpose.msra.mxu0 0
        %1494 = vmatprep.subr.bf16.mxu0 0
        %1495 = vmatpush1.bf16.xpose.msra.mxu0 0
        %1496 = vmatprep.subr.bf16.mxu0 0
        %1497 = vmatpush1.bf16.xpose.msra.mxu0 0
        %1498 = vmatprep.subr.bf16.mxu0 0
        %1499 = vmatpush1.bf16.xpose.msra.mxu0 0
        %1500 = vmatprep.subr.bf16.mxu0 0
        %1501 = vmatpush1.bf16.xpose.msra.mxu0 0
        %1502 = vmatprep.subr.bf16.mxu0 0
        %1503 = vmatpush1.bf16.xpose.msra.mxu0 0
        %1504 = vmatprep.subr.bf16.mxu0 0
        %1505 = vmatpush1.bf16.xpose.msra.mxu0 0
        %1506 = vmatprep.subr.bf16.mxu0 0
        %1507 = vmatpush1.bf16.xpose.msra.mxu0 %v1490
        %1508 = vmatprep.subr.bf16.mxu0 0
        %1509 = vmatpush2.bf16.xpose.msra.mxu0 0
        %1510 = vmatprep.subr.bf16.mxu0 0
        %1511 = vmatpush2.bf16.xpose.msra.mxu0 0
        %1512 = vmatprep.subr.bf16.mxu0 0
        %1513 = vmatpush2.bf16.xpose.msra.mxu0 0
        %1514 = vmatprep.subr.bf16.mxu0 0
        %1515 = vmatpush2.bf16.xpose.msra.mxu0 0
        %1516 = vmatprep.subr.bf16.mxu0 0
        %1517 = vmatpush2.bf16.xpose.msra.mxu0 0
        %1518 = vmatprep.subr.bf16.mxu0 0
        %1519 = vmatpush2.bf16.xpose.msra.mxu0 0
        %1520 = vmatprep.subr.bf16.mxu0 0
        %1521 = vmatpush2.bf16.xpose.msra.mxu0 0
        %1522 = vmatprep.subr.bf16.mxu0 0
        %1523 = vmatpush2.bf16.xpose.msra.mxu0 0
        %1524 = vmatprep.mubr.bf16.mxu0 0
        %1525 = vmatmul.mubr.bf16.gmra.mxu0 %v1487
        %v1526 = vpop.f32.mrf.mxu0
        %v1527 = vadd.f32 0.0, %v1526
        %v1528 = vpop.f32.mrf.mxu0
        %v1529 = vpop.f32.mrf.mxu0
        %v1530 = vpop.f32.mrf.mxu0
        %1531 = vdwg.mxu0
        %1533 = vrot.lane.b32.xlu0 %v984, 96
        %v1534 = vpop.permute.xlu0 %1533
        %v1536 = vsel %vm684, %v808, 0
        %v1539 = vsel %vm684, %v1534, 0
        %1541 = vmatprep.subr.bf16.mxu0 0
        %1542 = vmatpush1.bf16.xpose.msra.mxu0 0
        %1543 = vmatprep.subr.bf16.mxu0 0
        %1544 = vmatpush1.bf16.xpose.msra.mxu0 0
        %1545 = vmatprep.subr.bf16.mxu0 0
        %1546 = vmatpush1.bf16.xpose.msra.mxu0 0
        %1547 = vmatprep.subr.bf16.mxu0 0
        %1548 = vmatpush1.bf16.xpose.msra.mxu0 0
        %1549 = vmatprep.subr.bf16.mxu0 0
        %1550 = vmatpush1.bf16.xpose.msra.mxu0 0
        %1551 = vmatprep.subr.bf16.mxu0 0
        %1552 = vmatpush1.bf16.xpose.msra.mxu0 0
        %1553 = vmatprep.subr.bf16.mxu0 0
        %1554 = vmatpush1.bf16.xpose.msra.mxu0 0
        %1555 = vmatprep.subr.bf16.mxu0 0
        %1556 = vmatpush1.bf16.xpose.msra.mxu0 %v1539
        %1557 = vmatprep.subr.bf16.mxu0 0
        %1558 = vmatpush2.bf16.xpose.msra.mxu0 0
        %1559 = vmatprep.subr.bf16.mxu0 0
        %1560 = vmatpush2.bf16.xpose.msra.mxu0 0
        %1561 = vmatprep.subr.bf16.mxu0 0
        %1562 = vmatpush2.bf16.xpose.msra.mxu0 0
        %1563 = vmatprep.subr.bf16.mxu0 0
        %1564 = vmatpush2.bf16.xpose.msra.mxu0 0
        %1565 = vmatprep.subr.bf16.mxu0 0
        %1566 = vmatpush2.bf16.xpose.msra.mxu0 0
        %1567 = vmatprep.subr.bf16.mxu0 0
        %1568 = vmatpush2.bf16.xpose.msra.mxu0 0
        %1569 = vmatprep.subr.bf16.mxu0 0
        %1570 = vmatpush2.bf16.xpose.msra.mxu0 0
        %1571 = vmatprep.subr.bf16.mxu0 0
        %1572 = vmatpush2.bf16.xpose.msra.mxu0 0
        %1573 = vmatprep.mubr.bf16.mxu0 0
        %1574 = vmatmul.mubr.bf16.gmra.mxu0 %v1536
        %v1575 = vpop.f32.mrf.mxu0
        %v1576 = vadd.f32 0.0, %v1575
        %v1577 = vpop.f32.mrf.mxu0
        %v1578 = vpop.f32.mrf.mxu0
        %v1579 = vpop.f32.mrf.mxu0
        %1580 = vdwg.mxu0
        %1582 = vrot.lane.b32.xlu0 %v985, 96
        %v1583 = vpop.permute.xlu0 %1582
        %v1585 = vsel %vm684, %v809, 0
        %v1588 = vsel %vm684, %v1583, 0
        %1590 = vmatprep.subr.bf16.mxu0 0
        %1591 = vmatpush1.bf16.xpose.msra.mxu0 0
        %1592 = vmatprep.subr.bf16.mxu0 0
        %1593 = vmatpush1.bf16.xpose.msra.mxu0 0
        %1594 = vmatprep.subr.bf16.mxu0 0
        %1595 = vmatpush1.bf16.xpose.msra.mxu0 0
        %1596 = vmatprep.subr.bf16.mxu0 0
        %1597 = vmatpush1.bf16.xpose.msra.mxu0 0
        %1598 = vmatprep.subr.bf16.mxu0 0
        %1599 = vmatpush1.bf16.xpose.msra.mxu0 0
        %1600 = vmatprep.subr.bf16.mxu0 0
        %1601 = vmatpush1.bf16.xpose.msra.mxu0 0
        %1602 = vmatprep.subr.bf16.mxu0 0
        %1603 = vmatpush1.bf16.xpose.msra.mxu0 0
        %1604 = vmatprep.subr.bf16.mxu0 0
        %1605 = vmatpush1.bf16.xpose.msra.mxu0 %v1588
        %1606 = vmatprep.subr.bf16.mxu0 0
        %1607 = vmatpush2.bf16.xpose.msra.mxu0 0
        %1608 = vmatprep.subr.bf16.mxu0 0
        %1609 = vmatpush2.bf16.xpose.msra.mxu0 0
        %1610 = vmatprep.subr.bf16.mxu0 0
        %1611 = vmatpush2.bf16.xpose.msra.mxu0 0
        %1612 = vmatprep.subr.bf16.mxu0 0
        %1613 = vmatpush2.bf16.xpose.msra.mxu0 0
        %1614 = vmatprep.subr.bf16.mxu0 0
        %1615 = vmatpush2.bf16.xpose.msra.mxu0 0
        %1616 = vmatprep.subr.bf16.mxu0 0
        %1617 = vmatpush2.bf16.xpose.msra.mxu0 0
        %1618 = vmatprep.subr.bf16.mxu0 0
        %1619 = vmatpush2.bf16.xpose.msra.mxu0 0
        %1620 = vmatprep.subr.bf16.mxu0 0
        %1621 = vmatpush2.bf16.xpose.msra.mxu0 0
        %1622 = vmatprep.mubr.bf16.mxu0 0
        %1623 = vmatmul.mubr.bf16.gmra.mxu0 %v1585
        %v1624 = vpop.f32.mrf.mxu0
        %v1625 = vadd.f32 0.0, %v1624
        %v1626 = vpop.f32.mrf.mxu0
        %v1627 = vpop.f32.mrf.mxu0
        %v1628 = vpop.f32.mrf.mxu0
        %1629 = vdwg.mxu0
        %1631 = vrot.lane.b32.xlu0 %v986, 96
        %v1632 = vpop.permute.xlu0 %1631
        %v1634 = vsel %vm684, %v810, 0
        %v1637 = vsel %vm684, %v1632, 0
        %1639 = vmatprep.subr.bf16.mxu0 0
        %1640 = vmatpush1.bf16.xpose.msra.mxu0 0
        %1641 = vmatprep.subr.bf16.mxu0 0
        %1642 = vmatpush1.bf16.xpose.msra.mxu0 0
        %1643 = vmatprep.subr.bf16.mxu0 0
        %1644 = vmatpush1.bf16.xpose.msra.mxu0 0
        %1645 = vmatprep.subr.bf16.mxu0 0
        %1646 = vmatpush1.bf16.xpose.msra.mxu0 0
        %1647 = vmatprep.subr.bf16.mxu0 0
        %1648 = vmatpush1.bf16.xpose.msra.mxu0 0
        %1649 = vmatprep.subr.bf16.mxu0 0
        %1650 = vmatpush1.bf16.xpose.msra.mxu0 0
        %1651 = vmatprep.subr.bf16.mxu0 0
        %1652 = vmatpush1.bf16.xpose.msra.mxu0 0
        %1653 = vmatprep.subr.bf16.mxu0 0
        %1654 = vmatpush1.bf16.xpose.msra.mxu0 %v1637
        %1655 = vmatprep.subr.bf16.mxu0 0
        %1656 = vmatpush2.bf16.xpose.msra.mxu0 0
        %1657 = vmatprep.subr.bf16.mxu0 0
        %1658 = vmatpush2.bf16.xpose.msra.mxu0 0
        %1659 = vmatprep.subr.bf16.mxu0 0
        %1660 = vmatpush2.bf16.xpose.msra.mxu0 0
        %1661 = vmatprep.subr.bf16.mxu0 0
        %1662 = vmatpush2.bf16.xpose.msra.mxu0 0
        %1663 = vmatprep.subr.bf16.mxu0 0
        %1664 = vmatpush2.bf16.xpose.msra.mxu0 0
        %1665 = vmatprep.subr.bf16.mxu0 0
        %1666 = vmatpush2.bf16.xpose.msra.mxu0 0
        %1667 = vmatprep.subr.bf16.mxu0 0
        %1668 = vmatpush2.bf16.xpose.msra.mxu0 0
        %1669 = vmatprep.subr.bf16.mxu0 0
        %1670 = vmatpush2.bf16.xpose.msra.mxu0 0
        %1671 = vmatprep.mubr.bf16.mxu0 0
        %1672 = vmatmul.mubr.bf16.gmra.mxu0 %v1634
        %v1673 = vpop.f32.mrf.mxu0
        %v1674 = vadd.f32 0.0, %v1673
        %v1675 = vpop.f32.mrf.mxu0
        %v1676 = vpop.f32.mrf.mxu0
        %v1677 = vpop.f32.mrf.mxu0
        %1678 = vdwg.mxu0
        %1680 = vrot.lane.b32.xlu0 %v987, 96
        %v1681 = vpop.permute.xlu0 %1680
        %v1683 = vsel %vm684, %v811, 0
        %v1686 = vsel %vm684, %v1681, 0
        %1688 = vmatprep.subr.bf16.mxu0 0
        %1689 = vmatpush1.bf16.xpose.msra.mxu0 0
        %1690 = vmatprep.subr.bf16.mxu0 0
        %1691 = vmatpush1.bf16.xpose.msra.mxu0 0
        %1692 = vmatprep.subr.bf16.mxu0 0
        %1693 = vmatpush1.bf16.xpose.msra.mxu0 0
        %1694 = vmatprep.subr.bf16.mxu0 0
        %1695 = vmatpush1.bf16.xpose.msra.mxu0 0
        %1696 = vmatprep.subr.bf16.mxu0 0
        %1697 = vmatpush1.bf16.xpose.msra.mxu0 0
        %1698 = vmatprep.subr.bf16.mxu0 0
        %1699 = vmatpush1.bf16.xpose.msra.mxu0 0
        %1700 = vmatprep.subr.bf16.mxu0 0
        %1701 = vmatpush1.bf16.xpose.msra.mxu0 0
        %1702 = vmatprep.subr.bf16.mxu0 0
        %1703 = vmatpush1.bf16.xpose.msra.mxu0 %v1686
        %1704 = vmatprep.subr.bf16.mxu0 0
        %1705 = vmatpush2.bf16.xpose.msra.mxu0 0
        %1706 = vmatprep.subr.bf16.mxu0 0
        %1707 = vmatpush2.bf16.xpose.msra.mxu0 0
        %1708 = vmatprep.subr.bf16.mxu0 0
        %1709 = vmatpush2.bf16.xpose.msra.mxu0 0
        %1710 = vmatprep.subr.bf16.mxu0 0
        %1711 = vmatpush2.bf16.xpose.msra.mxu0 0
        %1712 = vmatprep.subr.bf16.mxu0 0
        %1713 = vmatpush2.bf16.xpose.msra.mxu0 0
        %1714 = vmatprep.subr.bf16.mxu0 0
        %1715 = vmatpush2.bf16.xpose.msra.mxu0 0
        %1716 = vmatprep.subr.bf16.mxu0 0
        %1717 = vmatpush2.bf16.xpose.msra.mxu0 0
        %1718 = vmatprep.subr.bf16.mxu0 0
        %1719 = vmatpush2.bf16.xpose.msra.mxu0 0
        %1720 = vmatprep.mubr.bf16.mxu0 0
        %1721 = vmatmul.mubr.bf16.gmra.mxu0 %v1683
        %v1722 = vpop.f32.mrf.mxu0
        %v1723 = vadd.f32 0.0, %v1722
        %v1724 = vpop.f32.mrf.mxu0
        %v1725 = vpop.f32.mrf.mxu0
        %v1726 = vpop.f32.mrf.mxu0
        %1727 = vdwg.mxu0
        %1729 = vrot.lane.b32.xlu0 %v988, 96
        %v1730 = vpop.permute.xlu0 %1729
        %v1732 = vsel %vm684, %v812, 0
        %v1735 = vsel %vm684, %v1730, 0
        %1737 = vmatprep.subr.bf16.mxu0 0
        %1738 = vmatpush1.bf16.xpose.msra.mxu0 0
        %1739 = vmatprep.subr.bf16.mxu0 0
        %1740 = vmatpush1.bf16.xpose.msra.mxu0 0
        %1741 = vmatprep.subr.bf16.mxu0 0
        %1742 = vmatpush1.bf16.xpose.msra.mxu0 0
        %1743 = vmatprep.subr.bf16.mxu0 0
        %1744 = vmatpush1.bf16.xpose.msra.mxu0 0
        %1745 = vmatprep.subr.bf16.mxu0 0
        %1746 = vmatpush1.bf16.xpose.msra.mxu0 0
        %1747 = vmatprep.subr.bf16.mxu0 0
        %1748 = vmatpush1.bf16.xpose.msra.mxu0 0
        %1749 = vmatprep.subr.bf16.mxu0 0
        %1750 = vmatpush1.bf16.xpose.msra.mxu0 0
        %1751 = vmatprep.subr.bf16.mxu0 0
        %1752 = vmatpush1.bf16.xpose.msra.mxu0 %v1735
        %1753 = vmatprep.subr.bf16.mxu0 0
        %1754 = vmatpush2.bf16.xpose.msra.mxu0 0
        %1755 = vmatprep.subr.bf16.mxu0 0
        %1756 = vmatpush2.bf16.xpose.msra.mxu0 0
        %1757 = vmatprep.subr.bf16.mxu0 0
        %1758 = vmatpush2.bf16.xpose.msra.mxu0 0
        %1759 = vmatprep.subr.bf16.mxu0 0
        %1760 = vmatpush2.bf16.xpose.msra.mxu0 0
        %1761 = vmatprep.subr.bf16.mxu0 0
        %1762 = vmatpush2.bf16.xpose.msra.mxu0 0
        %1763 = vmatprep.subr.bf16.mxu0 0
        %1764 = vmatpush2.bf16.xpose.msra.mxu0 0
        %1765 = vmatprep.subr.bf16.mxu0 0
        %1766 = vmatpush2.bf16.xpose.msra.mxu0 0
        %1767 = vmatprep.subr.bf16.mxu0 0
        %1768 = vmatpush2.bf16.xpose.msra.mxu0 0
        %1769 = vmatprep.mubr.bf16.mxu0 0
        %1770 = vmatmul.mubr.bf16.gmra.mxu0 %v1732
        %v1771 = vpop.f32.mrf.mxu0
        %v1772 = vadd.f32 0.0, %v1771
        %v1773 = vpop.f32.mrf.mxu0
        %v1774 = vpop.f32.mrf.mxu0
        %v1775 = vpop.f32.mrf.mxu0
        %1776 = vdwg.mxu0
        %vm1777 = vcmp.le.s32.totalorder %v992, %v990
        %v1778 = vsel %vm1777, 1, 0
        %vm1779 = vcmp.eq.s32.totalorder %v1778, 1
        %v1780 = vsel %vm1779, %v1037, -1e+30
        %v1781 = vsel %vm1779, %v1086, -1e+30
        %v1782 = vsel %vm1779, %v1135, -1e+30
        %v1783 = vsel %vm1779, %v1184, -1e+30
        %v1784 = vsel %vm1779, %v1233, -1e+30
        %v1785 = vsel %vm1779, %v1282, -1e+30
        %v1786 = vsel %vm1779, %v1331, -1e+30
        %v1787 = vsel %vm1779, %v1380, -1e+30
        %v1788 = vsel %vm1779, %v1429, -1e+30
        %v1789 = vsel %vm1779, %v1478, -1e+30
        %v1790 = vsel %vm1779, %v1527, -1e+30
        %v1791 = vsel %vm1779, %v1576, -1e+30
        %v1792 = vsel %vm1779, %v1625, -1e+30
        %v1793 = vsel %vm1779, %v1674, -1e+30
        %v1794 = vsel %vm1779, %v1723, -1e+30
        %v1795 = vsel %vm1779, %v1772, -1e+30
        %vm1796 = vcmask 64512
        %v1797 = vsel %vm1796, %v1780, -inf
        %1798 = vmax.xlane.f32.xlu0 %v1797
        %v1799 = vpop.xlane.xlu0 %1798
        %v1800 = vsel %vm1796, %v1781, -inf
        %1801 = vmax.xlane.f32.xlu0 %v1800
        %v1802 = vpop.xlane.xlu0 %1801
        %v1803 = vsel %vm1796, %v1782, -inf
        %1804 = vmax.xlane.f32.xlu0 %v1803
        %v1805 = vpop.xlane.xlu0 %1804
        %v1806 = vsel %vm1796, %v1783, -inf
        %1807 = vmax.xlane.f32.xlu0 %v1806
        %v1808 = vpop.xlane.xlu0 %1807
        %v1809 = vsel %vm1796, %v1784, -inf
        %1810 = vmax.xlane.f32.xlu0 %v1809
        %v1811 = vpop.xlane.xlu0 %1810
        %v1812 = vsel %vm1796, %v1785, -inf
        %1813 = vmax.xlane.f32.xlu0 %v1812
        %v1814 = vpop.xlane.xlu0 %1813
        %v1815 = vsel %vm1796, %v1786, -inf
        %1816 = vmax.xlane.f32.xlu0 %v1815
        %v1817 = vpop.xlane.xlu0 %1816
        %v1818 = vsel %vm1796, %v1787, -inf
        %1819 = vmax.xlane.f32.xlu0 %v1818
        %v1820 = vpop.xlane.xlu0 %1819
        %v1821 = vsel %vm1796, %v1788, -inf
        %1822 = vmax.xlane.f32.xlu0 %v1821
        %v1823 = vpop.xlane.xlu0 %1822
        %v1824 = vsel %vm1796, %v1789, -inf
        %1825 = vmax.xlane.f32.xlu0 %v1824
        %v1826 = vpop.xlane.xlu0 %1825
        %v1827 = vsel %vm1796, %v1790, -inf
        %1828 = vmax.xlane.f32.xlu0 %v1827
        %v1829 = vpop.xlane.xlu0 %1828
        %v1830 = vsel %vm1796, %v1791, -inf
        %1831 = vmax.xlane.f32.xlu0 %v1830
        %v1832 = vpop.xlane.xlu0 %1831
        %v1833 = vsel %vm1796, %v1792, -inf
        %1834 = vmax.xlane.f32.xlu0 %v1833
        %v1835 = vpop.xlane.xlu0 %1834
        %v1836 = vsel %vm1796, %v1793, -inf
        %1837 = vmax.xlane.f32.xlu0 %v1836
        %v1838 = vpop.xlane.xlu0 %1837
        %v1839 = vsel %vm1796, %v1794, -inf
        %1840 = vmax.xlane.f32.xlu0 %v1839
        %v1841 = vpop.xlane.xlu0 %1840
        %v1842 = vsel %vm1796, %v1795, -inf
        %1843 = vmax.xlane.f32.xlu0 %v1842
        %v1844 = vpop.xlane.xlu0 %1843
        %v1845 = vsub.f32 %v1780, %v1799
        %v1846 = vsub.f32 %v1781, %v1802
        %v1847 = vsub.f32 %v1782, %v1805
        %v1848 = vsub.f32 %v1783, %v1808
        %v1849 = vsub.f32 %v1784, %v1811
        %v1850 = vsub.f32 %v1785, %v1814
        %v1851 = vsub.f32 %v1786, %v1817
        %v1852 = vsub.f32 %v1787, %v1820
        %v1853 = vsub.f32 %v1788, %v1823
        %v1854 = vsub.f32 %v1789, %v1826
        %v1855 = vsub.f32 %v1790, %v1829
        %v1856 = vsub.f32 %v1791, %v1832
        %v1857 = vsub.f32 %v1792, %v1835
        %v1858 = vsub.f32 %v1793, %v1838
        %v1859 = vsub.f32 %v1794, %v1841
        %v1860 = vsub.f32 %v1795, %v1844
        %v1861 = vmul.f32 %v1845, 1.442695
        %v1862 = vpow.pop %v1861
        %v1863 = vmul.f32 %v1846, 1.442695
        %v1864 = vpow.pop %v1863
        %v1865 = vmul.f32 %v1847, 1.442695
        %v1866 = vpow.pop %v1865
        %v1867 = vmul.f32 %v1848, 1.442695
        %v1868 = vpow.pop %v1867
        %v1869 = vmul.f32 %v1849, 1.442695
        %v1870 = vpow.pop %v1869
        %v1871 = vmul.f32 %v1850, 1.442695
        %v1872 = vpow.pop %v1871
        %v1873 = vmul.f32 %v1851, 1.442695
        %v1874 = vpow.pop %v1873
        %v1875 = vmul.f32 %v1852, 1.442695
        %v1876 = vpow.pop %v1875
        %v1877 = vmul.f32 %v1853, 1.442695
        %v1878 = vpow.pop %v1877
        %v1879 = vmul.f32 %v1854, 1.442695
        %v1880 = vpow.pop %v1879
        %v1881 = vmul.f32 %v1855, 1.442695
        %v1882 = vpow.pop %v1881
        %v1883 = vmul.f32 %v1856, 1.442695
        %v1884 = vpow.pop %v1883
        %v1885 = vmul.f32 %v1857, 1.442695
        %v1886 = vpow.pop %v1885
        %v1887 = vmul.f32 %v1858, 1.442695
        %v1888 = vpow.pop %v1887
        %v1889 = vmul.f32 %v1859, 1.442695
        %v1890 = vpow.pop %v1889
        %v1891 = vmul.f32 %v1860, 1.442695
        %v1892 = vpow.pop %v1891
        %v1893 = vsel %vm1796, %v1862, 0.0
        %1894 = vadd.xlane.f32.xlu0 %v1893
        %v1895 = vpop.xlane.xlu0 %1894
        %v1896 = vsel %vm1796, %v1864, 0.0
        %1897 = vadd.xlane.f32.xlu0 %v1896
        %v1898 = vpop.xlane.xlu0 %1897
        %v1899 = vsel %vm1796, %v1866, 0.0
        %1900 = vadd.xlane.f32.xlu0 %v1899
        %v1901 = vpop.xlane.xlu0 %1900
        %v1902 = vsel %vm1796, %v1868, 0.0
        %1903 = vadd.xlane.f32.xlu0 %v1902
        %v1904 = vpop.xlane.xlu0 %1903
        %v1905 = vsel %vm1796, %v1870, 0.0
        %1906 = vadd.xlane.f32.xlu0 %v1905
        %v1907 = vpop.xlane.xlu0 %1906
        %v1908 = vsel %vm1796, %v1872, 0.0
        %1909 = vadd.xlane.f32.xlu0 %v1908
        %v1910 = vpop.xlane.xlu0 %1909
        %v1911 = vsel %vm1796, %v1874, 0.0
        %1912 = vadd.xlane.f32.xlu0 %v1911
        %v1913 = vpop.xlane.xlu0 %1912
        %v1914 = vsel %vm1796, %v1876, 0.0
        %1915 = vadd.xlane.f32.xlu0 %v1914
        %v1916 = vpop.xlane.xlu0 %1915
        %v1917 = vsel %vm1796, %v1878, 0.0
        %1918 = vadd.xlane.f32.xlu0 %v1917
        %v1919 = vpop.xlane.xlu0 %1918
        %v1920 = vsel %vm1796, %v1880, 0.0
        %1921 = vadd.xlane.f32.xlu0 %v1920
        %v1922 = vpop.xlane.xlu0 %1921
        %v1923 = vsel %vm1796, %v1882, 0.0
        %1924 = vadd.xlane.f32.xlu0 %v1923
        %v1925 = vpop.xlane.xlu0 %1924
        %v1926 = vsel %vm1796, %v1884, 0.0
        %1927 = vadd.xlane.f32.xlu0 %v1926
        %v1928 = vpop.xlane.xlu0 %1927
        %v1929 = vsel %vm1796, %v1886, 0.0
        %1930 = vadd.xlane.f32.xlu0 %v1929
        %v1931 = vpop.xlane.xlu0 %1930
        %v1932 = vsel %vm1796, %v1888, 0.0
        %1933 = vadd.xlane.f32.xlu0 %v1932
        %v1934 = vpop.xlane.xlu0 %1933
        %v1935 = vsel %vm1796, %v1890, 0.0
        %1936 = vadd.xlane.f32.xlu0 %v1935
        %v1937 = vpop.xlane.xlu0 %1936
        %v1938 = vsel %vm1796, %v1892, 0.0
        %1939 = vadd.xlane.f32.xlu0 %v1938
        %v1940 = vpop.xlane.xlu0 %1939
        %v1941 = vrcp.pop %v1895
        %v1942 = vrcp.pop %v1898
        %v1943 = vrcp.pop %v1901
        %v1944 = vrcp.pop %v1904
        %v1945 = vrcp.pop %v1907
        %v1946 = vrcp.pop %v1910
        %v1947 = vrcp.pop %v1913
        %v1948 = vrcp.pop %v1916
        %v1949 = vrcp.pop %v1919
        %v1950 = vrcp.pop %v1922
        %v1951 = vrcp.pop %v1925
        %v1952 = vrcp.pop %v1928
        %v1953 = vrcp.pop %v1931
        %v1954 = vrcp.pop %v1934
        %v1955 = vrcp.pop %v1937
        %v1956 = vrcp.pop %v1940
        %v1957 = vmul.f32 %v1862, %v1941
        %v1958 = vmul.f32 %v1864, %v1942
        %v1959 = vmul.f32 %v1866, %v1943
        %v1960 = vmul.f32 %v1868, %v1944
        %v1961 = vmul.f32 %v1870, %v1945
        %v1962 = vmul.f32 %v1872, %v1946
        %v1963 = vmul.f32 %v1874, %v1947
        %v1964 = vmul.f32 %v1876, %v1948
        %v1965 = vmul.f32 %v1878, %v1949
        %v1966 = vmul.f32 %v1880, %v1950
        %v1967 = vmul.f32 %v1882, %v1951
        %v1968 = vmul.f32 %v1884, %v1952
        %v1969 = vmul.f32 %v1886, %v1953
        %v1970 = vmul.f32 %v1888, %v1954
        %v1971 = vmul.f32 %v1890, %v1955
        %v1972 = vmul.f32 %v1892, %v1956
        %v1973 = vpack.c.bf16 %v1957, %v1957
        %v1974 = vpack.c.bf16 %v1958, %v1958
        %v1975 = vpack.c.bf16 %v1959, %v1959
        %v1976 = vpack.c.bf16 %v1960, %v1960
        %v1977 = vpack.c.bf16 %v1961, %v1961
        %v1978 = vpack.c.bf16 %v1962, %v1962
        %v1979 = vpack.c.bf16 %v1963, %v1963
        %v1980 = vpack.c.bf16 %v1964, %v1964
        %v1981 = vpack.c.bf16 %v1965, %v1965
        %v1982 = vpack.c.bf16 %v1966, %v1966
        %v1983 = vpack.c.bf16 %v1967, %v1967
        %v1984 = vpack.c.bf16 %v1968, %v1968
        %v1985 = vpack.c.bf16 %v1969, %v1969
        %v1986 = vpack.c.bf16 %v1970, %v1970
        %v1987 = vpack.c.bf16 %v1971, %v1971
        %v1988 = vpack.c.bf16 %v1972, %v1972
        %1989 = vrot.lane.b32.xlu0 %v575, 64
        %v1990 = vpop.permute.xlu0 %1989
        %v1992 = vsel %vm1796, %v1973, 0
        %vm1994 = vcmask 1043456
        %v1996 = vsel %vm1994, %v1990, 0
        %1998 = vmatprep.subr.bf16.mxu0 0
        %1999 = vmatpush1.bf16.msra.mxu0 0
        %2000 = vmatprep.subr.bf16.mxu0 0
        %2001 = vmatpush1.bf16.msra.mxu0 0
        %2002 = vmatprep.subr.bf16.mxu0 0
        %2003 = vmatpush1.bf16.msra.mxu0 0
        %2004 = vmatprep.subr.bf16.mxu0 0
        %2005 = vmatpush1.bf16.msra.mxu0 0
        %2006 = vmatprep.subr.bf16.mxu0 0
        %2007 = vmatpush1.bf16.msra.mxu0 0
        %2008 = vmatprep.subr.bf16.mxu0 0
        %2009 = vmatpush1.bf16.msra.mxu0 0
        %2010 = vmatprep.subr.bf16.mxu0 0
        %2011 = vmatpush1.bf16.msra.mxu0 0
        %2012 = vmatprep.subr.bf16.mxu0 0
        %2013 = vmatpush1.bf16.msra.mxu0 %v1996
        %2014 = vmatprep.subr.bf16.mxu0 0
        %2015 = vmatpush2.bf16.msra.mxu0 0
        %2016 = vmatprep.subr.bf16.mxu0 0
        %2017 = vmatpush2.bf16.msra.mxu0 0
        %2018 = vmatprep.subr.bf16.mxu0 0
        %2019 = vmatpush2.bf16.msra.mxu0 0
        %2020 = vmatprep.subr.bf16.mxu0 0
        %2021 = vmatpush2.bf16.msra.mxu0 0
        %2022 = vmatprep.subr.bf16.mxu0 0
        %2023 = vmatpush2.bf16.msra.mxu0 0
        %2024 = vmatprep.subr.bf16.mxu0 0
        %2025 = vmatpush2.bf16.msra.mxu0 0
        %2026 = vmatprep.subr.bf16.mxu0 0
        %2027 = vmatpush2.bf16.msra.mxu0 0
        %2028 = vmatprep.subr.bf16.mxu0 0
        %2029 = vmatpush2.bf16.msra.mxu0 0
        %2030 = vmatprep.mubr.bf16.mxu0 0
        %2031 = vmatmul.mubr.bf16.gmra.mxu0 %v1992
        %v2032 = vpop.f32.mrf.mxu0
        %v2033 = vadd.f32 0.0, %v2032
        %v2034 = vpop.f32.mrf.mxu0
        %v2035 = vpop.f32.mrf.mxu0
        %v2036 = vpop.f32.mrf.mxu0
        %2037 = vdwg.mxu0
        %2038 = vrot.lane.b32.xlu0 %v576, 64
        %v2039 = vpop.permute.xlu0 %2038
        %v2041 = vsel %vm1796, %v1974, 0
        %v2044 = vsel %vm1994, %v2039, 0
        %2046 = vmatprep.subr.bf16.mxu0 0
        %2047 = vmatpush1.bf16.msra.mxu0 0
        %2048 = vmatprep.subr.bf16.mxu0 0
        %2049 = vmatpush1.bf16.msra.mxu0 0
        %2050 = vmatprep.subr.bf16.mxu0 0
        %2051 = vmatpush1.bf16.msra.mxu0 0
        %2052 = vmatprep.subr.bf16.mxu0 0
        %2053 = vmatpush1.bf16.msra.mxu0 0
        %2054 = vmatprep.subr.bf16.mxu0 0
        %2055 = vmatpush1.bf16.msra.mxu0 0
        %2056 = vmatprep.subr.bf16.mxu0 0
        %2057 = vmatpush1.bf16.msra.mxu0 0
        %2058 = vmatprep.subr.bf16.mxu0 0
        %2059 = vmatpush1.bf16.msra.mxu0 0
        %2060 = vmatprep.subr.bf16.mxu0 0
        %2061 = vmatpush1.bf16.msra.mxu0 %v2044
        %2062 = vmatprep.subr.bf16.mxu0 0
        %2063 = vmatpush2.bf16.msra.mxu0 0
        %2064 = vmatprep.subr.bf16.mxu0 0
        %2065 = vmatpush2.bf16.msra.mxu0 0
        %2066 = vmatprep.subr.bf16.mxu0 0
        %2067 = vmatpush2.bf16.msra.mxu0 0
        %2068 = vmatprep.subr.bf16.mxu0 0
        %2069 = vmatpush2.bf16.msra.mxu0 0
        %2070 = vmatprep.subr.bf16.mxu0 0
        %2071 = vmatpush2.bf16.msra.mxu0 0
        %2072 = vmatprep.subr.bf16.mxu0 0
        %2073 = vmatpush2.bf16.msra.mxu0 0
        %2074 = vmatprep.subr.bf16.mxu0 0
        %2075 = vmatpush2.bf16.msra.mxu0 0
        %2076 = vmatprep.subr.bf16.mxu0 0
        %2077 = vmatpush2.bf16.msra.mxu0 0
        %2078 = vmatprep.mubr.bf16.mxu0 0
        %2079 = vmatmul.mubr.bf16.gmra.mxu0 %v2041
        %v2080 = vpop.f32.mrf.mxu0
        %v2081 = vadd.f32 0.0, %v2080
        %v2082 = vpop.f32.mrf.mxu0
        %v2083 = vpop.f32.mrf.mxu0
        %v2084 = vpop.f32.mrf.mxu0
        %2085 = vdwg.mxu0
        %2086 = vrot.lane.b32.xlu0 %v577, 64
        %v2087 = vpop.permute.xlu0 %2086
        %v2089 = vsel %vm1796, %v1975, 0
        %v2092 = vsel %vm1994, %v2087, 0
        %2094 = vmatprep.subr.bf16.mxu0 0
        %2095 = vmatpush1.bf16.msra.mxu0 0
        %2096 = vmatprep.subr.bf16.mxu0 0
        %2097 = vmatpush1.bf16.msra.mxu0 0
        %2098 = vmatprep.subr.bf16.mxu0 0
        %2099 = vmatpush1.bf16.msra.mxu0 0
        %2100 = vmatprep.subr.bf16.mxu0 0
        %2101 = vmatpush1.bf16.msra.mxu0 0
        %2102 = vmatprep.subr.bf16.mxu0 0
        %2103 = vmatpush1.bf16.msra.mxu0 0
        %2104 = vmatprep.subr.bf16.mxu0 0
        %2105 = vmatpush1.bf16.msra.mxu0 0
        %2106 = vmatprep.subr.bf16.mxu0 0
        %2107 = vmatpush1.bf16.msra.mxu0 0
        %2108 = vmatprep.subr.bf16.mxu0 0
        %2109 = vmatpush1.bf16.msra.mxu0 %v2092
        %2110 = vmatprep.subr.bf16.mxu0 0
        %2111 = vmatpush2.bf16.msra.mxu0 0
        %2112 = vmatprep.subr.bf16.mxu0 0
        %2113 = vmatpush2.bf16.msra.mxu0 0
        %2114 = vmatprep.subr.bf16.mxu0 0
        %2115 = vmatpush2.bf16.msra.mxu0 0
        %2116 = vmatprep.subr.bf16.mxu0 0
        %2117 = vmatpush2.bf16.msra.mxu0 0
        %2118 = vmatprep.subr.bf16.mxu0 0
        %2119 = vmatpush2.bf16.msra.mxu0 0
        %2120 = vmatprep.subr.bf16.mxu0 0
        %2121 = vmatpush2.bf16.msra.mxu0 0
        %2122 = vmatprep.subr.bf16.mxu0 0
        %2123 = vmatpush2.bf16.msra.mxu0 0
        %2124 = vmatprep.subr.bf16.mxu0 0
        %2125 = vmatpush2.bf16.msra.mxu0 0
        %2126 = vmatprep.mubr.bf16.mxu0 0
        %2127 = vmatmul.mubr.bf16.gmra.mxu0 %v2089
        %v2128 = vpop.f32.mrf.mxu0
        %v2129 = vadd.f32 0.0, %v2128
        %v2130 = vpop.f32.mrf.mxu0
        %v2131 = vpop.f32.mrf.mxu0
        %v2132 = vpop.f32.mrf.mxu0
        %2133 = vdwg.mxu0
        %2134 = vrot.lane.b32.xlu0 %v578, 64
        %v2135 = vpop.permute.xlu0 %2134
        %v2137 = vsel %vm1796, %v1976, 0
        %v2140 = vsel %vm1994, %v2135, 0
        %2142 = vmatprep.subr.bf16.mxu0 0
        %2143 = vmatpush1.bf16.msra.mxu0 0
        %2144 = vmatprep.subr.bf16.mxu0 0
        %2145 = vmatpush1.bf16.msra.mxu0 0
        %2146 = vmatprep.subr.bf16.mxu0 0
        %2147 = vmatpush1.bf16.msra.mxu0 0
        %2148 = vmatprep.subr.bf16.mxu0 0
        %2149 = vmatpush1.bf16.msra.mxu0 0
        %2150 = vmatprep.subr.bf16.mxu0 0
        %2151 = vmatpush1.bf16.msra.mxu0 0
        %2152 = vmatprep.subr.bf16.mxu0 0
        %2153 = vmatpush1.bf16.msra.mxu0 0
        %2154 = vmatprep.subr.bf16.mxu0 0
        %2155 = vmatpush1.bf16.msra.mxu0 0
        %2156 = vmatprep.subr.bf16.mxu0 0
        %2157 = vmatpush1.bf16.msra.mxu0 %v2140
        %2158 = vmatprep.subr.bf16.mxu0 0
        %2159 = vmatpush2.bf16.msra.mxu0 0
        %2160 = vmatprep.subr.bf16.mxu0 0
        %2161 = vmatpush2.bf16.msra.mxu0 0
        %2162 = vmatprep.subr.bf16.mxu0 0
        %2163 = vmatpush2.bf16.msra.mxu0 0
        %2164 = vmatprep.subr.bf16.mxu0 0
        %2165 = vmatpush2.bf16.msra.mxu0 0
        %2166 = vmatprep.subr.bf16.mxu0 0
        %2167 = vmatpush2.bf16.msra.mxu0 0
        %2168 = vmatprep.subr.bf16.mxu0 0
        %2169 = vmatpush2.bf16.msra.mxu0 0
        %2170 = vmatprep.subr.bf16.mxu0 0
        %2171 = vmatpush2.bf16.msra.mxu0 0
        %2172 = vmatprep.subr.bf16.mxu0 0
        %2173 = vmatpush2.bf16.msra.mxu0 0
        %2174 = vmatprep.mubr.bf16.mxu0 0
        %2175 = vmatmul.mubr.bf16.gmra.mxu0 %v2137
        %v2176 = vpop.f32.mrf.mxu0
        %v2177 = vadd.f32 0.0, %v2176
        %v2178 = vpop.f32.mrf.mxu0
        %v2179 = vpop.f32.mrf.mxu0
        %v2180 = vpop.f32.mrf.mxu0
        %2181 = vdwg.mxu0
        %2182 = vrot.lane.b32.xlu0 %v579, 64
        %v2183 = vpop.permute.xlu0 %2182
        %v2185 = vsel %vm1796, %v1977, 0
        %v2188 = vsel %vm1994, %v2183, 0
        %2190 = vmatprep.subr.bf16.mxu0 0
        %2191 = vmatpush1.bf16.msra.mxu0 0
        %2192 = vmatprep.subr.bf16.mxu0 0
        %2193 = vmatpush1.bf16.msra.mxu0 0
        %2194 = vmatprep.subr.bf16.mxu0 0
        %2195 = vmatpush1.bf16.msra.mxu0 0
        %2196 = vmatprep.subr.bf16.mxu0 0
        %2197 = vmatpush1.bf16.msra.mxu0 0
        %2198 = vmatprep.subr.bf16.mxu0 0
        %2199 = vmatpush1.bf16.msra.mxu0 0
        %2200 = vmatprep.subr.bf16.mxu0 0
        %2201 = vmatpush1.bf16.msra.mxu0 0
        %2202 = vmatprep.subr.bf16.mxu0 0
        %2203 = vmatpush1.bf16.msra.mxu0 0
        %2204 = vmatprep.subr.bf16.mxu0 0
        %2205 = vmatpush1.bf16.msra.mxu0 %v2188
        %2206 = vmatprep.subr.bf16.mxu0 0
        %2207 = vmatpush2.bf16.msra.mxu0 0
        %2208 = vmatprep.subr.bf16.mxu0 0
        %2209 = vmatpush2.bf16.msra.mxu0 0
        %2210 = vmatprep.subr.bf16.mxu0 0
        %2211 = vmatpush2.bf16.msra.mxu0 0
        %2212 = vmatprep.subr.bf16.mxu0 0
        %2213 = vmatpush2.bf16.msra.mxu0 0
        %2214 = vmatprep.subr.bf16.mxu0 0
        %2215 = vmatpush2.bf16.msra.mxu0 0
        %2216 = vmatprep.subr.bf16.mxu0 0
        %2217 = vmatpush2.bf16.msra.mxu0 0
        %2218 = vmatprep.subr.bf16.mxu0 0
        %2219 = vmatpush2.bf16.msra.mxu0 0
        %2220 = vmatprep.subr.bf16.mxu0 0
        %2221 = vmatpush2.bf16.msra.mxu0 0
        %2222 = vmatprep.mubr.bf16.mxu0 0
        %2223 = vmatmul.mubr.bf16.gmra.mxu0 %v2185
        %v2224 = vpop.f32.mrf.mxu0
        %v2225 = vadd.f32 0.0, %v2224
        %v2226 = vpop.f32.mrf.mxu0
        %v2227 = vpop.f32.mrf.mxu0
        %v2228 = vpop.f32.mrf.mxu0
        %2229 = vdwg.mxu0
        %2230 = vrot.lane.b32.xlu0 %v580, 64
        %v2231 = vpop.permute.xlu0 %2230
        %v2233 = vsel %vm1796, %v1978, 0
        %v2236 = vsel %vm1994, %v2231, 0
        %2238 = vmatprep.subr.bf16.mxu0 0
        %2239 = vmatpush1.bf16.msra.mxu0 0
        %2240 = vmatprep.subr.bf16.mxu0 0
        %2241 = vmatpush1.bf16.msra.mxu0 0
        %2242 = vmatprep.subr.bf16.mxu0 0
        %2243 = vmatpush1.bf16.msra.mxu0 0
        %2244 = vmatprep.subr.bf16.mxu0 0
        %2245 = vmatpush1.bf16.msra.mxu0 0
        %2246 = vmatprep.subr.bf16.mxu0 0
        %2247 = vmatpush1.bf16.msra.mxu0 0
        %2248 = vmatprep.subr.bf16.mxu0 0
        %2249 = vmatpush1.bf16.msra.mxu0 0
        %2250 = vmatprep.subr.bf16.mxu0 0
        %2251 = vmatpush1.bf16.msra.mxu0 0
        %2252 = vmatprep.subr.bf16.mxu0 0
        %2253 = vmatpush1.bf16.msra.mxu0 %v2236
        %2254 = vmatprep.subr.bf16.mxu0 0
        %2255 = vmatpush2.bf16.msra.mxu0 0
        %2256 = vmatprep.subr.bf16.mxu0 0
        %2257 = vmatpush2.bf16.msra.mxu0 0
        %2258 = vmatprep.subr.bf16.mxu0 0
        %2259 = vmatpush2.bf16.msra.mxu0 0
        %2260 = vmatprep.subr.bf16.mxu0 0
        %2261 = vmatpush2.bf16.msra.mxu0 0
        %2262 = vmatprep.subr.bf16.mxu0 0
        %2263 = vmatpush2.bf16.msra.mxu0 0
        %2264 = vmatprep.subr.bf16.mxu0 0
        %2265 = vmatpush2.bf16.msra.mxu0 0
        %2266 = vmatprep.subr.bf16.mxu0 0
        %2267 = vmatpush2.bf16.msra.mxu0 0
        %2268 = vmatprep.subr.bf16.mxu0 0
        %2269 = vmatpush2.bf16.msra.mxu0 0
        %2270 = vmatprep.mubr.bf16.mxu0 0
        %2271 = vmatmul.mubr.bf16.gmra.mxu0 %v2233
        %v2272 = vpop.f32.mrf.mxu0
        %v2273 = vadd.f32 0.0, %v2272
        %v2274 = vpop.f32.mrf.mxu0
        %v2275 = vpop.f32.mrf.mxu0
        %v2276 = vpop.f32.mrf.mxu0
        %2277 = vdwg.mxu0
        %2278 = vrot.lane.b32.xlu0 %v581, 64
        %v2279 = vpop.permute.xlu0 %2278
        %v2281 = vsel %vm1796, %v1979, 0
        %v2284 = vsel %vm1994, %v2279, 0
        %2286 = vmatprep.subr.bf16.mxu0 0
        %2287 = vmatpush1.bf16.msra.mxu0 0
        %2288 = vmatprep.subr.bf16.mxu0 0
        %2289 = vmatpush1.bf16.msra.mxu0 0
        %2290 = vmatprep.subr.bf16.mxu0 0
        %2291 = vmatpush1.bf16.msra.mxu0 0
        %2292 = vmatprep.subr.bf16.mxu0 0
        %2293 = vmatpush1.bf16.msra.mxu0 0
        %2294 = vmatprep.subr.bf16.mxu0 0
        %2295 = vmatpush1.bf16.msra.mxu0 0
        %2296 = vmatprep.subr.bf16.mxu0 0
        %2297 = vmatpush1.bf16.msra.mxu0 0
        %2298 = vmatprep.subr.bf16.mxu0 0
        %2299 = vmatpush1.bf16.msra.mxu0 0
        %2300 = vmatprep.subr.bf16.mxu0 0
        %2301 = vmatpush1.bf16.msra.mxu0 %v2284
        %2302 = vmatprep.subr.bf16.mxu0 0
        %2303 = vmatpush2.bf16.msra.mxu0 0
        %2304 = vmatprep.subr.bf16.mxu0 0
        %2305 = vmatpush2.bf16.msra.mxu0 0
        %2306 = vmatprep.subr.bf16.mxu0 0
        %2307 = vmatpush2.bf16.msra.mxu0 0
        %2308 = vmatprep.subr.bf16.mxu0 0
        %2309 = vmatpush2.bf16.msra.mxu0 0
        %2310 = vmatprep.subr.bf16.mxu0 0
        %2311 = vmatpush2.bf16.msra.mxu0 0
        %2312 = vmatprep.subr.bf16.mxu0 0
        %2313 = vmatpush2.bf16.msra.mxu0 0
        %2314 = vmatprep.subr.bf16.mxu0 0
        %2315 = vmatpush2.bf16.msra.mxu0 0
        %2316 = vmatprep.subr.bf16.mxu0 0
        %2317 = vmatpush2.bf16.msra.mxu0 0
        %2318 = vmatprep.mubr.bf16.mxu0 0
        %2319 = vmatmul.mubr.bf16.gmra.mxu0 %v2281
        %v2320 = vpop.f32.mrf.mxu0
        %v2321 = vadd.f32 0.0, %v2320
        %v2322 = vpop.f32.mrf.mxu0
        %v2323 = vpop.f32.mrf.mxu0
        %v2324 = vpop.f32.mrf.mxu0
        %2325 = vdwg.mxu0
        %2326 = vrot.lane.b32.xlu0 %v582, 64
        %v2327 = vpop.permute.xlu0 %2326
        %v2329 = vsel %vm1796, %v1980, 0
        %v2332 = vsel %vm1994, %v2327, 0
        %2334 = vmatprep.subr.bf16.mxu0 0
        %2335 = vmatpush1.bf16.msra.mxu0 0
        %2336 = vmatprep.subr.bf16.mxu0 0
        %2337 = vmatpush1.bf16.msra.mxu0 0
        %2338 = vmatprep.subr.bf16.mxu0 0
        %2339 = vmatpush1.bf16.msra.mxu0 0
        %2340 = vmatprep.subr.bf16.mxu0 0
        %2341 = vmatpush1.bf16.msra.mxu0 0
        %2342 = vmatprep.subr.bf16.mxu0 0
        %2343 = vmatpush1.bf16.msra.mxu0 0
        %2344 = vmatprep.subr.bf16.mxu0 0
        %2345 = vmatpush1.bf16.msra.mxu0 0
        %2346 = vmatprep.subr.bf16.mxu0 0
        %2347 = vmatpush1.bf16.msra.mxu0 0
        %2348 = vmatprep.subr.bf16.mxu0 0
        %2349 = vmatpush1.bf16.msra.mxu0 %v2332
        %2350 = vmatprep.subr.bf16.mxu0 0
        %2351 = vmatpush2.bf16.msra.mxu0 0
        %2352 = vmatprep.subr.bf16.mxu0 0
        %2353 = vmatpush2.bf16.msra.mxu0 0
        %2354 = vmatprep.subr.bf16.mxu0 0
        %2355 = vmatpush2.bf16.msra.mxu0 0
        %2356 = vmatprep.subr.bf16.mxu0 0
        %2357 = vmatpush2.bf16.msra.mxu0 0
        %2358 = vmatprep.subr.bf16.mxu0 0
        %2359 = vmatpush2.bf16.msra.mxu0 0
        %2360 = vmatprep.subr.bf16.mxu0 0
        %2361 = vmatpush2.bf16.msra.mxu0 0
        %2362 = vmatprep.subr.bf16.mxu0 0
        %2363 = vmatpush2.bf16.msra.mxu0 0
        %2364 = vmatprep.subr.bf16.mxu0 0
        %2365 = vmatpush2.bf16.msra.mxu0 0
        %2366 = vmatprep.mubr.bf16.mxu0 0
        %2367 = vmatmul.mubr.bf16.gmra.mxu0 %v2329
        %v2368 = vpop.f32.mrf.mxu0
        %v2369 = vadd.f32 0.0, %v2368
        %v2370 = vpop.f32.mrf.mxu0
        %v2371 = vpop.f32.mrf.mxu0
        %v2372 = vpop.f32.mrf.mxu0
        %2373 = vdwg.mxu0
        %v2374 = vunpack.c.l.b16 %v636
        %v2375 = vpack.c.b16 %v2374, %v2374
        %2376 = vrot.lane.b32.xlu0 %v2375, 64
        %v2377 = vpop.permute.xlu0 %2376
        %v2379 = vsel %vm1796, %v1981, 0
        %v2382 = vsel %vm1994, %v2377, 0
        %2384 = vmatprep.subr.bf16.mxu0 0
        %2385 = vmatpush1.bf16.msra.mxu0 0
        %2386 = vmatprep.subr.bf16.mxu0 0
        %2387 = vmatpush1.bf16.msra.mxu0 0
        %2388 = vmatprep.subr.bf16.mxu0 0
        %2389 = vmatpush1.bf16.msra.mxu0 0
        %2390 = vmatprep.subr.bf16.mxu0 0
        %2391 = vmatpush1.bf16.msra.mxu0 0
        %2392 = vmatprep.subr.bf16.mxu0 0
        %2393 = vmatpush1.bf16.msra.mxu0 0
        %2394 = vmatprep.subr.bf16.mxu0 0
        %2395 = vmatpush1.bf16.msra.mxu0 0
        %2396 = vmatprep.subr.bf16.mxu0 0
        %2397 = vmatpush1.bf16.msra.mxu0 0
        %2398 = vmatprep.subr.bf16.mxu0 0
        %2399 = vmatpush1.bf16.msra.mxu0 %v2382
        %2400 = vmatprep.subr.bf16.mxu0 0
        %2401 = vmatpush2.bf16.msra.mxu0 0
        %2402 = vmatprep.subr.bf16.mxu0 0
        %2403 = vmatpush2.bf16.msra.mxu0 0
        %2404 = vmatprep.subr.bf16.mxu0 0
        %2405 = vmatpush2.bf16.msra.mxu0 0
        %2406 = vmatprep.subr.bf16.mxu0 0
        %2407 = vmatpush2.bf16.msra.mxu0 0
        %2408 = vmatprep.subr.bf16.mxu0 0
        %2409 = vmatpush2.bf16.msra.mxu0 0
        %2410 = vmatprep.subr.bf16.mxu0 0
        %2411 = vmatpush2.bf16.msra.mxu0 0
        %2412 = vmatprep.subr.bf16.mxu0 0
        %2413 = vmatpush2.bf16.msra.mxu0 0
        %2414 = vmatprep.subr.bf16.mxu0 0
        %2415 = vmatpush2.bf16.msra.mxu0 0
        %2416 = vmatprep.mubr.bf16.mxu0 0
        %2417 = vmatmul.mubr.bf16.gmra.mxu0 %v2379
        %v2418 = vpop.f32.mrf.mxu0
        %v2419 = vadd.f32 0.0, %v2418
        %v2420 = vpop.f32.mrf.mxu0
        %v2421 = vpop.f32.mrf.mxu0
        %v2422 = vpop.f32.mrf.mxu0
        %2423 = vdwg.mxu0
        %v2424 = vunpack.c.l.b16 %v637
        %v2425 = vpack.c.b16 %v2424, %v2424
        %2426 = vrot.lane.b32.xlu0 %v2425, 64
        %v2427 = vpop.permute.xlu0 %2426
        %v2429 = vsel %vm1796, %v1982, 0
        %v2432 = vsel %vm1994, %v2427, 0
        %2434 = vmatprep.subr.bf16.mxu0 0
        %2435 = vmatpush1.bf16.msra.mxu0 0
        %2436 = vmatprep.subr.bf16.mxu0 0
        %2437 = vmatpush1.bf16.msra.mxu0 0
        %2438 = vmatprep.subr.bf16.mxu0 0
        %2439 = vmatpush1.bf16.msra.mxu0 0
        %2440 = vmatprep.subr.bf16.mxu0 0
        %2441 = vmatpush1.bf16.msra.mxu0 0
        %2442 = vmatprep.subr.bf16.mxu0 0
        %2443 = vmatpush1.bf16.msra.mxu0 0
        %2444 = vmatprep.subr.bf16.mxu0 0
        %2445 = vmatpush1.bf16.msra.mxu0 0
        %2446 = vmatprep.subr.bf16.mxu0 0
        %2447 = vmatpush1.bf16.msra.mxu0 0
        %2448 = vmatprep.subr.bf16.mxu0 0
        %2449 = vmatpush1.bf16.msra.mxu0 %v2432
        %2450 = vmatprep.subr.bf16.mxu0 0
        %2451 = vmatpush2.bf16.msra.mxu0 0
        %2452 = vmatprep.subr.bf16.mxu0 0
        %2453 = vmatpush2.bf16.msra.mxu0 0
        %2454 = vmatprep.subr.bf16.mxu0 0
        %2455 = vmatpush2.bf16.msra.mxu0 0
        %2456 = vmatprep.subr.bf16.mxu0 0
        %2457 = vmatpush2.bf16.msra.mxu0 0
        %2458 = vmatprep.subr.bf16.mxu0 0
        %2459 = vmatpush2.bf16.msra.mxu0 0
        %2460 = vmatprep.subr.bf16.mxu0 0
        %2461 = vmatpush2.bf16.msra.mxu0 0
        %2462 = vmatprep.subr.bf16.mxu0 0
        %2463 = vmatpush2.bf16.msra.mxu0 0
        %2464 = vmatprep.subr.bf16.mxu0 0
        %2465 = vmatpush2.bf16.msra.mxu0 0
        %2466 = vmatprep.mubr.bf16.mxu0 0
        %2467 = vmatmul.mubr.bf16.gmra.mxu0 %v2429
        %v2468 = vpop.f32.mrf.mxu0
        %v2469 = vadd.f32 0.0, %v2468
        %v2470 = vpop.f32.mrf.mxu0
        %v2471 = vpop.f32.mrf.mxu0
        %v2472 = vpop.f32.mrf.mxu0
        %2473 = vdwg.mxu0
        %v2474 = vunpack.c.l.b16 %v638
        %v2475 = vpack.c.b16 %v2474, %v2474
        %2476 = vrot.lane.b32.xlu0 %v2475, 64
        %v2477 = vpop.permute.xlu0 %2476
        %v2479 = vsel %vm1796, %v1983, 0
        %v2482 = vsel %vm1994, %v2477, 0
        %2484 = vmatprep.subr.bf16.mxu0 0
        %2485 = vmatpush1.bf16.msra.mxu0 0
        %2486 = vmatprep.subr.bf16.mxu0 0
        %2487 = vmatpush1.bf16.msra.mxu0 0
        %2488 = vmatprep.subr.bf16.mxu0 0
        %2489 = vmatpush1.bf16.msra.mxu0 0
        %2490 = vmatprep.subr.bf16.mxu0 0
        %2491 = vmatpush1.bf16.msra.mxu0 0
        %2492 = vmatprep.subr.bf16.mxu0 0
        %2493 = vmatpush1.bf16.msra.mxu0 0
        %2494 = vmatprep.subr.bf16.mxu0 0
        %2495 = vmatpush1.bf16.msra.mxu0 0
        %2496 = vmatprep.subr.bf16.mxu0 0
        %2497 = vmatpush1.bf16.msra.mxu0 0
        %2498 = vmatprep.subr.bf16.mxu0 0
        %2499 = vmatpush1.bf16.msra.mxu0 %v2482
        %2500 = vmatprep.subr.bf16.mxu0 0
        %2501 = vmatpush2.bf16.msra.mxu0 0
        %2502 = vmatprep.subr.bf16.mxu0 0
        %2503 = vmatpush2.bf16.msra.mxu0 0
        %2504 = vmatprep.subr.bf16.mxu0 0
        %2505 = vmatpush2.bf16.msra.mxu0 0
        %2506 = vmatprep.subr.bf16.mxu0 0
        %2507 = vmatpush2.bf16.msra.mxu0 0
        %2508 = vmatprep.subr.bf16.mxu0 0
        %2509 = vmatpush2.bf16.msra.mxu0 0
        %2510 = vmatprep.subr.bf16.mxu0 0
        %2511 = vmatpush2.bf16.msra.mxu0 0
        %2512 = vmatprep.subr.bf16.mxu0 0
        %2513 = vmatpush2.bf16.msra.mxu0 0
        %2514 = vmatprep.subr.bf16.mxu0 0
        %2515 = vmatpush2.bf16.msra.mxu0 0
        %2516 = vmatprep.mubr.bf16.mxu0 0
        %2517 = vmatmul.mubr.bf16.gmra.mxu0 %v2479
        %v2518 = vpop.f32.mrf.mxu0
        %v2519 = vadd.f32 0.0, %v2518
        %v2520 = vpop.f32.mrf.mxu0
        %v2521 = vpop.f32.mrf.mxu0
        %v2522 = vpop.f32.mrf.mxu0
        %2523 = vdwg.mxu0
        %v2524 = vunpack.c.l.b16 %v639
        %v2525 = vpack.c.b16 %v2524, %v2524
        %2526 = vrot.lane.b32.xlu0 %v2525, 64
        %v2527 = vpop.permute.xlu0 %2526
        %v2529 = vsel %vm1796, %v1984, 0
        %v2532 = vsel %vm1994, %v2527, 0
        %2534 = vmatprep.subr.bf16.mxu0 0
        %2535 = vmatpush1.bf16.msra.mxu0 0
        %2536 = vmatprep.subr.bf16.mxu0 0
        %2537 = vmatpush1.bf16.msra.mxu0 0
        %2538 = vmatprep.subr.bf16.mxu0 0
        %2539 = vmatpush1.bf16.msra.mxu0 0
        %2540 = vmatprep.subr.bf16.mxu0 0
        %2541 = vmatpush1.bf16.msra.mxu0 0
        %2542 = vmatprep.subr.bf16.mxu0 0
        %2543 = vmatpush1.bf16.msra.mxu0 0
        %2544 = vmatprep.subr.bf16.mxu0 0
        %2545 = vmatpush1.bf16.msra.mxu0 0
        %2546 = vmatprep.subr.bf16.mxu0 0
        %2547 = vmatpush1.bf16.msra.mxu0 0
        %2548 = vmatprep.subr.bf16.mxu0 0
        %2549 = vmatpush1.bf16.msra.mxu0 %v2532
        %2550 = vmatprep.subr.bf16.mxu0 0
        %2551 = vmatpush2.bf16.msra.mxu0 0
        %2552 = vmatprep.subr.bf16.mxu0 0
        %2553 = vmatpush2.bf16.msra.mxu0 0
        %2554 = vmatprep.subr.bf16.mxu0 0
        %2555 = vmatpush2.bf16.msra.mxu0 0
        %2556 = vmatprep.subr.bf16.mxu0 0
        %2557 = vmatpush2.bf16.msra.mxu0 0
        %2558 = vmatprep.subr.bf16.mxu0 0
        %2559 = vmatpush2.bf16.msra.mxu0 0
        %2560 = vmatprep.subr.bf16.mxu0 0
        %2561 = vmatpush2.bf16.msra.mxu0 0
        %2562 = vmatprep.subr.bf16.mxu0 0
        %2563 = vmatpush2.bf16.msra.mxu0 0
        %2564 = vmatprep.subr.bf16.mxu0 0
        %2565 = vmatpush2.bf16.msra.mxu0 0
        %2566 = vmatprep.mubr.bf16.mxu0 0
        %2567 = vmatmul.mubr.bf16.gmra.mxu0 %v2529
        %v2568 = vpop.f32.mrf.mxu0
        %v2569 = vadd.f32 0.0, %v2568
        %v2570 = vpop.f32.mrf.mxu0
        %v2571 = vpop.f32.mrf.mxu0
        %v2572 = vpop.f32.mrf.mxu0
        %2573 = vdwg.mxu0
        %v2574 = vunpack.c.l.b16 %v640
        %v2575 = vpack.c.b16 %v2574, %v2574
        %2576 = vrot.lane.b32.xlu0 %v2575, 64
        %v2577 = vpop.permute.xlu0 %2576
        %v2579 = vsel %vm1796, %v1985, 0
        %v2582 = vsel %vm1994, %v2577, 0
        %2584 = vmatprep.subr.bf16.mxu0 0
        %2585 = vmatpush1.bf16.msra.mxu0 0
        %2586 = vmatprep.subr.bf16.mxu0 0
        %2587 = vmatpush1.bf16.msra.mxu0 0
        %2588 = vmatprep.subr.bf16.mxu0 0
        %2589 = vmatpush1.bf16.msra.mxu0 0
        %2590 = vmatprep.subr.bf16.mxu0 0
        %2591 = vmatpush1.bf16.msra.mxu0 0
        %2592 = vmatprep.subr.bf16.mxu0 0
        %2593 = vmatpush1.bf16.msra.mxu0 0
        %2594 = vmatprep.subr.bf16.mxu0 0
        %2595 = vmatpush1.bf16.msra.mxu0 0
        %2596 = vmatprep.subr.bf16.mxu0 0
        %2597 = vmatpush1.bf16.msra.mxu0 0
        %2598 = vmatprep.subr.bf16.mxu0 0
        %2599 = vmatpush1.bf16.msra.mxu0 %v2582
        %2600 = vmatprep.subr.bf16.mxu0 0
        %2601 = vmatpush2.bf16.msra.mxu0 0
        %2602 = vmatprep.subr.bf16.mxu0 0
        %2603 = vmatpush2.bf16.msra.mxu0 0
        %2604 = vmatprep.subr.bf16.mxu0 0
        %2605 = vmatpush2.bf16.msra.mxu0 0
        %2606 = vmatprep.subr.bf16.mxu0 0
        %2607 = vmatpush2.bf16.msra.mxu0 0
        %2608 = vmatprep.subr.bf16.mxu0 0
        %2609 = vmatpush2.bf16.msra.mxu0 0
        %2610 = vmatprep.subr.bf16.mxu0 0
        %2611 = vmatpush2.bf16.msra.mxu0 0
        %2612 = vmatprep.subr.bf16.mxu0 0
        %2613 = vmatpush2.bf16.msra.mxu0 0
        %2614 = vmatprep.subr.bf16.mxu0 0
        %2615 = vmatpush2.bf16.msra.mxu0 0
        %2616 = vmatprep.mubr.bf16.mxu0 0
        %2617 = vmatmul.mubr.bf16.gmra.mxu0 %v2579
        %v2618 = vpop.f32.mrf.mxu0
        %v2619 = vadd.f32 0.0, %v2618
        %v2620 = vpop.f32.mrf.mxu0
        %v2621 = vpop.f32.mrf.mxu0
        %v2622 = vpop.f32.mrf.mxu0
        %2623 = vdwg.mxu0
        %v2624 = vunpack.c.l.b16 %v641
        %v2625 = vpack.c.b16 %v2624, %v2624
        %2626 = vrot.lane.b32.xlu0 %v2625, 64
        %v2627 = vpop.permute.xlu0 %2626
        %v2629 = vsel %vm1796, %v1986, 0
        %v2632 = vsel %vm1994, %v2627, 0
        %2634 = vmatprep.subr.bf16.mxu0 0
        %2635 = vmatpush1.bf16.msra.mxu0 0
        %2636 = vmatprep.subr.bf16.mxu0 0
        %2637 = vmatpush1.bf16.msra.mxu0 0
        %2638 = vmatprep.subr.bf16.mxu0 0
        %2639 = vmatpush1.bf16.msra.mxu0 0
        %2640 = vmatprep.subr.bf16.mxu0 0
        %2641 = vmatpush1.bf16.msra.mxu0 0
        %2642 = vmatprep.subr.bf16.mxu0 0
        %2643 = vmatpush1.bf16.msra.mxu0 0
        %2644 = vmatprep.subr.bf16.mxu0 0
        %2645 = vmatpush1.bf16.msra.mxu0 0
        %2646 = vmatprep.subr.bf16.mxu0 0
        %2647 = vmatpush1.bf16.msra.mxu0 0
        %2648 = vmatprep.subr.bf16.mxu0 0
        %2649 = vmatpush1.bf16.msra.mxu0 %v2632
        %2650 = vmatprep.subr.bf16.mxu0 0
        %2651 = vmatpush2.bf16.msra.mxu0 0
        %2652 = vmatprep.subr.bf16.mxu0 0
        %2653 = vmatpush2.bf16.msra.mxu0 0
        %2654 = vmatprep.subr.bf16.mxu0 0
        %2655 = vmatpush2.bf16.msra.mxu0 0
        %2656 = vmatprep.subr.bf16.mxu0 0
        %2657 = vmatpush2.bf16.msra.mxu0 0
        %2658 = vmatprep.subr.bf16.mxu0 0
        %2659 = vmatpush2.bf16.msra.mxu0 0
        %2660 = vmatprep.subr.bf16.mxu0 0
        %2661 = vmatpush2.bf16.msra.mxu0 0
        %2662 = vmatprep.subr.bf16.mxu0 0
        %2663 = vmatpush2.bf16.msra.mxu0 0
        %2664 = vmatprep.subr.bf16.mxu0 0
        %2665 = vmatpush2.bf16.msra.mxu0 0
        %2666 = vmatprep.mubr.bf16.mxu0 0
        %2667 = vmatmul.mubr.bf16.gmra.mxu0 %v2629
        %v2668 = vpop.f32.mrf.mxu0
        %v2669 = vadd.f32 0.0, %v2668
        %v2670 = vpop.f32.mrf.mxu0
        %v2671 = vpop.f32.mrf.mxu0
        %v2672 = vpop.f32.mrf.mxu0
        %2673 = vdwg.mxu0
        %v2674 = vunpack.c.l.b16 %v642
        %v2675 = vpack.c.b16 %v2674, %v2674
        %2676 = vrot.lane.b32.xlu0 %v2675, 64
        %v2677 = vpop.permute.xlu0 %2676
        %v2679 = vsel %vm1796, %v1987, 0
        %v2682 = vsel %vm1994, %v2677, 0
        %2684 = vmatprep.subr.bf16.mxu0 0
        %2685 = vmatpush1.bf16.msra.mxu0 0
        %2686 = vmatprep.subr.bf16.mxu0 0
        %2687 = vmatpush1.bf16.msra.mxu0 0
        %2688 = vmatprep.subr.bf16.mxu0 0
        %2689 = vmatpush1.bf16.msra.mxu0 0
        %2690 = vmatprep.subr.bf16.mxu0 0
        %2691 = vmatpush1.bf16.msra.mxu0 0
        %2692 = vmatprep.subr.bf16.mxu0 0
        %2693 = vmatpush1.bf16.msra.mxu0 0
        %2694 = vmatprep.subr.bf16.mxu0 0
        %2695 = vmatpush1.bf16.msra.mxu0 0
        %2696 = vmatprep.subr.bf16.mxu0 0
        %2697 = vmatpush1.bf16.msra.mxu0 0
        %2698 = vmatprep.subr.bf16.mxu0 0
        %2699 = vmatpush1.bf16.msra.mxu0 %v2682
        %2700 = vmatprep.subr.bf16.mxu0 0
        %2701 = vmatpush2.bf16.msra.mxu0 0
        %2702 = vmatprep.subr.bf16.mxu0 0
        %2703 = vmatpush2.bf16.msra.mxu0 0
        %2704 = vmatprep.subr.bf16.mxu0 0
        %2705 = vmatpush2.bf16.msra.mxu0 0
        %2706 = vmatprep.subr.bf16.mxu0 0
        %2707 = vmatpush2.bf16.msra.mxu0 0
        %2708 = vmatprep.subr.bf16.mxu0 0
        %2709 = vmatpush2.bf16.msra.mxu0 0
        %2710 = vmatprep.subr.bf16.mxu0 0
        %2711 = vmatpush2.bf16.msra.mxu0 0
        %2712 = vmatprep.subr.bf16.mxu0 0
        %2713 = vmatpush2.bf16.msra.mxu0 0
        %2714 = vmatprep.subr.bf16.mxu0 0
        %2715 = vmatpush2.bf16.msra.mxu0 0
        %2716 = vmatprep.mubr.bf16.mxu0 0
        %2717 = vmatmul.mubr.bf16.gmra.mxu0 %v2679
        %v2718 = vpop.f32.mrf.mxu0
        %v2719 = vadd.f32 0.0, %v2718
        %v2720 = vpop.f32.mrf.mxu0
        %v2721 = vpop.f32.mrf.mxu0
        %v2722 = vpop.f32.mrf.mxu0
        %2723 = vdwg.mxu0
        %v2724 = vunpack.c.l.b16 %v643
        %v2725 = vpack.c.b16 %v2724, %v2724
        %2726 = vrot.lane.b32.xlu0 %v2725, 64
        %v2727 = vpop.permute.xlu0 %2726
        %v2729 = vsel %vm1796, %v1988, 0
        %v2732 = vsel %vm1994, %v2727, 0
        %2734 = vmatprep.subr.bf16.mxu0 0
        %2735 = vmatpush1.bf16.msra.mxu0 0
        %2736 = vmatprep.subr.bf16.mxu0 0
        %2737 = vmatpush1.bf16.msra.mxu0 0
        %2738 = vmatprep.subr.bf16.mxu0 0
        %2739 = vmatpush1.bf16.msra.mxu0 0
        %2740 = vmatprep.subr.bf16.mxu0 0
        %2741 = vmatpush1.bf16.msra.mxu0 0
        %2742 = vmatprep.subr.bf16.mxu0 0
        %2743 = vmatpush1.bf16.msra.mxu0 0
        %2744 = vmatprep.subr.bf16.mxu0 0
        %2745 = vmatpush1.bf16.msra.mxu0 0
        %2746 = vmatprep.subr.bf16.mxu0 0
        %2747 = vmatpush1.bf16.msra.mxu0 0
        %2748 = vmatprep.subr.bf16.mxu0 0
        %2749 = vmatpush1.bf16.msra.mxu0 %v2732
        %2750 = vmatprep.subr.bf16.mxu0 0
        %2751 = vmatpush2.bf16.msra.mxu0 0
        %2752 = vmatprep.subr.bf16.mxu0 0
        %2753 = vmatpush2.bf16.msra.mxu0 0
        %2754 = vmatprep.subr.bf16.mxu0 0
        %2755 = vmatpush2.bf16.msra.mxu0 0
        %2756 = vmatprep.subr.bf16.mxu0 0
        %2757 = vmatpush2.bf16.msra.mxu0 0
        %2758 = vmatprep.subr.bf16.mxu0 0
        %2759 = vmatpush2.bf16.msra.mxu0 0
        %2760 = vmatprep.subr.bf16.mxu0 0
        %2761 = vmatpush2.bf16.msra.mxu0 0
        %2762 = vmatprep.subr.bf16.mxu0 0
        %2763 = vmatpush2.bf16.msra.mxu0 0
        %2764 = vmatprep.subr.bf16.mxu0 0
        %2765 = vmatpush2.bf16.msra.mxu0 0
        %2766 = vmatprep.mubr.bf16.mxu0 0
        %2767 = vmatmul.mubr.bf16.gmra.mxu0 %v2729
        %v2768 = vpop.f32.mrf.mxu0
        %v2769 = vadd.f32 0.0, %v2768
        %v2770 = vpop.f32.mrf.mxu0
        %v2771 = vpop.f32.mrf.mxu0
        %v2772 = vpop.f32.mrf.mxu0
        %2773 = vdwg.mxu0
        %v2774 = vpack.c.bf16 %v2033, %v2033
        %v2775 = vpack.c.bf16 %v2081, %v2081
        %v2776 = vpack.c.bf16 %v2129, %v2129
        %v2777 = vpack.c.bf16 %v2177, %v2177
        %v2778 = vpack.c.bf16 %v2225, %v2225
        %v2779 = vpack.c.bf16 %v2273, %v2273
        %v2780 = vpack.c.bf16 %v2321, %v2321
        %v2781 = vpack.c.bf16 %v2369, %v2369
        %v2782 = vpack.c.bf16 %v2419, %v2419
        %v2783 = vpack.c.bf16 %v2469, %v2469
        %v2784 = vpack.c.bf16 %v2519, %v2519
        %v2785 = vpack.c.bf16 %v2569, %v2569
        %v2786 = vpack.c.bf16 %v2619, %v2619
        %v2787 = vpack.c.bf16 %v2669, %v2669
        %v2788 = vpack.c.bf16 %v2719, %v2719
        %v2789 = vpack.c.bf16 %v2769, %v2769
        %2798 = vrot.lane.b32.xlu0 %v2782, 32
        %v2799 = vpop.permute.xlu0 %2798
        %2800 = vrot.lane.b32.xlu0 %v2783, 32
        %v2801 = vpop.permute.xlu0 %2800
        %2802 = vrot.lane.b32.xlu0 %v2784, 32
        %v2803 = vpop.permute.xlu0 %2802
        %2804 = vrot.lane.b32.xlu0 %v2785, 32
        %v2805 = vpop.permute.xlu0 %2804
        %2806 = vrot.lane.b32.xlu0 %v2786, 32
        %v2807 = vpop.permute.xlu0 %2806
        %2808 = vrot.lane.b32.xlu0 %v2787, 32
        %v2809 = vpop.permute.xlu0 %2808
        %2810 = vrot.lane.b32.xlu0 %v2788, 32
        %v2811 = vpop.permute.xlu0 %2810
        %2812 = vrot.lane.b32.xlu0 %v2789, 32
        %v2813 = vpop.permute.xlu0 %2812
        %v2816 = vsel %vm684, %v2774, %v2799
        %v2819 = vsel %vm684, %v2775, %v2801
        %v2822 = vsel %vm684, %v2776, %v2803
        %v2825 = vsel %vm684, %v2777, %v2805
        %v2828 = vsel %vm684, %v2778, %v2807
        %v2831 = vsel %vm684, %v2779, %v2809
        %v2834 = vsel %vm684, %v2780, %v2811
        %v2837 = vsel %vm684, %v2781, %v2813
        %v2838 = vld [vmem:[#allocation10] sm:$0xf]
        %v2839 = vld [vmem:[#allocation10 + $0x4] sm:$0xf]
        %v2840 = vld [vmem:[#allocation10 + $0x8] sm:$0xf]
        %v2841 = vld [vmem:[#allocation10 + $0xc] sm:$0xf]
        %v2842 = vld [vmem:[#allocation10 + $0x10] sm:$0xf]
        %v2843 = vld [vmem:[#allocation10 + $0x14] sm:$0xf]
        %v2844 = vld [vmem:[#allocation10 + $0x18] sm:$0xf]
        %v2845 = vld [vmem:[#allocation10 + $0x1c] sm:$0xf]
        %v2846 = vld [vmem:[%s5] sm:$0x1]
        %v2848 = vlaneseq
        %v2849 = vshrl.u32 %v2848, 7
        %v2850 = vsub.s32 0, %v2849
        %v2851 = vrot.slane %v2846, %v2850
        %v2861 = vunpack.c.l.b16 %v2816
        %v2862 = vunpack.c.l.b16 %v2819
        %v2863 = vunpack.c.l.b16 %v2822
        %v2864 = vunpack.c.l.b16 %v2825
        %v2865 = vunpack.c.l.b16 %v2828
        %v2866 = vunpack.c.l.b16 %v2831
        %v2867 = vunpack.c.l.b16 %v2834
        %v2868 = vunpack.c.l.b16 %v2837
        %v2869 = vpack.c.b16 %v2862, %v2861
        %v2870 = vpack.c.b16 %v2864, %v2863
        %v2871 = vpack.c.b16 %v2866, %v2865
        %v2872 = vpack.c.b16 %v2868, %v2867
        %v2881 = vunpack.c.l.b16 %v2838
        %v2882 = vunpack.c.l.b16 %v2839
        %v2883 = vunpack.c.l.b16 %v2840
        %v2884 = vunpack.c.l.b16 %v2841
        %v2885 = vunpack.c.l.b16 %v2842
        %v2886 = vunpack.c.l.b16 %v2843
        %v2887 = vunpack.c.l.b16 %v2844
        %v2888 = vunpack.c.l.b16 %v2845
        %v2889 = vpack.c.b16 %v2882, %v2881
        %v2890 = vpack.c.b16 %v2884, %v2883
        %v2891 = vpack.c.b16 %v2886, %v2885
        %v2892 = vpack.c.b16 %v2888, %v2887
        %v2898 = vsel %vm469, %v2869, 0
        %v2901 = vsel %vm469, %v2870, 0
        %v2904 = vsel %vm469, %v2871, 0
        %v2907 = vsel %vm469, %v2872, 0
        %2909 = vmatprep.subr.bf16.mxu0 0
        %2910 = vmatpush1.bf16.msra.mxu0 0
        %2911 = vmatprep.subr.bf16.mxu0 0
        %2912 = vmatpush1.bf16.msra.mxu0 0
        %2913 = vmatprep.subr.bf16.mxu0 0
        %2914 = vmatpush1.bf16.msra.mxu0 0
        %2915 = vmatprep.subr.bf16.mxu0 0
        %2916 = vmatpush1.bf16.msra.mxu0 0
        %2917 = vmatprep.subr.bf16.mxu0 0
        %2918 = vmatpush1.bf16.msra.mxu0 %v2892
        %2919 = vmatprep.subr.bf16.mxu0 0
        %2920 = vmatpush1.bf16.msra.mxu0 %v2891
        %2921 = vmatprep.subr.bf16.mxu0 0
        %2922 = vmatpush1.bf16.msra.mxu0 %v2890
        %2923 = vmatprep.subr.bf16.mxu0 0
        %2924 = vmatpush1.bf16.msra.mxu0 %v2889
        %2925 = vmatprep.subr.bf16.mxu0 0
        %2926 = vmatpush2.bf16.msra.mxu0 0
        %2927 = vmatprep.subr.bf16.mxu0 0
        %2928 = vmatpush2.bf16.msra.mxu0 0
        %2929 = vmatprep.subr.bf16.mxu0 0
        %2930 = vmatpush2.bf16.msra.mxu0 0
        %2931 = vmatprep.subr.bf16.mxu0 0
        %2932 = vmatpush2.bf16.msra.mxu0 0
        %2933 = vmatprep.subr.bf16.mxu0 0
        %2934 = vmatpush2.bf16.msra.mxu0 0
        %2935 = vmatprep.subr.bf16.mxu0 0
        %2936 = vmatpush2.bf16.msra.mxu0 0
        %2937 = vmatprep.subr.bf16.mxu0 0
        %2938 = vmatpush2.bf16.msra.mxu0 0
        %2939 = vmatprep.subr.bf16.mxu0 0
        %2940 = vmatpush2.bf16.msra.mxu0 0
        %2941 = vmatprep.mubr.bf16.mxu0 0
        %2942 = vmatmul.mubr.bf16.gmra.mxu0 %v2898
        %v2943 = vpop.f32.mrf.mxu0
        %v2944 = vadd.f32 %v2851, %v2943
        %v2945 = vpop.f32.mrf.mxu0
        %v2946 = vpop.f32.mrf.mxu0
        %v2947 = vadd.f32 %v2851, %v2946
        %v2948 = vpop.f32.mrf.mxu0
        %2949 = vmatprep.mubr.bf16.mxu0 0
        %2950 = vmatmul.mubr.bf16.gmra.mxu0 %v2901
        %v2951 = vpop.f32.mrf.mxu0
        %v2952 = vadd.f32 %v2851, %v2951
        %v2953 = vpop.f32.mrf.mxu0
        %v2954 = vpop.f32.mrf.mxu0
        %v2955 = vadd.f32 %v2851, %v2954
        %v2956 = vpop.f32.mrf.mxu0
        %2957 = vmatprep.mubr.bf16.mxu0 0
        %2958 = vmatmul.mubr.bf16.gmra.mxu0 %v2904
        %v2959 = vpop.f32.mrf.mxu0
        %v2960 = vadd.f32 %v2851, %v2959
        %v2961 = vpop.f32.mrf.mxu0
        %v2962 = vpop.f32.mrf.mxu0
        %v2963 = vadd.f32 %v2851, %v2962
        %v2964 = vpop.f32.mrf.mxu0
        %2965 = vmatprep.mubr.bf16.mxu0 0
        %2966 = vmatmul.mubr.bf16.gmra.mxu0 %v2907
        %v2967 = vpop.f32.mrf.mxu0
        %v2968 = vadd.f32 %v2851, %v2967
        %v2969 = vpop.f32.mrf.mxu0
        %v2970 = vpop.f32.mrf.mxu0
        %v2971 = vadd.f32 %v2851, %v2970
        %v2972 = vpop.f32.mrf.mxu0
        %2973 = vdwg.mxu0
        %v2974 = vld [vmem:[%s323] sm:$0xff]
        %v2975 = vld [vmem:[%s323 + $0x8] sm:$0xff]
        %v2976 = vld [vmem:[%s323 + $0x10] sm:$0xff]
        %v2977 = vld [vmem:[%s323 + $0x18] sm:$0xff]
        %v2978 = vld [vmem:[%s323 + $0x20] sm:$0xff]
        %v2979 = vld [vmem:[%s323 + $0x28] sm:$0xff]
        %v2980 = vld [vmem:[%s323 + $0x30] sm:$0xff]
        %v2981 = vld [vmem:[%s323 + $0x38] sm:$0xff]
        %v2982 = vadd.f32 %v2974, %v2944
        %v2983 = vadd.f32 %v2975, %v2947
        %v2984 = vadd.f32 %v2976, %v2952
        %v2985 = vadd.f32 %v2977, %v2955
        %v2986 = vadd.f32 %v2978, %v2960
        %v2987 = vadd.f32 %v2979, %v2963
        %v2988 = vadd.f32 %v2980, %v2968
        %v2989 = vadd.f32 %v2981, %v2971
        %2990 = vst.msk [vmem:[%s387] sm:$0xff] %vm469, %v2982
        %2991 = vst.msk [vmem:[%s387 + $0x8] sm:$0xff] %vm469, %v2983
        %2992 = vst.msk [vmem:[%s387 + $0x10] sm:$0xff] %vm469, %v2984
        %2993 = vst.msk [vmem:[%s387 + $0x18] sm:$0xff] %vm469, %v2985
        %2994 = vst.msk [vmem:[%s387 + $0x20] sm:$0xff] %vm469, %v2986
        %2995 = vst.msk [vmem:[%s387 + $0x28] sm:$0xff] %vm469, %v2987
        %2996 = vst.msk [vmem:[%s387 + $0x30] sm:$0xff] %vm469, %v2988
        %2997 = vst.msk [vmem:[%s387 + $0x38] sm:$0xff] %vm469, %v2989
        %s2998 = sand.u32 %s192, 1
        %s2999 = scalar_lea.sflag [#allocation4], %s2998
        %s3000 = sand.u32 %s192, 1
        %s3001 = smul.addr %s3000, 64
        %s3002 = scalar_lea.vmem [#allocation11], %s3001
        // Predicated region
        $region65: #{tpu_custom_call.1} parent=43 // pred_check
          %p3003 = pneg %p202
        $region66: #{tpu_custom_call.1} parent=43 // pred_check_branch
          %3005 = sbr.rel (%p3003) target = $region68
        $region67: #{tpu_custom_call.1} parent=43 // pred_region
          %s3006 = smul.u32 8, %s32
          %s3008 = ssub.s32 1024, 1024
          %3009 = vsyncadd %s2999, %s3008
          %s3010 = smul.addr %s31, 16
          %s3011 = sadd.s32 %s3006, %s3010
          %s3012 = smul.addr %s3011, 128
          %s3013 = scalar_lea.hbm %s6, %s3012
          %s3014 = sshll.u32 %s3002, 4
          %s3015 = int_to_ptr.vmem [resolvable:$true] %s3014
          %3020 = dma.vmem_to_hbm [thread:$0]  %s3015, 1024, %s3013, %s2999, 128, 128, 8
        $region68: #{tpu_custom_call.1} parent=43 // pred_fallthru
          _
      $region44: #{tpu_custom_call.1} parent=5 // pred_fallthru
        _
      %p3021 = scmp.le.s32.totalorder 2, %s22
      // Predicated region
      $region69: #{tpu_custom_call.1} parent=5 // pred_check
        %p3022 = pneg %p3021
      $region70: #{tpu_custom_call.1} parent=5 // pred_check_branch
        %3024 = sbr.rel (%p3022) target = $region72
      $region71: #{tpu_custom_call.1} parent=5 // pred_region
        %s3025 = ssub.s32 %s22, 2
        // Predicated region
        $region73: #{tpu_custom_call.1} parent=71 // pred_check
          %p3026 = pneg %p208
        $region74: #{tpu_custom_call.1} parent=71 // pred_check_branch
          %3028 = sbr.rel (%p3026) target = $region76
        $region75: #{tpu_custom_call.1} parent=71 // pred_region
          %s3029 = sand.u32 %s193, 1
          %s3030 = scalar_lea.sflag [#allocation4], %s3029
          %s3031 = sand.u32 %s193, 1
          %s3032 = smul.addr %s3031, 64
          %s3033 = scalar_lea.vmem [#allocation11], %s3032
          %3034 = dma.done %s3030, 1024
        $region76: #{tpu_custom_call.1} parent=71 // pred_fallthru
          _
      $region72: #{tpu_custom_call.1} parent=5 // pred_fallthru
        _
    $region6: #{tpu_custom_call.1} parent=1 // loop_footer
      %s26 = sadd.s32 1, %s22
    $region7: #{tpu_custom_call.1} parent=1 // loop_footer_branch
      %21 = sbr.rel target = $region3
    $region8: #{tpu_custom_call.1} parent=1 // loop_exit
      _
    %3035 = vsyncpa [#allocation3], 1
    %s3036 = scalar_lea.sflag [#allocation3], 1
    %3037 = vsyncpa %s3036, 1
    %3038 = vsyncpa [#allocation6], 1
    %s3039 = scalar_lea.sflag [#allocation6], 1
    %3040 = vsyncpa %s3039, 1
    %3041 = vsyncpa [#allocation9], 1
    %3042 = vsyncpa [#allocation4], 1
    %s3043 = scalar_lea.sflag [#allocation4], 1
    %3044 = vsyncpa %s3043, 1

// kernel: tpu_custom_call.1
$region0: #{tpu_custom_call.1}
  #allocation0 [shape = 'u32[]', space=smem, size = 0x4, offset = 0x4, fixed_abs, tag = 'smem constant byte address 0x4 - core index']
  #allocation1 [shape = 'u32[144,128]{1,0:T(1,128)}', space=vmem, size = 0x12000, scoped, tag = 'internal scratch']
  %s0 = inlined_call_operand.hbm [shape: f32[2,16,8,64], index: 0, kind: input, shape index: {}]
  %s1 = inlined_call_operand.hbm [shape: f32[2,8,64], index: 1, kind: input, shape index: {}]
  %s2 = inlined_call_operand.hbm [shape: f32[2,8,64], index: 2, kind: input, shape index: {}]
  %s3 = inlined_call_operand.hbm [shape: bf16[64,192], index: 3, kind: input, shape index: {}]
  %s4 = inlined_call_operand.hbm [shape: bf16[64,64], index: 4, kind: input, shape index: {}]
  %s5 = inlined_call_operand.vmem [shape: f32[1,64], index: 5, kind: input, shape index: {}]
  %s6 = inlined_call_operand.hbm [shape: f32[2,16,8,64], index: 6, kind: output, shape index: {}]
  %s7 = sld [smem:[#allocation0]]
  $region77: #{tpu_custom_call.1} parent=0
    _
  %s9 = ssub.s32 1, %s7
  %s10 = scalar_select 0, %s9, %s7
  $region1: #{tpu_custom_call.1} parent=0
    #allocation2 [shape = 'u8[65536]{0}', space=vmem, size = 0x10000, scoped, tag = 'input window, operand 0']
    #allocation3 [shape = 's32[2]{0}', space=sflag, size = 0x8, scoped, tag = 'scoped memory for tpu_custom_call.1']
    #allocation4 [shape = 's32[2]{0}', space=sflag, size = 0x8, scoped, tag = 'scoped memory for tpu_custom_call.1']
    #allocation5 [shape = 'u8[8192]{0}', space=vmem, size = 0x2000, scoped, tag = 'input window, operand 1']
    #allocation6 [shape = 's32[2]{0}', space=sflag, size = 0x8, scoped, tag = 'scoped memory for tpu_custom_call.1']
    #allocation7 [shape = 'u8[8192]{0}', space=vmem, size = 0x2000, scoped, tag = 'input window, operand 2']
    #allocation8 [shape = 'u8[32768]{0}', space=vmem, size = 0x8000, scoped, tag = 'input window, operand 3, single buffered']
    #allocation9 [shape = 's32[1]{0}', space=sflag, size = 0x4, scoped, tag = 'scoped memory for tpu_custom_call.1']
    #allocation10 [shape = 'u8[16384]{0}', space=vmem, size = 0x4000, scoped, tag = 'input window, operand 4, single buffered']
    #allocation11 [shape = 'u8[65536]{0}', space=vmem, size = 0x10000, scoped, tag = 'output window, operand 0']
    %11 = vsyncpa [#allocation3], 0
    %s12 = scalar_lea.sflag [#allocation3], 1
    %13 = vsyncpa %s12, 0
    %14 = vsyncpa [#allocation6], 0
    %s15 = scalar_lea.sflag [#allocation6], 1
    %16 = vsyncpa %s15, 0
    %17 = vsyncpa [#allocation9], 0
    %18 = vsyncpa [#allocation4], 0
    %s19 = scalar_lea.sflag [#allocation4], 1
    %20 = vsyncpa %s19, 0
    loop: start=0, step=1, limit=6
    $region2: #{tpu_custom_call.1} parent=1 // loop_pre_header
      _
    $region3: #{tpu_custom_call.1} parent=1 // loop_header
      %s22 = sphi 0, %s26
      %p23 = scmp.ge.s32.totalorder %s22, 6
      %s29 = sphi 0, %s41
      %s30 = sphi 0, %s37
      %s31 = sphi 0, %s29
      %s32 = sphi 0, %s30
      %s33 = sphi 0, %s31
      %s34 = sphi 0, %s32
      %s46 = sphi 0, %s48
      %s49 = sphi 0, %s46
      %s50 = sphi 0, %s49
      %s66 = sphi 0, %s50
      %s72 = sphi 0, %s74
      %s75 = sphi 0, %s72
      %s76 = sphi 0, %s75
      %s92 = sphi 0, %s76
      %s98 = sphi 0, %s100
      %s101 = sphi 0, %s98
      %s102 = sphi 0, %s101
      %s118 = sphi 0, %s102
      %s122 = sphi 0, %s122
      %s124 = sphi 0, %s122
      %s125 = sphi 0, %s124
      %s139 = sphi 0, %s125
      %s143 = sphi 0, %s143
      %s145 = sphi 0, %s143
      %s146 = sphi 0, %s145
      %s160 = sphi 0, %s146
      %s164 = sphi 0, %s164
      %s166 = sphi 0, %s164
      %s167 = sphi 0, %s166
      %s181 = sphi 0, %s167
      %s189 = sphi 0, %s191
      %s192 = sphi 0, %s189
      %s193 = sphi 0, %s192
      %s209 = sphi 0, %s193
    $region4: #{tpu_custom_call.1} parent=1 // loop_header_branch
      %25 = sbr.rel (%p23) target = $region8
    $region5: #{tpu_custom_call.1} parent=1 // loop_body
      %s27 = ssub.s32 %s22, 1
      %s28 = ssub.s32 %s22, 2
      %s35 = sadd.s32 1, %s30
      %p36 = scmp.ge.s32.totalorder %s35, 2
      %s37 = scalar_select %p36, 0, %s35
      %s38 = sadd.s32 1, %s29
      %s39 = scalar_select %p36, %s38, %s29
      %p40 = scmp.ge.s32.totalorder %s39, 2
      %s41 = scalar_select %p40, 0, %s39
      %s42 = ssub.s32 %s29, %s41
      %s43 = ssub.s32 %s30, %s37
      %s44 = sor.u32 %s42, %s43
      %p45 = scmp.eq.s32.totalorder %s44, 0
      %s47 = sadd.s32 %s46, 1
      %s48 = scalar_select %p45, %s46, %s47
      %p51 = pneg %p45
      %p52 = scmp.eq.s32.totalorder %s22, 3
      %p53 = por %p51, %p52
      %p54 = scmp.ne.s32.totalorder %s46, %s49
      %p55 = scmp.eq.s32.totalorder %s22, 0
      %p56 = por %p54, %p55
      %p57 = scmp.ne.s32.totalorder %s46, %s49
      %p58 = scmp.eq.s32.totalorder %s27, 3
      %p59 = por %p57, %p58
      %p60 = scmp.ne.s32.totalorder %s49, %s50
      %p61 = scmp.eq.s32.totalorder %s27, 0
      %p62 = por %p60, %p61
      %p63 = scmp.ne.s32.totalorder %s49, %s50
      %p64 = scmp.eq.s32.totalorder %s28, 3
      %p65 = por %p63, %p64
      %p67 = scmp.ne.s32.totalorder %s50, %s66
      %p68 = scmp.eq.s32.totalorder %s28, 0
      %p69 = por %p67, %p68
      %s70 = ssub.s32 %s29, %s41
      %p71 = scmp.eq.s32.totalorder %s70, 0
      %s73 = sadd.s32 %s72, 1
      %s74 = scalar_select %p71, %s72, %s73
      %p77 = pneg %p71
      %p78 = scmp.eq.s32.totalorder %s22, 3
      %p79 = por %p77, %p78
      %p80 = scmp.ne.s32.totalorder %s72, %s75
      %p81 = scmp.eq.s32.totalorder %s22, 0
      %p82 = por %p80, %p81
      %p83 = scmp.ne.s32.totalorder %s72, %s75
      %p84 = scmp.eq.s32.totalorder %s27, 3
      %p85 = por %p83, %p84
      %p86 = scmp.ne.s32.totalorder %s75, %s76
      %p87 = scmp.eq.s32.totalorder %s27, 0
      %p88 = por %p86, %p87
      %p89 = scmp.ne.s32.totalorder %s75, %s76
      %p90 = scmp.eq.s32.totalorder %s28, 3
      %p91 = por %p89, %p90
      %p93 = scmp.ne.s32.totalorder %s76, %s92
      %p94 = scmp.eq.s32.totalorder %s28, 0
      %p95 = por %p93, %p94
      %s96 = ssub.s32 %s29, %s41
      %p97 = scmp.eq.s32.totalorder %s96, 0
      %s99 = sadd.s32 %s98, 1
      %s100 = scalar_select %p97, %s98, %s99
      %p103 = pneg %p97
      %p104 = scmp.eq.s32.totalorder %s22, 3
      %p105 = por %p103, %p104
      %p106 = scmp.ne.s32.totalorder %s98, %s101
      %p107 = scmp.eq.s32.totalorder %s22, 0
      %p108 = por %p106, %p107
      %p109 = scmp.ne.s32.totalorder %s98, %s101
      %p110 = scmp.eq.s32.totalorder %s27, 3
      %p111 = por %p109, %p110
      %p112 = scmp.ne.s32.totalorder %s101, %s102
      %p113 = scmp.eq.s32.totalorder %s27, 0
      %p114 = por %p112, %p113
      %p115 = scmp.ne.s32.totalorder %s101, %s102
      %p116 = scmp.eq.s32.totalorder %s28, 3
      %p117 = por %p115, %p116
      %p119 = scmp.ne.s32.totalorder %s102, %s118
      %p120 = scmp.eq.s32.totalorder %s28, 0
      %p121 = por %p119, %p120
      %s123 = sadd.s32 %s122, 1
      %p126 = scmp.eq.s32.totalorder %s22, 3
      %p127 = scmp.ne.s32.totalorder %s122, %s124
      %p128 = scmp.eq.s32.totalorder %s22, 0
      %p129 = por %p127, %p128
      %p130 = scmp.ne.s32.totalorder %s122, %s124
      %p131 = scmp.eq.s32.totalorder %s27, 3
      %p132 = por %p130, %p131
      %p133 = scmp.ne.s32.totalorder %s124, %s125
      %p134 = scmp.eq.s32.totalorder %s27, 0
      %p135 = por %p133, %p134
      %p136 = scmp.ne.s32.totalorder %s124, %s125
      %p137 = scmp.eq.s32.totalorder %s28, 3
      %p138 = por %p136, %p137
      %p140 = scmp.ne.s32.totalorder %s125, %s139
      %p141 = scmp.eq.s32.totalorder %s28, 0
      %p142 = por %p140, %p141
      %s144 = sadd.s32 %s143, 1
      %p147 = scmp.eq.s32.totalorder %s22, 3
      %p148 = scmp.ne.s32.totalorder %s143, %s145
      %p149 = scmp.eq.s32.totalorder %s22, 0
      %p150 = por %p148, %p149
      %p151 = scmp.ne.s32.totalorder %s143, %s145
      %p152 = scmp.eq.s32.totalorder %s27, 3
      %p153 = por %p151, %p152
      %p154 = scmp.ne.s32.totalorder %s145, %s146
      %p155 = scmp.eq.s32.totalorder %s27, 0
      %p156 = por %p154, %p155
      %p157 = scmp.ne.s32.totalorder %s145, %s146
      %p158 = scmp.eq.s32.totalorder %s28, 3
      %p159 = por %p157, %p158
      %p161 = scmp.ne.s32.totalorder %s146, %s160
      %p162 = scmp.eq.s32.totalorder %s28, 0
      %p163 = por %p161, %p162
      %s165 = sadd.s32 %s164, 1
      %p168 = scmp.eq.s32.totalorder %s22, 3
      %p169 = scmp.ne.s32.totalorder %s164, %s166
      %p170 = scmp.eq.s32.totalorder %s22, 0
      %p171 = por %p169, %p170
      %p172 = scmp.ne.s32.totalorder %s164, %s166
      %p173 = scmp.eq.s32.totalorder %s27, 3
      %p174 = por %p172, %p173
      %p175 = scmp.ne.s32.totalorder %s166, %s167
      %p176 = scmp.eq.s32.totalorder %s27, 0
      %p177 = por %p175, %p176
      %p178 = scmp.ne.s32.totalorder %s166, %s167
      %p179 = scmp.eq.s32.totalorder %s28, 3
      %p180 = por %p178, %p179
      %p182 = scmp.ne.s32.totalorder %s167, %s181
      %p183 = scmp.eq.s32.totalorder %s28, 0
      %p184 = por %p182, %p183
      %s185 = ssub.s32 %s29, %s41
      %s186 = ssub.s32 %s30, %s37
      %s187 = sor.u32 %s185, %s186
      %p188 = scmp.eq.s32.totalorder %s187, 0
      %s190 = sadd.s32 %s189, 1
      %s191 = scalar_select %p188, %s189, %s190
      %p194 = pneg %p188
      %p195 = scmp.eq.s32.totalorder %s22, 3
      %p196 = por %p194, %p195
      %p197 = scmp.ne.s32.totalorder %s189, %s192
      %p198 = scmp.eq.s32.totalorder %s22, 0
      %p199 = por %p197, %p198
      %p200 = scmp.ne.s32.totalorder %s189, %s192
      %p201 = scmp.eq.s32.totalorder %s27, 3
      %p202 = por %p200, %p201
      %p203 = scmp.ne.s32.totalorder %s192, %s193
      %p204 = scmp.eq.s32.totalorder %s27, 0
      %p205 = por %p203, %p204
      %p206 = scmp.ne.s32.totalorder %s192, %s193
      %p207 = scmp.eq.s32.totalorder %s28, 3
      %p208 = por %p206, %p207
      %p210 = scmp.ne.s32.totalorder %s193, %s209
      %p211 = scmp.eq.s32.totalorder %s28, 0
      %p212 = por %p210, %p211
      %p213 = scmp.le.s32.totalorder 1, %s22
      %p214 = scmp.lt.s32.totalorder %s22, 5
      %p215 = pnand %p213, %p214
      %p216 = pneg %p215
      // Predicated region
      $region9: #{tpu_custom_call.1} parent=5 // pred_check
        _
      $region10: #{tpu_custom_call.1} parent=5 // pred_check_branch
        %218 = sbr.rel (%p215) target = $region12
      $region11: #{tpu_custom_call.1} parent=5 // pred_region
        %s219 = ssub.s32 %s22, 1
        // Predicated region
        $region13: #{tpu_custom_call.1} parent=11 // pred_check
          %p220 = pneg %p135
        $region14: #{tpu_custom_call.1} parent=11 // pred_check_branch
          %222 = sbr.rel (%p220) target = $region16
        $region15: #{tpu_custom_call.1} parent=11 // pred_region
          %s224 = ssub.s32 1024, 1024
          %225 = vsyncadd [#allocation9], %s224
          %s226 = sshll.u32 [#allocation8], 4
          %s227 = int_to_ptr.vmem [resolvable:$true] %s226
          %232 = dma.hbm_to_vmem [thread:$0]  %s3, 1024, %s227, [#allocation9], 128, 128, 8
        $region16: #{tpu_custom_call.1} parent=11 // pred_fallthru
          _
        // Predicated region
        $region17: #{tpu_custom_call.1} parent=11 // pred_check
          %p233 = pneg %p156
        $region18: #{tpu_custom_call.1} parent=11 // pred_check_branch
          %235 = sbr.rel (%p233) target = $region20
        $region19: #{tpu_custom_call.1} parent=11 // pred_region
          %s237 = ssub.s32 512, 512
          %238 = vsyncadd [#allocation9], %s237
          %s239 = sshll.u32 [#allocation10], 4
          %s240 = int_to_ptr.vmem [resolvable:$true] %s239
          %245 = dma.hbm_to_vmem [thread:$0]  %s4, 512, %s240, [#allocation9], 64, 64, 4
        $region20: #{tpu_custom_call.1} parent=11 // pred_fallthru
          _
        // Predicated region
        $region21: #{tpu_custom_call.1} parent=11 // pred_check
          %p246 = pneg %p177
        $region22: #{tpu_custom_call.1} parent=11 // pred_check_branch
          %248 = sbr.rel (%p246) target = $region24
        $region23: #{tpu_custom_call.1} parent=11 // pred_region
          _
        $region24: #{tpu_custom_call.1} parent=11 // pred_fallthru
          _
      $region12: #{tpu_custom_call.1} parent=5 // pred_fallthru
        _
      %p249 = scmp.lt.s32.totalorder %s22, 4
      // Predicated region
      $region25: #{tpu_custom_call.1} parent=5 // pred_check
        %p250 = pneg %p249
      $region26: #{tpu_custom_call.1} parent=5 // pred_check_branch
        %252 = sbr.rel (%p250) target = $region28
      $region27: #{tpu_custom_call.1} parent=5 // pred_region
        // Predicated region
        $region29: #{tpu_custom_call.1} parent=27 // pred_check
          %p253 = pneg %p56
        $region30: #{tpu_custom_call.1} parent=27 // pred_check_branch
          %255 = sbr.rel (%p253) target = $region32
        $region31: #{tpu_custom_call.1} parent=27 // pred_region
          %s256 = sand.u32 %s46, 1
          %s257 = scalar_lea.sflag [#allocation3], %s256
          %s258 = sand.u32 %s46, 1
          %s259 = smul.addr %s258, 64
          %s260 = scalar_lea.vmem [#allocation2], %s259
          %s261 = smul.u32 8, %s30
          %s263 = ssub.s32 1024, 1024
          %264 = vsyncadd %s257, %s263
          %s265 = smul.addr %s29, 16
          %s266 = sadd.s32 %s261, %s265
          %s267 = smul.addr %s266, 128
          %s268 = scalar_lea.hbm %s0, %s267
          %s269 = sshll.u32 %s260, 4
          %s270 = int_to_ptr.vmem [resolvable:$true] %s269
          %275 = dma.hbm_to_vmem [thread:$0]  %s268, 1024, %s270, %s257, 128, 128, 8
        $region32: #{tpu_custom_call.1} parent=27 // pred_fallthru
          _
        // Predicated region
        $region33: #{tpu_custom_call.1} parent=27 // pred_check
          %p276 = pneg %p82
        $region34: #{tpu_custom_call.1} parent=27 // pred_check_branch
          %278 = sbr.rel (%p276) target = $region36
        $region35: #{tpu_custom_call.1} parent=27 // pred_region
          %s279 = sand.u32 %s22, 1
          %s280 = scalar_lea.sflag [#allocation6], %s279
          %s281 = sand.u32 %s72, 1
          %s282 = smul.addr %s281, 8
          %s283 = scalar_lea.vmem [#allocation5], %s282
          %s285 = ssub.s32 128, 128
          %286 = vsyncadd %s280, %s285
          %s287 = smul.addr %s29, 128
          %s288 = scalar_lea.hbm %s1, %s287
          %s290 = sshll.u32 %s283, 4
          %s291 = int_to_ptr.vmem [resolvable:$true] %s290
          %293 = dma.hbm_to_vmem [thread:$0]  %s288, 128, %s291, %s280
        $region36: #{tpu_custom_call.1} parent=27 // pred_fallthru
          _
        // Predicated region
        $region37: #{tpu_custom_call.1} parent=27 // pred_check
          %p294 = pneg %p108
        $region38: #{tpu_custom_call.1} parent=27 // pred_check_branch
          %296 = sbr.rel (%p294) target = $region40
        $region39: #{tpu_custom_call.1} parent=27 // pred_region
          %s297 = sand.u32 %s22, 1
          %s298 = scalar_lea.sflag [#allocation6], %s297
          %s299 = sand.u32 %s98, 1
          %s300 = smul.addr %s299, 8
          %s301 = scalar_lea.vmem [#allocation7], %s300
          %s303 = ssub.s32 128, 128
          %304 = vsyncadd %s298, %s303
          %s305 = smul.addr %s29, 128
          %s306 = scalar_lea.hbm %s2, %s305
          %s308 = sshll.u32 %s301, 4
          %s309 = int_to_ptr.vmem [resolvable:$true] %s308
          %311 = dma.hbm_to_vmem [thread:$0]  %s306, 128, %s309, %s298
        $region40: #{tpu_custom_call.1} parent=27 // pred_fallthru
          _
      $region28: #{tpu_custom_call.1} parent=5 // pred_fallthru
        _
      %p312 = scmp.le.s32.totalorder 1, %s22
      %p313 = scmp.lt.s32.totalorder %s22, 5
      %p314 = pnand %p312, %p313
      %p315 = pneg %p314
      // Predicated region
      $region41: #{tpu_custom_call.1} parent=5 // pred_check
        _
      $region42: #{tpu_custom_call.1} parent=5 // pred_check_branch
        %317 = sbr.rel (%p314) target = $region44
      $region43: #{tpu_custom_call.1} parent=5 // pred_region
        %s318 = ssub.s32 %s22, 1
        %s319 = sand.u32 %s49, 1
        %s320 = scalar_lea.sflag [#allocation3], %s319
        %s321 = sand.u32 %s49, 1
        %s322 = smul.addr %s321, 64
        %s323 = scalar_lea.vmem [#allocation2], %s322
        // Predicated region
        $region45: #{tpu_custom_call.1} parent=43 // pred_check
          %p324 = pneg %p62
        $region46: #{tpu_custom_call.1} parent=43 // pred_check_branch
          %326 = sbr.rel (%p324) target = $region48
        $region47: #{tpu_custom_call.1} parent=43 // pred_region
          %327 = dma.done %s320, 1024
        $region48: #{tpu_custom_call.1} parent=43 // pred_fallthru
          _
        %s328 = sand.u32 %s27, 1
        %s329 = scalar_lea.sflag [#allocation6], %s328
        %s330 = sand.u32 %s75, 1
        %s331 = smul.addr %s330, 8
        %s332 = scalar_lea.vmem [#allocation5], %s331
        // Predicated region
        $region49: #{tpu_custom_call.1} parent=43 // pred_check
          %p333 = pneg %p88
        $region50: #{tpu_custom_call.1} parent=43 // pred_check_branch
          %335 = sbr.rel (%p333) target = $region52
        $region51: #{tpu_custom_call.1} parent=43 // pred_region
          %336 = dma.done %s329, 128
        $region52: #{tpu_custom_call.1} parent=43 // pred_fallthru
          _
        %s337 = sand.u32 %s27, 1
        %s338 = scalar_lea.sflag [#allocation6], %s337
        %s339 = sand.u32 %s101, 1
        %s340 = smul.addr %s339, 8
        %s341 = scalar_lea.vmem [#allocation7], %s340
        // Predicated region
        $region53: #{tpu_custom_call.1} parent=43 // pred_check
          %p342 = pneg %p114
        $region54: #{tpu_custom_call.1} parent=43 // pred_check_branch
          %344 = sbr.rel (%p342) target = $region56
        $region55: #{tpu_custom_call.1} parent=43 // pred_region
          %345 = dma.done %s338, 128
        $region56: #{tpu_custom_call.1} parent=43 // pred_fallthru
          _
        // Predicated region
        $region57: #{tpu_custom_call.1} parent=43 // pred_check
          %p346 = pneg %p135
        $region58: #{tpu_custom_call.1} parent=43 // pred_check_branch
          %348 = sbr.rel (%p346) target = $region60
        $region59: #{tpu_custom_call.1} parent=43 // pred_region
          %349 = dma.done [#allocation9], 1024
        $region60: #{tpu_custom_call.1} parent=43 // pred_fallthru
          _
        // Predicated region
        $region61: #{tpu_custom_call.1} parent=43 // pred_check
          %p350 = pneg %p156
        $region62: #{tpu_custom_call.1} parent=43 // pred_check_branch
          %352 = sbr.rel (%p350) target = $region64
        $region63: #{tpu_custom_call.1} parent=43 // pred_region
          %353 = dma.done [#allocation9], 512
        $region64: #{tpu_custom_call.1} parent=43 // pred_fallthru
          _
        %s354 = sand.u32 %s49, 1
        %s355 = scalar_lea.sflag [#allocation3], %s354
        %s356 = sand.u32 %s49, 1
        %s357 = smul.addr %s356, 64
        %s358 = scalar_lea.vmem [#allocation2], %s357
        %p359 = pneg %p62
        %p360 = pneg %p59
        %s361 = sand.u32 %s27, 1
        %s362 = scalar_lea.sflag [#allocation6], %s361
        %s363 = sand.u32 %s75, 1
        %s364 = smul.addr %s363, 8
        %s365 = scalar_lea.vmem [#allocation5], %s364
        %p366 = pneg %p88
        %p367 = pneg %p85
        %s368 = sand.u32 %s27, 1
        %s369 = scalar_lea.sflag [#allocation6], %s368
        %s370 = sand.u32 %s101, 1
        %s371 = smul.addr %s370, 8
        %s372 = scalar_lea.vmem [#allocation7], %s371
        %p373 = pneg %p114
        %p374 = pneg %p111
        %p375 = pneg %p135
        %p376 = pneg %p132
        %p377 = pneg %p156
        %p378 = pneg %p153
        %p379 = pneg %p177
        %p380 = pneg %p174
        %p381 = pneg %p205
        %p382 = pneg %p202
        %s383 = sand.u32 %s192, 1
        %s384 = scalar_lea.sflag [#allocation4], %s383
        %s385 = sand.u32 %s192, 1
        %s386 = smul.addr %s385, 64
        %s387 = scalar_lea.vmem [#allocation11], %s386
        %s388 = smul.u32 8, %s32
        %s389 = smul.u32 8, %s32
        %v391 = vld [vmem:[%s323] sm:$0xff]
        %v392 = vld [vmem:[%s323 + $0x8] sm:$0xff]
        %v393 = vld [vmem:[%s323 + $0x10] sm:$0xff]
        %v394 = vld [vmem:[%s323 + $0x18] sm:$0xff]
        %v395 = vld [vmem:[%s323 + $0x20] sm:$0xff]
        %v396 = vld [vmem:[%s323 + $0x28] sm:$0xff]
        %v397 = vld [vmem:[%s323 + $0x30] sm:$0xff]
        %v398 = vld [vmem:[%s323 + $0x38] sm:$0xff]
        %v399 = vld [vmem:[%s332] sm:$0xff]
        %v400 = vmul.f32 %v391, %v399
        %v401 = vmul.f32 %v392, %v399
        %v402 = vmul.f32 %v393, %v399
        %v403 = vmul.f32 %v394, %v399
        %v404 = vmul.f32 %v395, %v399
        %v405 = vmul.f32 %v396, %v399
        %v406 = vmul.f32 %v397, %v399
        %v407 = vmul.f32 %v398, %v399
        %v408 = vld [vmem:[%s341] sm:$0xff]
        %v409 = vadd.f32 %v400, %v408
        %v410 = vadd.f32 %v401, %v408
        %v411 = vadd.f32 %v402, %v408
        %v412 = vadd.f32 %v403, %v408
        %v413 = vadd.f32 %v404, %v408
        %v414 = vadd.f32 %v405, %v408
        %v415 = vadd.f32 %v406, %v408
        %v416 = vadd.f32 %v407, %v408
        %v417 = vpack.c.bf16 %v410, %v409
        %v418 = vpack.c.bf16 %v412, %v411
        %v419 = vpack.c.bf16 %v414, %v413
        %v420 = vpack.c.bf16 %v416, %v415
        %v421 = vld [vmem:[#allocation8] sm:$0xff]
        %v422 = vld [vmem:[#allocation8 + $0x8] sm:$0xff]
        %v423 = vld [vmem:[#allocation8 + $0x10] sm:$0xff]
        %v424 = vld [vmem:[#allocation8 + $0x18] sm:$0xff]
        %v425 = vld [vmem:[#allocation8 + $0x20] sm:$0xff]
        %v426 = vld [vmem:[#allocation8 + $0x28] sm:$0xff]
        %v427 = vld [vmem:[#allocation8 + $0x30] sm:$0xff]
        %v428 = vld [vmem:[#allocation8 + $0x38] sm:$0xff]
        %v437 = vunpack.c.l.b16 %v421
        %v438 = vunpack.c.h.b16 %v421
        %v439 = vunpack.c.l.b16 %v422
        %v440 = vunpack.c.h.b16 %v422
        %v441 = vunpack.c.l.b16 %v423
        %v442 = vunpack.c.h.b16 %v423
        %v443 = vunpack.c.l.b16 %v424
        %v444 = vunpack.c.h.b16 %v424
        %v445 = vunpack.c.l.b16 %v425
        %v446 = vunpack.c.h.b16 %v425
        %v447 = vunpack.c.l.b16 %v426
        %v448 = vunpack.c.h.b16 %v426
        %v449 = vunpack.c.l.b16 %v427
        %v450 = vunpack.c.h.b16 %v427
        %v451 = vunpack.c.l.b16 %v428
        %v452 = vunpack.c.h.b16 %v428
        %v453 = vpack.c.b16 %v439, %v437
        %v454 = vpack.c.b16 %v440, %v438
        %v455 = vpack.c.b16 %v443, %v441
        %v456 = vpack.c.b16 %v444, %v442
        %v457 = vpack.c.b16 %v447, %v445
        %v458 = vpack.c.b16 %v448, %v446
        %v459 = vpack.c.b16 %v451, %v449
        %v460 = vpack.c.b16 %v452, %v450
        %vm469 = vcmask 523264
        %v471 = vsel %vm469, %v417, 0
        %v474 = vsel %vm469, %v418, 0
        %v477 = vsel %vm469, %v419, 0
        %v480 = vsel %vm469, %v420, 0
        %482 = vmatprep.subr.bf16.mxu0 0
        %483 = vmatpush1.bf16.msra.mxu0 0
        %484 = vmatprep.subr.bf16.mxu0 0
        %485 = vmatpush1.bf16.msra.mxu0 0
        %486 = vmatprep.subr.bf16.mxu0 0
        %487 = vmatpush1.bf16.msra.mxu0 0
        %488 = vmatprep.subr.bf16.mxu0 0
        %489 = vmatpush1.bf16.msra.mxu0 0
        %490 = vmatprep.subr.bf16.mxu0 %v460
        %491 = vmatpush1.bf16.msra.mxu0 %v459
        %492 = vmatprep.subr.bf16.mxu0 %v458
        %493 = vmatpush1.bf16.msra.mxu0 %v457
        %494 = vmatprep.subr.bf16.mxu0 %v456
        %495 = vmatpush1.bf16.msra.mxu0 %v455
        %496 = vmatprep.subr.bf16.mxu0 %v454
        %497 = vmatpush1.bf16.msra.mxu0 %v453
        %498 = vmatprep.subr.bf16.mxu0 0
        %499 = vmatpush2.bf16.msra.mxu0 0
        %500 = vmatprep.subr.bf16.mxu0 0
        %501 = vmatpush2.bf16.msra.mxu0 0
        %502 = vmatprep.subr.bf16.mxu0 0
        %503 = vmatpush2.bf16.msra.mxu0 0
        %504 = vmatprep.subr.bf16.mxu0 0
        %505 = vmatpush2.bf16.msra.mxu0 0
        %506 = vmatprep.subr.bf16.mxu0 0
        %507 = vmatpush2.bf16.msra.mxu0 0
        %508 = vmatprep.subr.bf16.mxu0 0
        %509 = vmatpush2.bf16.msra.mxu0 0
        %510 = vmatprep.subr.bf16.mxu0 0
        %511 = vmatpush2.bf16.msra.mxu0 0
        %512 = vmatprep.subr.bf16.mxu0 0
        %513 = vmatpush2.bf16.msra.mxu0 0
        %514 = vmatprep.mubr.bf16.mxu0 0
        %515 = vmatmul.mubr.bf16.gmra.mxu0 %v471
        %v516 = vpop.f32.mrf.mxu0
        %v517 = vadd.f32 0.0, %v516
        %v518 = vpop.f32.mrf.mxu0
        %v519 = vadd.f32 0.0, %v518
        %v520 = vpop.f32.mrf.mxu0
        %v521 = vadd.f32 0.0, %v520
        %v522 = vpop.f32.mrf.mxu0
        %v523 = vadd.f32 0.0, %v522
        %524 = vmatprep.mubr.bf16.mxu0 0
        %525 = vmatmul.mubr.bf16.gmra.mxu0 %v474
        %v526 = vpop.f32.mrf.mxu0
        %v527 = vadd.f32 0.0, %v526
        %v528 = vpop.f32.mrf.mxu0
        %v529 = vadd.f32 0.0, %v528
        %v530 = vpop.f32.mrf.mxu0
        %v531 = vadd.f32 0.0, %v530
        %v532 = vpop.f32.mrf.mxu0
        %v533 = vadd.f32 0.0, %v532
        %534 = vmatprep.mubr.bf16.mxu0 0
        %535 = vmatmul.mubr.bf16.gmra.mxu0 %v477
        %v536 = vpop.f32.mrf.mxu0
        %v537 = vadd.f32 0.0, %v536
        %v538 = vpop.f32.mrf.mxu0
        %v539 = vadd.f32 0.0, %v538
        %v540 = vpop.f32.mrf.mxu0
        %v541 = vadd.f32 0.0, %v540
        %v542 = vpop.f32.mrf.mxu0
        %v543 = vadd.f32 0.0, %v542
        %544 = vmatprep.mubr.bf16.mxu0 0
        %545 = vmatmul.mubr.bf16.gmra.mxu0 %v480
        %v546 = vpop.f32.mrf.mxu0
        %v547 = vadd.f32 0.0, %v546
        %v548 = vpop.f32.mrf.mxu0
        %v549 = vadd.f32 0.0, %v548
        %v550 = vpop.f32.mrf.mxu0
        %v551 = vadd.f32 0.0, %v550
        %v552 = vpop.f32.mrf.mxu0
        %v553 = vadd.f32 0.0, %v552
        %554 = vdwg.mxu0
        %v555 = vpack.c.bf16 %v521, %v517
        %v556 = vpack.c.bf16 %v523, %v519
        %v557 = vpack.c.bf16 %v531, %v527
        %v558 = vpack.c.bf16 %v533, %v529
        %v559 = vpack.c.bf16 %v541, %v537
        %v560 = vpack.c.bf16 %v543, %v539
        %v561 = vpack.c.bf16 %v551, %v547
        %v562 = vpack.c.bf16 %v553, %v549
        %v567 = vunpack.c.l.b16 %v555
        %v568 = vunpack.c.h.b16 %v555
        %v569 = vunpack.c.l.b16 %v557
        %v570 = vunpack.c.h.b16 %v557
        %v571 = vunpack.c.l.b16 %v559
        %v572 = vunpack.c.h.b16 %v559
        %v573 = vunpack.c.l.b16 %v561
        %v574 = vunpack.c.h.b16 %v561
        %v575 = vpack.c.b16 %v567, %v567
        %v576 = vpack.c.b16 %v568, %v568
        %v577 = vpack.c.b16 %v569, %v569
        %v578 = vpack.c.b16 %v570, %v570
        %v579 = vpack.c.b16 %v571, %v571
        %v580 = vpack.c.b16 %v572, %v572
        %v581 = vpack.c.b16 %v573, %v573
        %v582 = vpack.c.b16 %v574, %v574
        %v595 = vunpack.c.l.b16 %v556
        %v596 = vunpack.c.h.b16 %v556
        %v597 = vunpack.c.l.b16 %v558
        %v598 = vunpack.c.h.b16 %v558
        %v599 = vunpack.c.l.b16 %v560
        %v600 = vunpack.c.h.b16 %v560
        %v601 = vunpack.c.l.b16 %v562
        %v602 = vunpack.c.h.b16 %v562
        %v603 = vpack.c.b16 %v595, %v567
        %v604 = vpack.c.b16 %v596, %v568
        %v605 = vpack.c.b16 %v597, %v569
        %v606 = vpack.c.b16 %v598, %v570
        %v607 = vpack.c.b16 %v599, %v571
        %v608 = vpack.c.b16 %v600, %v572
        %v609 = vpack.c.b16 %v601, %v573
        %v610 = vpack.c.b16 %v602, %v574
        %611 = vrot.lane.b32.xlu0 %v603, 32
        %v612 = vpop.permute.xlu0 %611
        %613 = vrot.lane.b32.xlu0 %v604, 32
        %v614 = vpop.permute.xlu0 %613
        %615 = vrot.lane.b32.xlu0 %v605, 32
        %v616 = vpop.permute.xlu0 %615
        %617 = vrot.lane.b32.xlu0 %v606, 32
        %v618 = vpop.permute.xlu0 %617
        %619 = vrot.lane.b32.xlu0 %v607, 32
        %v620 = vpop.permute.xlu0 %619
        %621 = vrot.lane.b32.xlu0 %v608, 32
        %v622 = vpop.permute.xlu0 %621
        %623 = vrot.lane.b32.xlu0 %v609, 32
        %v624 = vpop.permute.xlu0 %623
        %625 = vrot.lane.b32.xlu0 %v610, 32
        %v626 = vpop.permute.xlu0 %625
        %v627 = vrot.slane %v612, 4
        %v628 = vrot.slane %v614, 4
        %v629 = vrot.slane %v616, 4
        %v630 = vrot.slane %v618, 4
        %v631 = vrot.slane %v620, 4
        %v632 = vrot.slane %v622, 4
        %v633 = vrot.slane %v624, 4
        %v634 = vrot.slane %v626, 4
        %vm635 = vcmask 261120
        %v636 = vsel %vm635, %v612, %v627
        %v637 = vsel %vm635, %v614, %v628
        %v638 = vsel %vm635, %v616, %v629
        %v639 = vsel %vm635, %v618, %v630
        %v640 = vsel %vm635, %v620, %v631
        %v641 = vsel %vm635, %v622, %v632
        %v642 = vsel %vm635, %v624, %v633
        %v643 = vsel %vm635, %v626, %v634
        %v652 = vunpack.c.l.bf16 %v575
        %v653 = vunpack.c.l.bf16 %v576
        %v654 = vunpack.c.l.bf16 %v577
        %v655 = vunpack.c.l.bf16 %v578
        %v656 = vunpack.c.l.bf16 %v579
        %v657 = vunpack.c.l.bf16 %v580
        %v658 = vunpack.c.l.bf16 %v581
        %v659 = vunpack.c.l.bf16 %v582
        %v660 = vunpack.c.l.bf16 %v636
        %v661 = vunpack.c.l.bf16 %v637
        %v662 = vunpack.c.l.bf16 %v638
        %v663 = vunpack.c.l.bf16 %v639
        %v664 = vunpack.c.l.bf16 %v640
        %v665 = vunpack.c.l.bf16 %v641
        %v666 = vunpack.c.l.bf16 %v642
        %v667 = vunpack.c.l.bf16 %v643
        %v668 = vmul.f32 %v652, %v652
        %v669 = vmul.f32 %v653, %v653
        %v670 = vmul.f32 %v654, %v654
        %v671 = vmul.f32 %v655, %v655
        %v672 = vmul.f32 %v656, %v656
        %v673 = vmul.f32 %v657, %v657
        %v674 = vmul.f32 %v658, %v658
        %v675 = vmul.f32 %v659, %v659
        %v676 = vmul.f32 %v660, %v660
        %v677 = vmul.f32 %v661, %v661
        %v678 = vmul.f32 %v662, %v662
        %v679 = vmul.f32 %v663, %v663
        %v680 = vmul.f32 %v664, %v664
        %v681 = vmul.f32 %v665, %v665
        %v682 = vmul.f32 %v666, %v666
        %v683 = vmul.f32 %v667, %v667
        %vm684 = vcmask 261120
        %v685 = vsel %vm684, %v668, 0.0
        %686 = vadd.xlane.f32.xlu0 %v685
        %v687 = vpop.xlane.xlu0 %686
        %v688 = vsel %vm684, %v669, 0.0
        %689 = vadd.xlane.f32.xlu0 %v688
        %v690 = vpop.xlane.xlu0 %689
        %v691 = vsel %vm684, %v670, 0.0
        %692 = vadd.xlane.f32.xlu0 %v691
        %v693 = vpop.xlane.xlu0 %692
        %v694 = vsel %vm684, %v671, 0.0
        %695 = vadd.xlane.f32.xlu0 %v694
        %v696 = vpop.xlane.xlu0 %695
        %v697 = vsel %vm684, %v672, 0.0
        %698 = vadd.xlane.f32.xlu0 %v697
        %v699 = vpop.xlane.xlu0 %698
        %v700 = vsel %vm684, %v673, 0.0
        %701 = vadd.xlane.f32.xlu0 %v700
        %v702 = vpop.xlane.xlu0 %701
        %v703 = vsel %vm684, %v674, 0.0
        %704 = vadd.xlane.f32.xlu0 %v703
        %v705 = vpop.xlane.xlu0 %704
        %v706 = vsel %vm684, %v675, 0.0
        %707 = vadd.xlane.f32.xlu0 %v706
        %v708 = vpop.xlane.xlu0 %707
        %v709 = vsel %vm684, %v676, 0.0
        %710 = vadd.xlane.f32.xlu0 %v709
        %v711 = vpop.xlane.xlu0 %710
        %v712 = vsel %vm684, %v677, 0.0
        %713 = vadd.xlane.f32.xlu0 %v712
        %v714 = vpop.xlane.xlu0 %713
        %v715 = vsel %vm684, %v678, 0.0
        %716 = vadd.xlane.f32.xlu0 %v715
        %v717 = vpop.xlane.xlu0 %716
        %v718 = vsel %vm684, %v679, 0.0
        %719 = vadd.xlane.f32.xlu0 %v718
        %v720 = vpop.xlane.xlu0 %719
        %v721 = vsel %vm684, %v680, 0.0
        %722 = vadd.xlane.f32.xlu0 %v721
        %v723 = vpop.xlane.xlu0 %722
        %v724 = vsel %vm684, %v681, 0.0
        %725 = vadd.xlane.f32.xlu0 %v724
        %v726 = vpop.xlane.xlu0 %725
        %v727 = vsel %vm684, %v682, 0.0
        %728 = vadd.xlane.f32.xlu0 %v727
        %v729 = vpop.xlane.xlu0 %728
        %v730 = vsel %vm684, %v683, 0.0
        %731 = vadd.xlane.f32.xlu0 %v730
        %v732 = vpop.xlane.xlu0 %731
        %v733 = vmax.f32 %v687, 1e-24
        %v734 = vmax.f32 %v690, 1e-24
        %v735 = vmax.f32 %v693, 1e-24
        %v736 = vmax.f32 %v696, 1e-24
        %v737 = vmax.f32 %v699, 1e-24
        %v738 = vmax.f32 %v702, 1e-24
        %v739 = vmax.f32 %v705, 1e-24
        %v740 = vmax.f32 %v708, 1e-24
        %v741 = vmax.f32 %v711, 1e-24
        %v742 = vmax.f32 %v714, 1e-24
        %v743 = vmax.f32 %v717, 1e-24
        %v744 = vmax.f32 %v720, 1e-24
        %v745 = vmax.f32 %v723, 1e-24
        %v746 = vmax.f32 %v726, 1e-24
        %v747 = vmax.f32 %v729, 1e-24
        %v748 = vmax.f32 %v732, 1e-24
        %v749 = vrsqrt.pop %v733
        %v750 = vrsqrt.pop %v734
        %v751 = vrsqrt.pop %v735
        %v752 = vrsqrt.pop %v736
        %v753 = vrsqrt.pop %v737
        %v754 = vrsqrt.pop %v738
        %v755 = vrsqrt.pop %v739
        %v756 = vrsqrt.pop %v740
        %v757 = vrsqrt.pop %v741
        %v758 = vrsqrt.pop %v742
        %v759 = vrsqrt.pop %v743
        %v760 = vrsqrt.pop %v744
        %v761 = vrsqrt.pop %v745
        %v762 = vrsqrt.pop %v746
        %v763 = vrsqrt.pop %v747
        %v764 = vrsqrt.pop %v748
        %v765 = vmul.f32 %v749, 0.17677669
        %v766 = vmul.f32 %v750, 0.17677669
        %v767 = vmul.f32 %v751, 0.17677669
        %v768 = vmul.f32 %v752, 0.17677669
        %v769 = vmul.f32 %v753, 0.17677669
        %v770 = vmul.f32 %v754, 0.17677669
        %v771 = vmul.f32 %v755, 0.17677669
        %v772 = vmul.f32 %v756, 0.17677669
        %v773 = vmul.f32 %v757, 0.17677669
        %v774 = vmul.f32 %v758, 0.17677669
        %v775 = vmul.f32 %v759, 0.17677669
        %v776 = vmul.f32 %v760, 0.17677669
        %v777 = vmul.f32 %v761, 0.17677669
        %v778 = vmul.f32 %v762, 0.17677669
        %v779 = vmul.f32 %v763, 0.17677669
        %v780 = vmul.f32 %v764, 0.17677669
        %v781 = vmul.f32 %v652, %v765
        %v782 = vmul.f32 %v653, %v766
        %v783 = vmul.f32 %v654, %v767
        %v784 = vmul.f32 %v655, %v768
        %v785 = vmul.f32 %v656, %v769
        %v786 = vmul.f32 %v657, %v770
        %v787 = vmul.f32 %v658, %v771
        %v788 = vmul.f32 %v659, %v772
        %v789 = vmul.f32 %v660, %v773
        %v790 = vmul.f32 %v661, %v774
        %v791 = vmul.f32 %v662, %v775
        %v792 = vmul.f32 %v663, %v776
        %v793 = vmul.f32 %v664, %v777
        %v794 = vmul.f32 %v665, %v778
        %v795 = vmul.f32 %v666, %v779
        %v796 = vmul.f32 %v667, %v780
        %v797 = vpack.c.bf16 %v781, %v781
        %v798 = vpack.c.bf16 %v782, %v782
        %v799 = vpack.c.bf16 %v783, %v783
        %v800 = vpack.c.bf16 %v784, %v784
        %v801 = vpack.c.bf16 %v785, %v785
        %v802 = vpack.c.bf16 %v786, %v786
        %v803 = vpack.c.bf16 %v787, %v787
        %v804 = vpack.c.bf16 %v788, %v788
        %v805 = vpack.c.bf16 %v789, %v789
        %v806 = vpack.c.bf16 %v790, %v790
        %v807 = vpack.c.bf16 %v791, %v791
        %v808 = vpack.c.bf16 %v792, %v792
        %v809 = vpack.c.bf16 %v793, %v793
        %v810 = vpack.c.bf16 %v794, %v794
        %v811 = vpack.c.bf16 %v795, %v795
        %v812 = vpack.c.bf16 %v796, %v796
        %829 = vrot.lane.b32.xlu0 %v668, 96
        %v830 = vpop.permute.xlu0 %829
        %831 = vrot.lane.b32.xlu0 %v669, 96
        %v832 = vpop.permute.xlu0 %831
        %833 = vrot.lane.b32.xlu0 %v670, 96
        %v834 = vpop.permute.xlu0 %833
        %835 = vrot.lane.b32.xlu0 %v671, 96
        %v836 = vpop.permute.xlu0 %835
        %837 = vrot.lane.b32.xlu0 %v672, 96
        %v838 = vpop.permute.xlu0 %837
        %839 = vrot.lane.b32.xlu0 %v673, 96
        %v840 = vpop.permute.xlu0 %839
        %841 = vrot.lane.b32.xlu0 %v674, 96
        %v842 = vpop.permute.xlu0 %841
        %843 = vrot.lane.b32.xlu0 %v675, 96
        %v844 = vpop.permute.xlu0 %843
        %845 = vrot.lane.b32.xlu0 %v676, 96
        %v846 = vpop.permute.xlu0 %845
        %847 = vrot.lane.b32.xlu0 %v677, 96
        %v848 = vpop.permute.xlu0 %847
        %849 = vrot.lane.b32.xlu0 %v678, 96
        %v850 = vpop.permute.xlu0 %849
        %851 = vrot.lane.b32.xlu0 %v679, 96
        %v852 = vpop.permute.xlu0 %851
        %853 = vrot.lane.b32.xlu0 %v680, 96
        %v854 = vpop.permute.xlu0 %853
        %855 = vrot.lane.b32.xlu0 %v681, 96
        %v856 = vpop.permute.xlu0 %855
        %857 = vrot.lane.b32.xlu0 %v682, 96
        %v858 = vpop.permute.xlu0 %857
        %859 = vrot.lane.b32.xlu0 %v683, 96
        %v860 = vpop.permute.xlu0 %859
        %v877 = vsel %vm684, %v830, 0.0
        %878 = vadd.xlane.f32.xlu0 %v877
        %v879 = vpop.xlane.xlu0 %878
        %v880 = vsel %vm684, %v832, 0.0
        %881 = vadd.xlane.f32.xlu0 %v880
        %v882 = vpop.xlane.xlu0 %881
        %v883 = vsel %vm684, %v834, 0.0
        %884 = vadd.xlane.f32.xlu0 %v883
        %v885 = vpop.xlane.xlu0 %884
        %v886 = vsel %vm684, %v836, 0.0
        %887 = vadd.xlane.f32.xlu0 %v886
        %v888 = vpop.xlane.xlu0 %887
        %v889 = vsel %vm684, %v838, 0.0
        %890 = vadd.xlane.f32.xlu0 %v889
        %v891 = vpop.xlane.xlu0 %890
        %v892 = vsel %vm684, %v840, 0.0
        %893 = vadd.xlane.f32.xlu0 %v892
        %v894 = vpop.xlane.xlu0 %893
        %v895 = vsel %vm684, %v842, 0.0
        %896 = vadd.xlane.f32.xlu0 %v895
        %v897 = vpop.xlane.xlu0 %896
        %v898 = vsel %vm684, %v844, 0.0
        %899 = vadd.xlane.f32.xlu0 %v898
        %v900 = vpop.xlane.xlu0 %899
        %v901 = vsel %vm684, %v846, 0.0
        %902 = vadd.xlane.f32.xlu0 %v901
        %v903 = vpop.xlane.xlu0 %902
        %v904 = vsel %vm684, %v848, 0.0
        %905 = vadd.xlane.f32.xlu0 %v904
        %v906 = vpop.xlane.xlu0 %905
        %v907 = vsel %vm684, %v850, 0.0
        %908 = vadd.xlane.f32.xlu0 %v907
        %v909 = vpop.xlane.xlu0 %908
        %v910 = vsel %vm684, %v852, 0.0
        %911 = vadd.xlane.f32.xlu0 %v910
        %v912 = vpop.xlane.xlu0 %911
        %v913 = vsel %vm684, %v854, 0.0
        %914 = vadd.xlane.f32.xlu0 %v913
        %v915 = vpop.xlane.xlu0 %914
        %v916 = vsel %vm684, %v856, 0.0
        %917 = vadd.xlane.f32.xlu0 %v916
        %v918 = vpop.xlane.xlu0 %917
        %v919 = vsel %vm684, %v858, 0.0
        %920 = vadd.xlane.f32.xlu0 %v919
        %v921 = vpop.xlane.xlu0 %920
        %v922 = vsel %vm684, %v860, 0.0
        %923 = vadd.xlane.f32.xlu0 %v922
        %v924 = vpop.xlane.xlu0 %923
        %v925 = vmax.f32 %v879, 1e-24
        %v926 = vmax.f32 %v882, 1e-24
        %v927 = vmax.f32 %v885, 1e-24
        %v928 = vmax.f32 %v888, 1e-24
        %v929 = vmax.f32 %v891, 1e-24
        %v930 = vmax.f32 %v894, 1e-24
        %v931 = vmax.f32 %v897, 1e-24
        %v932 = vmax.f32 %v900, 1e-24
        %v933 = vmax.f32 %v903, 1e-24
        %v934 = vmax.f32 %v906, 1e-24
        %v935 = vmax.f32 %v909, 1e-24
        %v936 = vmax.f32 %v912, 1e-24
        %v937 = vmax.f32 %v915, 1e-24
        %v938 = vmax.f32 %v918, 1e-24
        %v939 = vmax.f32 %v921, 1e-24
        %v940 = vmax.f32 %v924, 1e-24
        %v941 = vrsqrt.pop %v925
        %v942 = vrsqrt.pop %v926
        %v943 = vrsqrt.pop %v927
        %v944 = vrsqrt.pop %v928
        %v945 = vrsqrt.pop %v929
        %v946 = vrsqrt.pop %v930
        %v947 = vrsqrt.pop %v931
        %v948 = vrsqrt.pop %v932
        %v949 = vrsqrt.pop %v933
        %v950 = vrsqrt.pop %v934
        %v951 = vrsqrt.pop %v935
        %v952 = vrsqrt.pop %v936
        %v953 = vrsqrt.pop %v937
        %v954 = vrsqrt.pop %v938
        %v955 = vrsqrt.pop %v939
        %v956 = vrsqrt.pop %v940
        %v957 = vmul.f32 %v652, %v941
        %v958 = vmul.f32 %v653, %v942
        %v959 = vmul.f32 %v654, %v943
        %v960 = vmul.f32 %v655, %v944
        %v961 = vmul.f32 %v656, %v945
        %v962 = vmul.f32 %v657, %v946
        %v963 = vmul.f32 %v658, %v947
        %v964 = vmul.f32 %v659, %v948
        %v965 = vmul.f32 %v660, %v949
        %v966 = vmul.f32 %v661, %v950
        %v967 = vmul.f32 %v662, %v951
        %v968 = vmul.f32 %v663, %v952
        %v969 = vmul.f32 %v664, %v953
        %v970 = vmul.f32 %v665, %v954
        %v971 = vmul.f32 %v666, %v955
        %v972 = vmul.f32 %v667, %v956
        %v973 = vpack.c.bf16 %v957, %v957
        %v974 = vpack.c.bf16 %v958, %v958
        %v975 = vpack.c.bf16 %v959, %v959
        %v976 = vpack.c.bf16 %v960, %v960
        %v977 = vpack.c.bf16 %v961, %v961
        %v978 = vpack.c.bf16 %v962, %v962
        %v979 = vpack.c.bf16 %v963, %v963
        %v980 = vpack.c.bf16 %v964, %v964
        %v981 = vpack.c.bf16 %v965, %v965
        %v982 = vpack.c.bf16 %v966, %v966
        %v983 = vpack.c.bf16 %v967, %v967
        %v984 = vpack.c.bf16 %v968, %v968
        %v985 = vpack.c.bf16 %v969, %v969
        %v986 = vpack.c.bf16 %v970, %v970
        %v987 = vpack.c.bf16 %v971, %v971
        %v988 = vpack.c.bf16 %v972, %v972
        %v989 = vlaneseq
        %v990 = vshrl.u32 %v989, 7
        %v991 = vlaneseq
        %v992 = vand.u32 %v991, 127
        %994 = vrot.lane.b32.xlu0 %v973, 96
        %v995 = vpop.permute.xlu0 %994
        %v997 = vsel %vm684, %v797, 0
        %v1000 = vsel %vm684, %v995, 0
        %1002 = vmatprep.subr.bf16.mxu0 0
        %1003 = vmatpush1.bf16.xpose.msra.mxu0 0
        %1004 = vmatprep.subr.bf16.mxu0 0
        %1005 = vmatpush1.bf16.xpose.msra.mxu0 0
        %1006 = vmatprep.subr.bf16.mxu0 0
        %1007 = vmatpush1.bf16.xpose.msra.mxu0 0
        %1008 = vmatprep.subr.bf16.mxu0 0
        %1009 = vmatpush1.bf16.xpose.msra.mxu0 0
        %1010 = vmatprep.subr.bf16.mxu0 0
        %1011 = vmatpush1.bf16.xpose.msra.mxu0 0
        %1012 = vmatprep.subr.bf16.mxu0 0
        %1013 = vmatpush1.bf16.xpose.msra.mxu0 0
        %1014 = vmatprep.subr.bf16.mxu0 0
        %1015 = vmatpush1.bf16.xpose.msra.mxu0 0
        %1016 = vmatprep.subr.bf16.mxu0 0
        %1017 = vmatpush1.bf16.xpose.msra.mxu0 %v1000
        %1018 = vmatprep.subr.bf16.mxu0 0
        %1019 = vmatpush2.bf16.xpose.msra.mxu0 0
        %1020 = vmatprep.subr.bf16.mxu0 0
        %1021 = vmatpush2.bf16.xpose.msra.mxu0 0
        %1022 = vmatprep.subr.bf16.mxu0 0
        %1023 = vmatpush2.bf16.xpose.msra.mxu0 0
        %1024 = vmatprep.subr.bf16.mxu0 0
        %1025 = vmatpush2.bf16.xpose.msra.mxu0 0
        %1026 = vmatprep.subr.bf16.mxu0 0
        %1027 = vmatpush2.bf16.xpose.msra.mxu0 0
        %1028 = vmatprep.subr.bf16.mxu0 0
        %1029 = vmatpush2.bf16.xpose.msra.mxu0 0
        %1030 = vmatprep.subr.bf16.mxu0 0
        %1031 = vmatpush2.bf16.xpose.msra.mxu0 0
        %1032 = vmatprep.subr.bf16.mxu0 0
        %1033 = vmatpush2.bf16.xpose.msra.mxu0 0
        %1034 = vmatprep.mubr.bf16.mxu0 0
        %1035 = vmatmul.mubr.bf16.gmra.mxu0 %v997
        %v1036 = vpop.f32.mrf.mxu0
        %v1037 = vadd.f32 0.0, %v1036
        %v1038 = vpop.f32.mrf.mxu0
        %v1039 = vpop.f32.mrf.mxu0
        %v1040 = vpop.f32.mrf.mxu0
        %1041 = vdwg.mxu0
        %1043 = vrot.lane.b32.xlu0 %v974, 96
        %v1044 = vpop.permute.xlu0 %1043
        %v1046 = vsel %vm684, %v798, 0
        %v1049 = vsel %vm684, %v1044, 0
        %1051 = vmatprep.subr.bf16.mxu0 0
        %1052 = vmatpush1.bf16.xpose.msra.mxu0 0
        %1053 = vmatprep.subr.bf16.mxu0 0
        %1054 = vmatpush1.bf16.xpose.msra.mxu0 0
        %1055 = vmatprep.subr.bf16.mxu0 0
        %1056 = vmatpush1.bf16.xpose.msra.mxu0 0
        %1057 = vmatprep.subr.bf16.mxu0 0
        %1058 = vmatpush1.bf16.xpose.msra.mxu0 0
        %1059 = vmatprep.subr.bf16.mxu0 0
        %1060 = vmatpush1.bf16.xpose.msra.mxu0 0
        %1061 = vmatprep.subr.bf16.mxu0 0
        %1062 = vmatpush1.bf16.xpose.msra.mxu0 0
        %1063 = vmatprep.subr.bf16.mxu0 0
        %1064 = vmatpush1.bf16.xpose.msra.mxu0 0
        %1065 = vmatprep.subr.bf16.mxu0 0
        %1066 = vmatpush1.bf16.xpose.msra.mxu0 %v1049
        %1067 = vmatprep.subr.bf16.mxu0 0
        %1068 = vmatpush2.bf16.xpose.msra.mxu0 0
        %1069 = vmatprep.subr.bf16.mxu0 0
        %1070 = vmatpush2.bf16.xpose.msra.mxu0 0
        %1071 = vmatprep.subr.bf16.mxu0 0
        %1072 = vmatpush2.bf16.xpose.msra.mxu0 0
        %1073 = vmatprep.subr.bf16.mxu0 0
        %1074 = vmatpush2.bf16.xpose.msra.mxu0 0
        %1075 = vmatprep.subr.bf16.mxu0 0
        %1076 = vmatpush2.bf16.xpose.msra.mxu0 0
        %1077 = vmatprep.subr.bf16.mxu0 0
        %1078 = vmatpush2.bf16.xpose.msra.mxu0 0
        %1079 = vmatprep.subr.bf16.mxu0 0
        %1080 = vmatpush2.bf16.xpose.msra.mxu0 0
        %1081 = vmatprep.subr.bf16.mxu0 0
        %1082 = vmatpush2.bf16.xpose.msra.mxu0 0
        %1083 = vmatprep.mubr.bf16.mxu0 0
        %1084 = vmatmul.mubr.bf16.gmra.mxu0 %v1046
        %v1085 = vpop.f32.mrf.mxu0
        %v1086 = vadd.f32 0.0, %v1085
        %v1087 = vpop.f32.mrf.mxu0
        %v1088 = vpop.f32.mrf.mxu0
        %v1089 = vpop.f32.mrf.mxu0
        %1090 = vdwg.mxu0
        %1092 = vrot.lane.b32.xlu0 %v975, 96
        %v1093 = vpop.permute.xlu0 %1092
        %v1095 = vsel %vm684, %v799, 0
        %v1098 = vsel %vm684, %v1093, 0
        %1100 = vmatprep.subr.bf16.mxu0 0
        %1101 = vmatpush1.bf16.xpose.msra.mxu0 0
        %1102 = vmatprep.subr.bf16.mxu0 0
        %1103 = vmatpush1.bf16.xpose.msra.mxu0 0
        %1104 = vmatprep.subr.bf16.mxu0 0
        %1105 = vmatpush1.bf16.xpose.msra.mxu0 0
        %1106 = vmatprep.subr.bf16.mxu0 0
        %1107 = vmatpush1.bf16.xpose.msra.mxu0 0
        %1108 = vmatprep.subr.bf16.mxu0 0
        %1109 = vmatpush1.bf16.xpose.msra.mxu0 0
        %1110 = vmatprep.subr.bf16.mxu0 0
        %1111 = vmatpush1.bf16.xpose.msra.mxu0 0
        %1112 = vmatprep.subr.bf16.mxu0 0
        %1113 = vmatpush1.bf16.xpose.msra.mxu0 0
        %1114 = vmatprep.subr.bf16.mxu0 0
        %1115 = vmatpush1.bf16.xpose.msra.mxu0 %v1098
        %1116 = vmatprep.subr.bf16.mxu0 0
        %1117 = vmatpush2.bf16.xpose.msra.mxu0 0
        %1118 = vmatprep.subr.bf16.mxu0 0
        %1119 = vmatpush2.bf16.xpose.msra.mxu0 0
        %1120 = vmatprep.subr.bf16.mxu0 0
        %1121 = vmatpush2.bf16.xpose.msra.mxu0 0
        %1122 = vmatprep.subr.bf16.mxu0 0
        %1123 = vmatpush2.bf16.xpose.msra.mxu0 0
        %1124 = vmatprep.subr.bf16.mxu0 0
        %1125 = vmatpush2.bf16.xpose.msra.mxu0 0
        %1126 = vmatprep.subr.bf16.mxu0 0
        %1127 = vmatpush2.bf16.xpose.msra.mxu0 0
        %1128 = vmatprep.subr.bf16.mxu0 0
        %1129 = vmatpush2.bf16.xpose.msra.mxu0 0
        %1130 = vmatprep.subr.bf16.mxu0 0
        %1131 = vmatpush2.bf16.xpose.msra.mxu0 0
        %1132 = vmatprep.mubr.bf16.mxu0 0
        %1133 = vmatmul.mubr.bf16.gmra.mxu0 %v1095
        %v1134 = vpop.f32.mrf.mxu0
        %v1135 = vadd.f32 0.0, %v1134
        %v1136 = vpop.f32.mrf.mxu0
        %v1137 = vpop.f32.mrf.mxu0
        %v1138 = vpop.f32.mrf.mxu0
        %1139 = vdwg.mxu0
        %1141 = vrot.lane.b32.xlu0 %v976, 96
        %v1142 = vpop.permute.xlu0 %1141
        %v1144 = vsel %vm684, %v800, 0
        %v1147 = vsel %vm684, %v1142, 0
        %1149 = vmatprep.subr.bf16.mxu0 0
        %1150 = vmatpush1.bf16.xpose.msra.mxu0 0
        %1151 = vmatprep.subr.bf16.mxu0 0
        %1152 = vmatpush1.bf16.xpose.msra.mxu0 0
        %1153 = vmatprep.subr.bf16.mxu0 0
        %1154 = vmatpush1.bf16.xpose.msra.mxu0 0
        %1155 = vmatprep.subr.bf16.mxu0 0
        %1156 = vmatpush1.bf16.xpose.msra.mxu0 0
        %1157 = vmatprep.subr.bf16.mxu0 0
        %1158 = vmatpush1.bf16.xpose.msra.mxu0 0
        %1159 = vmatprep.subr.bf16.mxu0 0
        %1160 = vmatpush1.bf16.xpose.msra.mxu0 0
        %1161 = vmatprep.subr.bf16.mxu0 0
        %1162 = vmatpush1.bf16.xpose.msra.mxu0 0
        %1163 = vmatprep.subr.bf16.mxu0 0
        %1164 = vmatpush1.bf16.xpose.msra.mxu0 %v1147
        %1165 = vmatprep.subr.bf16.mxu0 0
        %1166 = vmatpush2.bf16.xpose.msra.mxu0 0
        %1167 = vmatprep.subr.bf16.mxu0 0
        %1168 = vmatpush2.bf16.xpose.msra.mxu0 0
        %1169 = vmatprep.subr.bf16.mxu0 0
        %1170 = vmatpush2.bf16.xpose.msra.mxu0 0
        %1171 = vmatprep.subr.bf16.mxu0 0
        %1172 = vmatpush2.bf16.xpose.msra.mxu0 0
        %1173 = vmatprep.subr.bf16.mxu0 0
        %1174 = vmatpush2.bf16.xpose.msra.mxu0 0
        %1175 = vmatprep.subr.bf16.mxu0 0
        %1176 = vmatpush2.bf16.xpose.msra.mxu0 0
        %1177 = vmatprep.subr.bf16.mxu0 0
        %1178 = vmatpush2.bf16.xpose.msra.mxu0 0
        %1179 = vmatprep.subr.bf16.mxu0 0
        %1180 = vmatpush2.bf16.xpose.msra.mxu0 0
        %1181 = vmatprep.mubr.bf16.mxu0 0
        %1182 = vmatmul.mubr.bf16.gmra.mxu0 %v1144
        %v1183 = vpop.f32.mrf.mxu0
        %v1184 = vadd.f32 0.0, %v1183
        %v1185 = vpop.f32.mrf.mxu0
        %v1186 = vpop.f32.mrf.mxu0
        %v1187 = vpop.f32.mrf.mxu0
        %1188 = vdwg.mxu0
        %1190 = vrot.lane.b32.xlu0 %v977, 96
        %v1191 = vpop.permute.xlu0 %1190
        %v1193 = vsel %vm684, %v801, 0
        %v1196 = vsel %vm684, %v1191, 0
        %1198 = vmatprep.subr.bf16.mxu0 0
        %1199 = vmatpush1.bf16.xpose.msra.mxu0 0
        %1200 = vmatprep.subr.bf16.mxu0 0
        %1201 = vmatpush1.bf16.xpose.msra.mxu0 0
        %1202 = vmatprep.subr.bf16.mxu0 0
        %1203 = vmatpush1.bf16.xpose.msra.mxu0 0
        %1204 = vmatprep.subr.bf16.mxu0 0
        %1205 = vmatpush1.bf16.xpose.msra.mxu0 0
        %1206 = vmatprep.subr.bf16.mxu0 0
        %1207 = vmatpush1.bf16.xpose.msra.mxu0 0
        %1208 = vmatprep.subr.bf16.mxu0 0
        %1209 = vmatpush1.bf16.xpose.msra.mxu0 0
        %1210 = vmatprep.subr.bf16.mxu0 0
        %1211 = vmatpush1.bf16.xpose.msra.mxu0 0
        %1212 = vmatprep.subr.bf16.mxu0 0
        %1213 = vmatpush1.bf16.xpose.msra.mxu0 %v1196
        %1214 = vmatprep.subr.bf16.mxu0 0
        %1215 = vmatpush2.bf16.xpose.msra.mxu0 0
        %1216 = vmatprep.subr.bf16.mxu0 0
        %1217 = vmatpush2.bf16.xpose.msra.mxu0 0
        %1218 = vmatprep.subr.bf16.mxu0 0
        %1219 = vmatpush2.bf16.xpose.msra.mxu0 0
        %1220 = vmatprep.subr.bf16.mxu0 0
        %1221 = vmatpush2.bf16.xpose.msra.mxu0 0
        %1222 = vmatprep.subr.bf16.mxu0 0
        %1223 = vmatpush2.bf16.xpose.msra.mxu0 0
        %1224 = vmatprep.subr.bf16.mxu0 0
        %1225 = vmatpush2.bf16.xpose.msra.mxu0 0
        %1226 = vmatprep.subr.bf16.mxu0 0
        %1227 = vmatpush2.bf16.xpose.msra.mxu0 0
        %1228 = vmatprep.subr.bf16.mxu0 0
        %1229 = vmatpush2.bf16.xpose.msra.mxu0 0
        %1230 = vmatprep.mubr.bf16.mxu0 0
        %1231 = vmatmul.mubr.bf16.gmra.mxu0 %v1193
        %v1232 = vpop.f32.mrf.mxu0
        %v1233 = vadd.f32 0.0, %v1232
        %v1234 = vpop.f32.mrf.mxu0
        %v1235 = vpop.f32.mrf.mxu0
        %v1236 = vpop.f32.mrf.mxu0
        %1237 = vdwg.mxu0
        %1239 = vrot.lane.b32.xlu0 %v978, 96
        %v1240 = vpop.permute.xlu0 %1239
        %v1242 = vsel %vm684, %v802, 0
        %v1245 = vsel %vm684, %v1240, 0
        %1247 = vmatprep.subr.bf16.mxu0 0
        %1248 = vmatpush1.bf16.xpose.msra.mxu0 0
        %1249 = vmatprep.subr.bf16.mxu0 0
        %1250 = vmatpush1.bf16.xpose.msra.mxu0 0
        %1251 = vmatprep.subr.bf16.mxu0 0
        %1252 = vmatpush1.bf16.xpose.msra.mxu0 0
        %1253 = vmatprep.subr.bf16.mxu0 0
        %1254 = vmatpush1.bf16.xpose.msra.mxu0 0
        %1255 = vmatprep.subr.bf16.mxu0 0
        %1256 = vmatpush1.bf16.xpose.msra.mxu0 0
        %1257 = vmatprep.subr.bf16.mxu0 0
        %1258 = vmatpush1.bf16.xpose.msra.mxu0 0
        %1259 = vmatprep.subr.bf16.mxu0 0
        %1260 = vmatpush1.bf16.xpose.msra.mxu0 0
        %1261 = vmatprep.subr.bf16.mxu0 0
        %1262 = vmatpush1.bf16.xpose.msra.mxu0 %v1245
        %1263 = vmatprep.subr.bf16.mxu0 0
        %1264 = vmatpush2.bf16.xpose.msra.mxu0 0
        %1265 = vmatprep.subr.bf16.mxu0 0
        %1266 = vmatpush2.bf16.xpose.msra.mxu0 0
        %1267 = vmatprep.subr.bf16.mxu0 0
        %1268 = vmatpush2.bf16.xpose.msra.mxu0 0
        %1269 = vmatprep.subr.bf16.mxu0 0
        %1270 = vmatpush2.bf16.xpose.msra.mxu0 0
        %1271 = vmatprep.subr.bf16.mxu0 0
        %1272 = vmatpush2.bf16.xpose.msra.mxu0 0
        %1273 = vmatprep.subr.bf16.mxu0 0
        %1274 = vmatpush2.bf16.xpose.msra.mxu0 0
        %1275 = vmatprep.subr.bf16.mxu0 0
        %1276 = vmatpush2.bf16.xpose.msra.mxu0 0
        %1277 = vmatprep.subr.bf16.mxu0 0
        %1278 = vmatpush2.bf16.xpose.msra.mxu0 0
        %1279 = vmatprep.mubr.bf16.mxu0 0
        %1280 = vmatmul.mubr.bf16.gmra.mxu0 %v1242
        %v1281 = vpop.f32.mrf.mxu0
        %v1282 = vadd.f32 0.0, %v1281
        %v1283 = vpop.f32.mrf.mxu0
        %v1284 = vpop.f32.mrf.mxu0
        %v1285 = vpop.f32.mrf.mxu0
        %1286 = vdwg.mxu0
        %1288 = vrot.lane.b32.xlu0 %v979, 96
        %v1289 = vpop.permute.xlu0 %1288
        %v1291 = vsel %vm684, %v803, 0
        %v1294 = vsel %vm684, %v1289, 0
        %1296 = vmatprep.subr.bf16.mxu0 0
        %1297 = vmatpush1.bf16.xpose.msra.mxu0 0
        %1298 = vmatprep.subr.bf16.mxu0 0
        %1299 = vmatpush1.bf16.xpose.msra.mxu0 0
        %1300 = vmatprep.subr.bf16.mxu0 0
        %1301 = vmatpush1.bf16.xpose.msra.mxu0 0
        %1302 = vmatprep.subr.bf16.mxu0 0
        %1303 = vmatpush1.bf16.xpose.msra.mxu0 0
        %1304 = vmatprep.subr.bf16.mxu0 0
        %1305 = vmatpush1.bf16.xpose.msra.mxu0 0
        %1306 = vmatprep.subr.bf16.mxu0 0
        %1307 = vmatpush1.bf16.xpose.msra.mxu0 0
        %1308 = vmatprep.subr.bf16.mxu0 0
        %1309 = vmatpush1.bf16.xpose.msra.mxu0 0
        %1310 = vmatprep.subr.bf16.mxu0 0
        %1311 = vmatpush1.bf16.xpose.msra.mxu0 %v1294
        %1312 = vmatprep.subr.bf16.mxu0 0
        %1313 = vmatpush2.bf16.xpose.msra.mxu0 0
        %1314 = vmatprep.subr.bf16.mxu0 0
        %1315 = vmatpush2.bf16.xpose.msra.mxu0 0
        %1316 = vmatprep.subr.bf16.mxu0 0
        %1317 = vmatpush2.bf16.xpose.msra.mxu0 0
        %1318 = vmatprep.subr.bf16.mxu0 0
        %1319 = vmatpush2.bf16.xpose.msra.mxu0 0
        %1320 = vmatprep.subr.bf16.mxu0 0
        %1321 = vmatpush2.bf16.xpose.msra.mxu0 0
        %1322 = vmatprep.subr.bf16.mxu0 0
        %1323 = vmatpush2.bf16.xpose.msra.mxu0 0
        %1324 = vmatprep.subr.bf16.mxu0 0
        %1325 = vmatpush2.bf16.xpose.msra.mxu0 0
        %1326 = vmatprep.subr.bf16.mxu0 0
        %1327 = vmatpush2.bf16.xpose.msra.mxu0 0
        %1328 = vmatprep.mubr.bf16.mxu0 0
        %1329 = vmatmul.mubr.bf16.gmra.mxu0 %v1291
        %v1330 = vpop.f32.mrf.mxu0
        %v1331 = vadd.f32 0.0, %v1330
        %v1332 = vpop.f32.mrf.mxu0
        %v1333 = vpop.f32.mrf.mxu0
        %v1334 = vpop.f32.mrf.mxu0
        %1335 = vdwg.mxu0
        %1337 = vrot.lane.b32.xlu0 %v980, 96
        %v1338 = vpop.permute.xlu0 %1337
        %v1340 = vsel %vm684, %v804, 0
        %v1343 = vsel %vm684, %v1338, 0
        %1345 = vmatprep.subr.bf16.mxu0 0
        %1346 = vmatpush1.bf16.xpose.msra.mxu0 0
        %1347 = vmatprep.subr.bf16.mxu0 0
        %1348 = vmatpush1.bf16.xpose.msra.mxu0 0
        %1349 = vmatprep.subr.bf16.mxu0 0
        %1350 = vmatpush1.bf16.xpose.msra.mxu0 0
        %1351 = vmatprep.subr.bf16.mxu0 0
        %1352 = vmatpush1.bf16.xpose.msra.mxu0 0
        %1353 = vmatprep.subr.bf16.mxu0 0
        %1354 = vmatpush1.bf16.xpose.msra.mxu0 0
        %1355 = vmatprep.subr.bf16.mxu0 0
        %1356 = vmatpush1.bf16.xpose.msra.mxu0 0
        %1357 = vmatprep.subr.bf16.mxu0 0
        %1358 = vmatpush1.bf16.xpose.msra.mxu0 0
        %1359 = vmatprep.subr.bf16.mxu0 0
        %1360 = vmatpush1.bf16.xpose.msra.mxu0 %v1343
        %1361 = vmatprep.subr.bf16.mxu0 0
        %1362 = vmatpush2.bf16.xpose.msra.mxu0 0
        %1363 = vmatprep.subr.bf16.mxu0 0
        %1364 = vmatpush2.bf16.xpose.msra.mxu0 0
        %1365 = vmatprep.subr.bf16.mxu0 0
        %1366 = vmatpush2.bf16.xpose.msra.mxu0 0
        %1367 = vmatprep.subr.bf16.mxu0 0
        %1368 = vmatpush2.bf16.xpose.msra.mxu0 0
        %1369 = vmatprep.subr.bf16.mxu0 0
        %1370 = vmatpush2.bf16.xpose.msra.mxu0 0
        %1371 = vmatprep.subr.bf16.mxu0 0
        %1372 = vmatpush2.bf16.xpose.msra.mxu0 0
        %1373 = vmatprep.subr.bf16.mxu0 0
        %1374 = vmatpush2.bf16.xpose.msra.mxu0 0
        %1375 = vmatprep.subr.bf16.mxu0 0
        %1376 = vmatpush2.bf16.xpose.msra.mxu0 0
        %1377 = vmatprep.mubr.bf16.mxu0 0
        %1378 = vmatmul.mubr.bf16.gmra.mxu0 %v1340
        %v1379 = vpop.f32.mrf.mxu0
        %v1380 = vadd.f32 0.0, %v1379
        %v1381 = vpop.f32.mrf.mxu0
        %v1382 = vpop.f32.mrf.mxu0
        %v1383 = vpop.f32.mrf.mxu0
        %1384 = vdwg.mxu0
        %1386 = vrot.lane.b32.xlu0 %v981, 96
        %v1387 = vpop.permute.xlu0 %1386
        %v1389 = vsel %vm684, %v805, 0
        %v1392 = vsel %vm684, %v1387, 0
        %1394 = vmatprep.subr.bf16.mxu0 0
        %1395 = vmatpush1.bf16.xpose.msra.mxu0 0
        %1396 = vmatprep.subr.bf16.mxu0 0
        %1397 = vmatpush1.bf16.xpose.msra.mxu0 0
        %1398 = vmatprep.subr.bf16.mxu0 0
        %1399 = vmatpush1.bf16.xpose.msra.mxu0 0
        %1400 = vmatprep.subr.bf16.mxu0 0
        %1401 = vmatpush1.bf16.xpose.msra.mxu0 0
        %1402 = vmatprep.subr.bf16.mxu0 0
        %1403 = vmatpush1.bf16.xpose.msra.mxu0 0
        %1404 = vmatprep.subr.bf16.mxu0 0
        %1405 = vmatpush1.bf16.xpose.msra.mxu0 0
        %1406 = vmatprep.subr.bf16.mxu0 0
        %1407 = vmatpush1.bf16.xpose.msra.mxu0 0
        %1408 = vmatprep.subr.bf16.mxu0 0
        %1409 = vmatpush1.bf16.xpose.msra.mxu0 %v1392
        %1410 = vmatprep.subr.bf16.mxu0 0
        %1411 = vmatpush2.bf16.xpose.msra.mxu0 0
        %1412 = vmatprep.subr.bf16.mxu0 0
        %1413 = vmatpush2.bf16.xpose.msra.mxu0 0
        %1414 = vmatprep.subr.bf16.mxu0 0
        %1415 = vmatpush2.bf16.xpose.msra.mxu0 0
        %1416 = vmatprep.subr.bf16.mxu0 0
        %1417 = vmatpush2.bf16.xpose.msra.mxu0 0
        %1418 = vmatprep.subr.bf16.mxu0 0
        %1419 = vmatpush2.bf16.xpose.msra.mxu0 0
        %1420 = vmatprep.subr.bf16.mxu0 0
        %1421 = vmatpush2.bf16.xpose.msra.mxu0 0
        %1422 = vmatprep.subr.bf16.mxu0 0
        %1423 = vmatpush2.bf16.xpose.msra.mxu0 0
        %1424 = vmatprep.subr.bf16.mxu0 0
        %1425 = vmatpush2.bf16.xpose.msra.mxu0 0
        %1426 = vmatprep.mubr.bf16.mxu0 0
        %1427 = vmatmul.mubr.bf16.gmra.mxu0 %v1389
        %v1428 = vpop.f32.mrf.mxu0
        %v1429 = vadd.f32 0.0, %v1428
        %v1430 = vpop.f32.mrf.mxu0
        %v1431 = vpop.f32.mrf.mxu0
        %v1432 = vpop.f32.mrf.mxu0
        %1433 = vdwg.mxu0
        %1435 = vrot.lane.b32.xlu0 %v982, 96
        %v1436 = vpop.permute.xlu0 %1435
        %v1438 = vsel %vm684, %v806, 0
        %v1441 = vsel %vm684, %v1436, 0
        %1443 = vmatprep.subr.bf16.mxu0 0
        %1444 = vmatpush1.bf16.xpose.msra.mxu0 0
        %1445 = vmatprep.subr.bf16.mxu0 0
        %1446 = vmatpush1.bf16.xpose.msra.mxu0 0
        %1447 = vmatprep.subr.bf16.mxu0 0
        %1448 = vmatpush1.bf16.xpose.msra.mxu0 0
        %1449 = vmatprep.subr.bf16.mxu0 0
        %1450 = vmatpush1.bf16.xpose.msra.mxu0 0
        %1451 = vmatprep.subr.bf16.mxu0 0
        %1452 = vmatpush1.bf16.xpose.msra.mxu0 0
        %1453 = vmatprep.subr.bf16.mxu0 0
        %1454 = vmatpush1.bf16.xpose.msra.mxu0 0
        %1455 = vmatprep.subr.bf16.mxu0 0
        %1456 = vmatpush1.bf16.xpose.msra.mxu0 0
        %1457 = vmatprep.subr.bf16.mxu0 0
        %1458 = vmatpush1.bf16.xpose.msra.mxu0 %v1441
        %1459 = vmatprep.subr.bf16.mxu0 0
        %1460 = vmatpush2.bf16.xpose.msra.mxu0 0
        %1461 = vmatprep.subr.bf16.mxu0 0
        %1462 = vmatpush2.bf16.xpose.msra.mxu0 0
        %1463 = vmatprep.subr.bf16.mxu0 0
        %1464 = vmatpush2.bf16.xpose.msra.mxu0 0
        %1465 = vmatprep.subr.bf16.mxu0 0
        %1466 = vmatpush2.bf16.xpose.msra.mxu0 0
        %1467 = vmatprep.subr.bf16.mxu0 0
        %1468 = vmatpush2.bf16.xpose.msra.mxu0 0
        %1469 = vmatprep.subr.bf16.mxu0 0
        %1470 = vmatpush2.bf16.xpose.msra.mxu0 0
        %1471 = vmatprep.subr.bf16.mxu0 0
        %1472 = vmatpush2.bf16.xpose.msra.mxu0 0
        %1473 = vmatprep.subr.bf16.mxu0 0
        %1474 = vmatpush2.bf16.xpose.msra.mxu0 0
        %1475 = vmatprep.mubr.bf16.mxu0 0
        %1476 = vmatmul.mubr.bf16.gmra.mxu0 %v1438
        %v1477 = vpop.f32.mrf.mxu0
        %v1478 = vadd.f32 0.0, %v1477
        %v1479 = vpop.f32.mrf.mxu0
        %v1480 = vpop.f32.mrf.mxu0
        %v1481 = vpop.f32.mrf.mxu0
        %1482 = vdwg.mxu0
        %1484 = vrot.lane.b32.xlu0 %v983, 96
        %v1485 = vpop.permute.xlu0 %1484
        %v1487 = vsel %vm684, %v807, 0
        %v1490 = vsel %vm684, %v1485, 0
        %1492 = vmatprep.subr.bf16.mxu0 0
        %1493 = vmatpush1.bf16.xpose.msra.mxu0 0
        %1494 = vmatprep.subr.bf16.mxu0 0
        %1495 = vmatpush1.bf16.xpose.msra.mxu0 0
        %1496 = vmatprep.subr.bf16.mxu0 0
        %1497 = vmatpush1.bf16.xpose.msra.mxu0 0
        %1498 = vmatprep.subr.bf16.mxu0 0
        %1499 = vmatpush1.bf16.xpose.msra.mxu0 0
        %1500 = vmatprep.subr.bf16.mxu0 0
        %1501 = vmatpush1.bf16.xpose.msra.mxu0 0
        %1502 = vmatprep.subr.bf16.mxu0 0
        %1503 = vmatpush1.bf16.xpose.msra.mxu0 0
        %1504 = vmatprep.subr.bf16.mxu0 0
        %1505 = vmatpush1.bf16.xpose.msra.mxu0 0
        %1506 = vmatprep.subr.bf16.mxu0 0
        %1507 = vmatpush1.bf16.xpose.msra.mxu0 %v1490
        %1508 = vmatprep.subr.bf16.mxu0 0
        %1509 = vmatpush2.bf16.xpose.msra.mxu0 0
        %1510 = vmatprep.subr.bf16.mxu0 0
        %1511 = vmatpush2.bf16.xpose.msra.mxu0 0
        %1512 = vmatprep.subr.bf16.mxu0 0
        %1513 = vmatpush2.bf16.xpose.msra.mxu0 0
        %1514 = vmatprep.subr.bf16.mxu0 0
        %1515 = vmatpush2.bf16.xpose.msra.mxu0 0
        %1516 = vmatprep.subr.bf16.mxu0 0
        %1517 = vmatpush2.bf16.xpose.msra.mxu0 0
        %1518 = vmatprep.subr.bf16.mxu0 0
        %1519 = vmatpush2.bf16.xpose.msra.mxu0 0
        %1520 = vmatprep.subr.bf16.mxu0 0
        %1521 = vmatpush2.bf16.xpose.msra.mxu0 0
        %1522 = vmatprep.subr.bf16.mxu0 0
        %1523 = vmatpush2.bf16.xpose.msra.mxu0 0
        %1524 = vmatprep.mubr.bf16.mxu0 0
        %1525 = vmatmul.mubr.bf16.gmra.mxu0 %v1487
        %v1526 = vpop.f32.mrf.mxu0
        %v1527 = vadd.f32 0.0, %v1526
        %v1528 = vpop.f32.mrf.mxu0
        %v1529 = vpop.f32.mrf.mxu0
        %v1530 = vpop.f32.mrf.mxu0
        %1531 = vdwg.mxu0
        %1533 = vrot.lane.b32.xlu0 %v984, 96
        %v1534 = vpop.permute.xlu0 %1533
        %v1536 = vsel %vm684, %v808, 0
        %v1539 = vsel %vm684, %v1534, 0
        %1541 = vmatprep.subr.bf16.mxu0 0
        %1542 = vmatpush1.bf16.xpose.msra.mxu0 0
        %1543 = vmatprep.subr.bf16.mxu0 0
        %1544 = vmatpush1.bf16.xpose.msra.mxu0 0
        %1545 = vmatprep.subr.bf16.mxu0 0
        %1546 = vmatpush1.bf16.xpose.msra.mxu0 0
        %1547 = vmatprep.subr.bf16.mxu0 0
        %1548 = vmatpush1.bf16.xpose.msra.mxu0 0
        %1549 = vmatprep.subr.bf16.mxu0 0
        %1550 = vmatpush1.bf16.xpose.msra.mxu0 0
        %1551 = vmatprep.subr.bf16.mxu0 0
        %1552 = vmatpush1.bf16.xpose.msra.mxu0 0
        %1553 = vmatprep.subr.bf16.mxu0 0
        %1554 = vmatpush1.bf16.xpose.msra.mxu0 0
        %1555 = vmatprep.subr.bf16.mxu0 0
        %1556 = vmatpush1.bf16.xpose.msra.mxu0 %v1539
        %1557 = vmatprep.subr.bf16.mxu0 0
        %1558 = vmatpush2.bf16.xpose.msra.mxu0 0
        %1559 = vmatprep.subr.bf16.mxu0 0
        %1560 = vmatpush2.bf16.xpose.msra.mxu0 0
        %1561 = vmatprep.subr.bf16.mxu0 0
        %1562 = vmatpush2.bf16.xpose.msra.mxu0 0
        %1563 = vmatprep.subr.bf16.mxu0 0
        %1564 = vmatpush2.bf16.xpose.msra.mxu0 0
        %1565 = vmatprep.subr.bf16.mxu0 0
        %1566 = vmatpush2.bf16.xpose.msra.mxu0 0
        %1567 = vmatprep.subr.bf16.mxu0 0
        %1568 = vmatpush2.bf16.xpose.msra.mxu0 0
        %1569 = vmatprep.subr.bf16.mxu0 0
        %1570 = vmatpush2.bf16.xpose.msra.mxu0 0
        %1571 = vmatprep.subr.bf16.mxu0 0
        %1572 = vmatpush2.bf16.xpose.msra.mxu0 0
        %1573 = vmatprep.mubr.bf16.mxu0 0
        %1574 = vmatmul.mubr.bf16.gmra.mxu0 %v1536
        %v1575 = vpop.f32.mrf.mxu0
        %v1576 = vadd.f32 0.0, %v1575
        %v1577 = vpop.f32.mrf.mxu0
        %v1578 = vpop.f32.mrf.mxu0
        %v1579 = vpop.f32.mrf.mxu0
        %1580 = vdwg.mxu0
        %1582 = vrot.lane.b32.xlu0 %v985, 96
        %v1583 = vpop.permute.xlu0 %1582
        %v1585 = vsel %vm684, %v809, 0
        %v1588 = vsel %vm684, %v1583, 0
        %1590 = vmatprep.subr.bf16.mxu0 0
        %1591 = vmatpush1.bf16.xpose.msra.mxu0 0
        %1592 = vmatprep.subr.bf16.mxu0 0
        %1593 = vmatpush1.bf16.xpose.msra.mxu0 0
        %1594 = vmatprep.subr.bf16.mxu0 0
        %1595 = vmatpush1.bf16.xpose.msra.mxu0 0
        %1596 = vmatprep.subr.bf16.mxu0 0
        %1597 = vmatpush1.bf16.xpose.msra.mxu0 0
        %1598 = vmatprep.subr.bf16.mxu0 0
        %1599 = vmatpush1.bf16.xpose.msra.mxu0 0
        %1600 = vmatprep.subr.bf16.mxu0 0
        %1601 = vmatpush1.bf16.xpose.msra.mxu0 0
        %1602 = vmatprep.subr.bf16.mxu0 0
        %1603 = vmatpush1.bf16.xpose.msra.mxu0 0
        %1604 = vmatprep.subr.bf16.mxu0 0
        %1605 = vmatpush1.bf16.xpose.msra.mxu0 %v1588
        %1606 = vmatprep.subr.bf16.mxu0 0
        %1607 = vmatpush2.bf16.xpose.msra.mxu0 0
        %1608 = vmatprep.subr.bf16.mxu0 0
        %1609 = vmatpush2.bf16.xpose.msra.mxu0 0
        %1610 = vmatprep.subr.bf16.mxu0 0
        %1611 = vmatpush2.bf16.xpose.msra.mxu0 0
        %1612 = vmatprep.subr.bf16.mxu0 0
        %1613 = vmatpush2.bf16.xpose.msra.mxu0 0
        %1614 = vmatprep.subr.bf16.mxu0 0
        %1615 = vmatpush2.bf16.xpose.msra.mxu0 0
        %1616 = vmatprep.subr.bf16.mxu0 0
        %1617 = vmatpush2.bf16.xpose.msra.mxu0 0
        %1618 = vmatprep.subr.bf16.mxu0 0
        %1619 = vmatpush2.bf16.xpose.msra.mxu0 0
        %1620 = vmatprep.subr.bf16.mxu0 0
        %1621 = vmatpush2.bf16.xpose.msra.mxu0 0
        %1622 = vmatprep.mubr.bf16.mxu0 0
        %1623 = vmatmul.mubr.bf16.gmra.mxu0 %v1585
        %v1624 = vpop.f32.mrf.mxu0
        %v1625 = vadd.f32 0.0, %v1624
        %v1626 = vpop.f32.mrf.mxu0
        %v1627 = vpop.f32.mrf.mxu0
        %v1628 = vpop.f32.mrf.mxu0
        %1629 = vdwg.mxu0
        %1631 = vrot.lane.b32.xlu0 %v986, 96
        %v1632 = vpop.permute.xlu0 %1631
        %v1634 = vsel %vm684, %v810, 0
        %v1637 = vsel %vm684, %v1632, 0
        %1639 = vmatprep.subr.bf16.mxu0 0
        %1640 = vmatpush1.bf16.xpose.msra.mxu0 0
        %1641 = vmatprep.subr.bf16.mxu0 0
        %1642 = vmatpush1.bf16.xpose.msra.mxu0 0
        %1643 = vmatprep.subr.bf16.mxu0 0
        %1644 = vmatpush1.bf16.xpose.msra.mxu0 0
        %1645 = vmatprep.subr.bf16.mxu0 0
        %1646 = vmatpush1.bf16.xpose.msra.mxu0 0
        %1647 = vmatprep.subr.bf16.mxu0 0
        %1648 = vmatpush1.bf16.xpose.msra.mxu0 0
        %1649 = vmatprep.subr.bf16.mxu0 0
        %1650 = vmatpush1.bf16.xpose.msra.mxu0 0
        %1651 = vmatprep.subr.bf16.mxu0 0
        %1652 = vmatpush1.bf16.xpose.msra.mxu0 0
        %1653 = vmatprep.subr.bf16.mxu0 0
        %1654 = vmatpush1.bf16.xpose.msra.mxu0 %v1637
        %1655 = vmatprep.subr.bf16.mxu0 0
        %1656 = vmatpush2.bf16.xpose.msra.mxu0 0
        %1657 = vmatprep.subr.bf16.mxu0 0
        %1658 = vmatpush2.bf16.xpose.msra.mxu0 0
        %1659 = vmatprep.subr.bf16.mxu0 0
        %1660 = vmatpush2.bf16.xpose.msra.mxu0 0
        %1661 = vmatprep.subr.bf16.mxu0 0
        %1662 = vmatpush2.bf16.xpose.msra.mxu0 0
        %1663 = vmatprep.subr.bf16.mxu0 0
        %1664 = vmatpush2.bf16.xpose.msra.mxu0 0
        %1665 = vmatprep.subr.bf16.mxu0 0
        %1666 = vmatpush2.bf16.xpose.msra.mxu0 0
        %1667 = vmatprep.subr.bf16.mxu0 0
        %1668 = vmatpush2.bf16.xpose.msra.mxu0 0
        %1669 = vmatprep.subr.bf16.mxu0 0
        %1670 = vmatpush2.bf16.xpose.msra.mxu0 0
        %1671 = vmatprep.mubr.bf16.mxu0 0
        %1672 = vmatmul.mubr.bf16.gmra.mxu0 %v1634
        %v1673 = vpop.f32.mrf.mxu0
        %v1674 = vadd.f32 0.0, %v1673
        %v1675 = vpop.f32.mrf.mxu0
        %v1676 = vpop.f32.mrf.mxu0
        %v1677 = vpop.f32.mrf.mxu0
        %1678 = vdwg.mxu0
        %1680 = vrot.lane.b32.xlu0 %v987, 96
        %v1681 = vpop.permute.xlu0 %1680
        %v1683 = vsel %vm684, %v811, 0
        %v1686 = vsel %vm684, %v1681, 0
        %1688 = vmatprep.subr.bf16.mxu0 0
        %1689 = vmatpush1.bf16.xpose.msra.mxu0 0
        %1690 = vmatprep.subr.bf16.mxu0 0
        %1691 = vmatpush1.bf16.xpose.msra.mxu0 0
        %1692 = vmatprep.subr.bf16.mxu0 0
        %1693 = vmatpush1.bf16.xpose.msra.mxu0 0
        %1694 = vmatprep.subr.bf16.mxu0 0
        %1695 = vmatpush1.bf16.xpose.msra.mxu0 0
        %1696 = vmatprep.subr.bf16.mxu0 0
        %1697 = vmatpush1.bf16.xpose.msra.mxu0 0
        %1698 = vmatprep.subr.bf16.mxu0 0
        %1699 = vmatpush1.bf16.xpose.msra.mxu0 0
        %1700 = vmatprep.subr.bf16.mxu0 0
        %1701 = vmatpush1.bf16.xpose.msra.mxu0 0
        %1702 = vmatprep.subr.bf16.mxu0 0
        %1703 = vmatpush1.bf16.xpose.msra.mxu0 %v1686
        %1704 = vmatprep.subr.bf16.mxu0 0
        %1705 = vmatpush2.bf16.xpose.msra.mxu0 0
        %1706 = vmatprep.subr.bf16.mxu0 0
        %1707 = vmatpush2.bf16.xpose.msra.mxu0 0
        %1708 = vmatprep.subr.bf16.mxu0 0
        %1709 = vmatpush2.bf16.xpose.msra.mxu0 0
        %1710 = vmatprep.subr.bf16.mxu0 0
        %1711 = vmatpush2.bf16.xpose.msra.mxu0 0
        %1712 = vmatprep.subr.bf16.mxu0 0
        %1713 = vmatpush2.bf16.xpose.msra.mxu0 0
        %1714 = vmatprep.subr.bf16.mxu0 0
        %1715 = vmatpush2.bf16.xpose.msra.mxu0 0
        %1716 = vmatprep.subr.bf16.mxu0 0
        %1717 = vmatpush2.bf16.xpose.msra.mxu0 0
        %1718 = vmatprep.subr.bf16.mxu0 0
        %1719 = vmatpush2.bf16.xpose.msra.mxu0 0
        %1720 = vmatprep.mubr.bf16.mxu0 0
        %1721 = vmatmul.mubr.bf16.gmra.mxu0 %v1683
        %v1722 = vpop.f32.mrf.mxu0
        %v1723 = vadd.f32 0.0, %v1722
        %v1724 = vpop.f32.mrf.mxu0
        %v1725 = vpop.f32.mrf.mxu0
        %v1726 = vpop.f32.mrf.mxu0
        %1727 = vdwg.mxu0
        %1729 = vrot.lane.b32.xlu0 %v988, 96
        %v1730 = vpop.permute.xlu0 %1729
        %v1732 = vsel %vm684, %v812, 0
        %v1735 = vsel %vm684, %v1730, 0
        %1737 = vmatprep.subr.bf16.mxu0 0
        %1738 = vmatpush1.bf16.xpose.msra.mxu0 0
        %1739 = vmatprep.subr.bf16.mxu0 0
        %1740 = vmatpush1.bf16.xpose.msra.mxu0 0
        %1741 = vmatprep.subr.bf16.mxu0 0
        %1742 = vmatpush1.bf16.xpose.msra.mxu0 0
        %1743 = vmatprep.subr.bf16.mxu0 0
        %1744 = vmatpush1.bf16.xpose.msra.mxu0 0
        %1745 = vmatprep.subr.bf16.mxu0 0
        %1746 = vmatpush1.bf16.xpose.msra.mxu0 0
        %1747 = vmatprep.subr.bf16.mxu0 0
        %1748 = vmatpush1.bf16.xpose.msra.mxu0 0
        %1749 = vmatprep.subr.bf16.mxu0 0
        %1750 = vmatpush1.bf16.xpose.msra.mxu0 0
        %1751 = vmatprep.subr.bf16.mxu0 0
        %1752 = vmatpush1.bf16.xpose.msra.mxu0 %v1735
        %1753 = vmatprep.subr.bf16.mxu0 0
        %1754 = vmatpush2.bf16.xpose.msra.mxu0 0
        %1755 = vmatprep.subr.bf16.mxu0 0
        %1756 = vmatpush2.bf16.xpose.msra.mxu0 0
        %1757 = vmatprep.subr.bf16.mxu0 0
        %1758 = vmatpush2.bf16.xpose.msra.mxu0 0
        %1759 = vmatprep.subr.bf16.mxu0 0
        %1760 = vmatpush2.bf16.xpose.msra.mxu0 0
        %1761 = vmatprep.subr.bf16.mxu0 0
        %1762 = vmatpush2.bf16.xpose.msra.mxu0 0
        %1763 = vmatprep.subr.bf16.mxu0 0
        %1764 = vmatpush2.bf16.xpose.msra.mxu0 0
        %1765 = vmatprep.subr.bf16.mxu0 0
        %1766 = vmatpush2.bf16.xpose.msra.mxu0 0
        %1767 = vmatprep.subr.bf16.mxu0 0
        %1768 = vmatpush2.bf16.xpose.msra.mxu0 0
        %1769 = vmatprep.mubr.bf16.mxu0 0
        %1770 = vmatmul.mubr.bf16.gmra.mxu0 %v1732
        %v1771 = vpop.f32.mrf.mxu0
        %v1772 = vadd.f32 0.0, %v1771
        %v1773 = vpop.f32.mrf.mxu0
        %v1774 = vpop.f32.mrf.mxu0
        %v1775 = vpop.f32.mrf.mxu0
        %1776 = vdwg.mxu0
        %vm1777 = vcmp.le.s32.totalorder %v992, %v990
        %v1778 = vsel %vm1777, 1, 0
        %vm1779 = vcmp.eq.s32.totalorder %v1778, 1
        %v1780 = vsel %vm1779, %v1037, -1e+30
        %v1781 = vsel %vm1779, %v1086, -1e+30
        %v1782 = vsel %vm1779, %v1135, -1e+30
        %v1783 = vsel %vm1779, %v1184, -1e+30
        %v1784 = vsel %vm1779, %v1233, -1e+30
        %v1785 = vsel %vm1779, %v1282, -1e+30
        %v1786 = vsel %vm1779, %v1331, -1e+30
        %v1787 = vsel %vm1779, %v1380, -1e+30
        %v1788 = vsel %vm1779, %v1429, -1e+30
        %v1789 = vsel %vm1779, %v1478, -1e+30
        %v1790 = vsel %vm1779, %v1527, -1e+30
        %v1791 = vsel %vm1779, %v1576, -1e+30
        %v1792 = vsel %vm1779, %v1625, -1e+30
        %v1793 = vsel %vm1779, %v1674, -1e+30
        %v1794 = vsel %vm1779, %v1723, -1e+30
        %v1795 = vsel %vm1779, %v1772, -1e+30
        %vm1796 = vcmask 64512
        %v1797 = vsel %vm1796, %v1780, -inf
        %1798 = vmax.xlane.f32.xlu0 %v1797
        %v1799 = vpop.xlane.xlu0 %1798
        %v1800 = vsel %vm1796, %v1781, -inf
        %1801 = vmax.xlane.f32.xlu0 %v1800
        %v1802 = vpop.xlane.xlu0 %1801
        %v1803 = vsel %vm1796, %v1782, -inf
        %1804 = vmax.xlane.f32.xlu0 %v1803
        %v1805 = vpop.xlane.xlu0 %1804
        %v1806 = vsel %vm1796, %v1783, -inf
        %1807 = vmax.xlane.f32.xlu0 %v1806
        %v1808 = vpop.xlane.xlu0 %1807
        %v1809 = vsel %vm1796, %v1784, -inf
        %1810 = vmax.xlane.f32.xlu0 %v1809
        %v1811 = vpop.xlane.xlu0 %1810
        %v1812 = vsel %vm1796, %v1785, -inf
        %1813 = vmax.xlane.f32.xlu0 %v1812
        %v1814 = vpop.xlane.xlu0 %1813
        %v1815 = vsel %vm1796, %v1786, -inf
        %1816 = vmax.xlane.f32.xlu0 %v1815
        %v1817 = vpop.xlane.xlu0 %1816
        %v1818 = vsel %vm1796, %v1787, -inf
        %1819 = vmax.xlane.f32.xlu0 %v1818
        %v1820 = vpop.xlane.xlu0 %1819
        %v1821 = vsel %vm1796, %v1788, -inf
        %1822 = vmax.xlane.f32.xlu0 %v1821
        %v1823 = vpop.xlane.xlu0 %1822
        %v1824 = vsel %vm1796, %v1789, -inf
        %1825 = vmax.xlane.f32.xlu0 %v1824
        %v1826 = vpop.xlane.xlu0 %1825
        %v1827 = vsel %vm1796, %v1790, -inf
        %1828 = vmax.xlane.f32.xlu0 %v1827
        %v1829 = vpop.xlane.xlu0 %1828
        %v1830 = vsel %vm1796, %v1791, -inf
        %1831 = vmax.xlane.f32.xlu0 %v1830
        %v1832 = vpop.xlane.xlu0 %1831
        %v1833 = vsel %vm1796, %v1792, -inf
        %1834 = vmax.xlane.f32.xlu0 %v1833
        %v1835 = vpop.xlane.xlu0 %1834
        %v1836 = vsel %vm1796, %v1793, -inf
        %1837 = vmax.xlane.f32.xlu0 %v1836
        %v1838 = vpop.xlane.xlu0 %1837
        %v1839 = vsel %vm1796, %v1794, -inf
        %1840 = vmax.xlane.f32.xlu0 %v1839
        %v1841 = vpop.xlane.xlu0 %1840
        %v1842 = vsel %vm1796, %v1795, -inf
        %1843 = vmax.xlane.f32.xlu0 %v1842
        %v1844 = vpop.xlane.xlu0 %1843
        %v1845 = vsub.f32 %v1780, %v1799
        %v1846 = vsub.f32 %v1781, %v1802
        %v1847 = vsub.f32 %v1782, %v1805
        %v1848 = vsub.f32 %v1783, %v1808
        %v1849 = vsub.f32 %v1784, %v1811
        %v1850 = vsub.f32 %v1785, %v1814
        %v1851 = vsub.f32 %v1786, %v1817
        %v1852 = vsub.f32 %v1787, %v1820
        %v1853 = vsub.f32 %v1788, %v1823
        %v1854 = vsub.f32 %v1789, %v1826
        %v1855 = vsub.f32 %v1790, %v1829
        %v1856 = vsub.f32 %v1791, %v1832
        %v1857 = vsub.f32 %v1792, %v1835
        %v1858 = vsub.f32 %v1793, %v1838
        %v1859 = vsub.f32 %v1794, %v1841
        %v1860 = vsub.f32 %v1795, %v1844
        %v1861 = vmul.f32 %v1845, 1.442695
        %v1862 = vpow.pop %v1861
        %v1863 = vmul.f32 %v1846, 1.442695
        %v1864 = vpow.pop %v1863
        %v1865 = vmul.f32 %v1847, 1.442695
        %v1866 = vpow.pop %v1865
        %v1867 = vmul.f32 %v1848, 1.442695
        %v1868 = vpow.pop %v1867
        %v1869 = vmul.f32 %v1849, 1.442695
        %v1870 = vpow.pop %v1869
        %v1871 = vmul.f32 %v1850, 1.442695
        %v1872 = vpow.pop %v1871
        %v1873 = vmul.f32 %v1851, 1.442695
        %v1874 = vpow.pop %v1873
        %v1875 = vmul.f32 %v1852, 1.442695
        %v1876 = vpow.pop %v1875
        %v1877 = vmul.f32 %v1853, 1.442695
        %v1878 = vpow.pop %v1877
        %v1879 = vmul.f32 %v1854, 1.442695
        %v1880 = vpow.pop %v1879
        %v1881 = vmul.f32 %v1855, 1.442695
        %v1882 = vpow.pop %v1881
        %v1883 = vmul.f32 %v1856, 1.442695
        %v1884 = vpow.pop %v1883
        %v1885 = vmul.f32 %v1857, 1.442695
        %v1886 = vpow.pop %v1885
        %v1887 = vmul.f32 %v1858, 1.442695
        %v1888 = vpow.pop %v1887
        %v1889 = vmul.f32 %v1859, 1.442695
        %v1890 = vpow.pop %v1889
        %v1891 = vmul.f32 %v1860, 1.442695
        %v1892 = vpow.pop %v1891
        %v1893 = vsel %vm1796, %v1862, 0.0
        %1894 = vadd.xlane.f32.xlu0 %v1893
        %v1895 = vpop.xlane.xlu0 %1894
        %v1896 = vsel %vm1796, %v1864, 0.0
        %1897 = vadd.xlane.f32.xlu0 %v1896
        %v1898 = vpop.xlane.xlu0 %1897
        %v1899 = vsel %vm1796, %v1866, 0.0
        %1900 = vadd.xlane.f32.xlu0 %v1899
        %v1901 = vpop.xlane.xlu0 %1900
        %v1902 = vsel %vm1796, %v1868, 0.0
        %1903 = vadd.xlane.f32.xlu0 %v1902
        %v1904 = vpop.xlane.xlu0 %1903
        %v1905 = vsel %vm1796, %v1870, 0.0
        %1906 = vadd.xlane.f32.xlu0 %v1905
        %v1907 = vpop.xlane.xlu0 %1906
        %v1908 = vsel %vm1796, %v1872, 0.0
        %1909 = vadd.xlane.f32.xlu0 %v1908
        %v1910 = vpop.xlane.xlu0 %1909
        %v1911 = vsel %vm1796, %v1874, 0.0
        %1912 = vadd.xlane.f32.xlu0 %v1911
        %v1913 = vpop.xlane.xlu0 %1912
        %v1914 = vsel %vm1796, %v1876, 0.0
        %1915 = vadd.xlane.f32.xlu0 %v1914
        %v1916 = vpop.xlane.xlu0 %1915
        %v1917 = vsel %vm1796, %v1878, 0.0
        %1918 = vadd.xlane.f32.xlu0 %v1917
        %v1919 = vpop.xlane.xlu0 %1918
        %v1920 = vsel %vm1796, %v1880, 0.0
        %1921 = vadd.xlane.f32.xlu0 %v1920
        %v1922 = vpop.xlane.xlu0 %1921
        %v1923 = vsel %vm1796, %v1882, 0.0
        %1924 = vadd.xlane.f32.xlu0 %v1923
        %v1925 = vpop.xlane.xlu0 %1924
        %v1926 = vsel %vm1796, %v1884, 0.0
        %1927 = vadd.xlane.f32.xlu0 %v1926
        %v1928 = vpop.xlane.xlu0 %1927
        %v1929 = vsel %vm1796, %v1886, 0.0
        %1930 = vadd.xlane.f32.xlu0 %v1929
        %v1931 = vpop.xlane.xlu0 %1930
        %v1932 = vsel %vm1796, %v1888, 0.0
        %1933 = vadd.xlane.f32.xlu0 %v1932
        %v1934 = vpop.xlane.xlu0 %1933
        %v1935 = vsel %vm1796, %v1890, 0.0
        %1936 = vadd.xlane.f32.xlu0 %v1935
        %v1937 = vpop.xlane.xlu0 %1936
        %v1938 = vsel %vm1796, %v1892, 0.0
        %1939 = vadd.xlane.f32.xlu0 %v1938
        %v1940 = vpop.xlane.xlu0 %1939
        %v1941 = vrcp.pop %v1895
        %v1942 = vrcp.pop %v1898
        %v1943 = vrcp.pop %v1901
        %v1944 = vrcp.pop %v1904
        %v1945 = vrcp.pop %v1907
        %v1946 = vrcp.pop %v1910
        %v1947 = vrcp.pop %v1913
        %v1948 = vrcp.pop %v1916
        %v1949 = vrcp.pop %v1919
        %v1950 = vrcp.pop %v1922
        %v1951 = vrcp.pop %v1925
        %v1952 = vrcp.pop %v1928
        %v1953 = vrcp.pop %v1931
        %v1954 = vrcp.pop %v1934
        %v1955 = vrcp.pop %v1937
        %v1956 = vrcp.pop %v1940
        %v1957 = vmul.f32 %v1862, %v1941
        %v1958 = vmul.f32 %v1864, %v1942
        %v1959 = vmul.f32 %v1866, %v1943
        %v1960 = vmul.f32 %v1868, %v1944
        %v1961 = vmul.f32 %v1870, %v1945
        %v1962 = vmul.f32 %v1872, %v1946
        %v1963 = vmul.f32 %v1874, %v1947
        %v1964 = vmul.f32 %v1876, %v1948
        %v1965 = vmul.f32 %v1878, %v1949
        %v1966 = vmul.f32 %v1880, %v1950
        %v1967 = vmul.f32 %v1882, %v1951
        %v1968 = vmul.f32 %v1884, %v1952
        %v1969 = vmul.f32 %v1886, %v1953
        %v1970 = vmul.f32 %v1888, %v1954
        %v1971 = vmul.f32 %v1890, %v1955
        %v1972 = vmul.f32 %v1892, %v1956
        %v1973 = vpack.c.bf16 %v1957, %v1957
        %v1974 = vpack.c.bf16 %v1958, %v1958
        %v1975 = vpack.c.bf16 %v1959, %v1959
        %v1976 = vpack.c.bf16 %v1960, %v1960
        %v1977 = vpack.c.bf16 %v1961, %v1961
        %v1978 = vpack.c.bf16 %v1962, %v1962
        %v1979 = vpack.c.bf16 %v1963, %v1963
        %v1980 = vpack.c.bf16 %v1964, %v1964
        %v1981 = vpack.c.bf16 %v1965, %v1965
        %v1982 = vpack.c.bf16 %v1966, %v1966
        %v1983 = vpack.c.bf16 %v1967, %v1967
        %v1984 = vpack.c.bf16 %v1968, %v1968
        %v1985 = vpack.c.bf16 %v1969, %v1969
        %v1986 = vpack.c.bf16 %v1970, %v1970
        %v1987 = vpack.c.bf16 %v1971, %v1971
        %v1988 = vpack.c.bf16 %v1972, %v1972
        %1989 = vrot.lane.b32.xlu0 %v575, 64
        %v1990 = vpop.permute.xlu0 %1989
        %v1992 = vsel %vm1796, %v1973, 0
        %vm1994 = vcmask 1043456
        %v1996 = vsel %vm1994, %v1990, 0
        %1998 = vmatprep.subr.bf16.mxu0 0
        %1999 = vmatpush1.bf16.msra.mxu0 0
        %2000 = vmatprep.subr.bf16.mxu0 0
        %2001 = vmatpush1.bf16.msra.mxu0 0
        %2002 = vmatprep.subr.bf16.mxu0 0
        %2003 = vmatpush1.bf16.msra.mxu0 0
        %2004 = vmatprep.subr.bf16.mxu0 0
        %2005 = vmatpush1.bf16.msra.mxu0 0
        %2006 = vmatprep.subr.bf16.mxu0 0
        %2007 = vmatpush1.bf16.msra.mxu0 0
        %2008 = vmatprep.subr.bf16.mxu0 0
        %2009 = vmatpush1.bf16.msra.mxu0 0
        %2010 = vmatprep.subr.bf16.mxu0 0
        %2011 = vmatpush1.bf16.msra.mxu0 0
        %2012 = vmatprep.subr.bf16.mxu0 0
        %2013 = vmatpush1.bf16.msra.mxu0 %v1996
        %2014 = vmatprep.subr.bf16.mxu0 0
        %2015 = vmatpush2.bf16.msra.mxu0 0
        %2016 = vmatprep.subr.bf16.mxu0 0
        %2017 = vmatpush2.bf16.msra.mxu0 0
        %2018 = vmatprep.subr.bf16.mxu0 0
        %2019 = vmatpush2.bf16.msra.mxu0 0
        %2020 = vmatprep.subr.bf16.mxu0 0
        %2021 = vmatpush2.bf16.msra.mxu0 0
        %2022 = vmatprep.subr.bf16.mxu0 0
        %2023 = vmatpush2.bf16.msra.mxu0 0
        %2024 = vmatprep.subr.bf16.mxu0 0
        %2025 = vmatpush2.bf16.msra.mxu0 0
        %2026 = vmatprep.subr.bf16.mxu0 0
        %2027 = vmatpush2.bf16.msra.mxu0 0
        %2028 = vmatprep.subr.bf16.mxu0 0
        %2029 = vmatpush2.bf16.msra.mxu0 0
        %2030 = vmatprep.mubr.bf16.mxu0 0
        %2031 = vmatmul.mubr.bf16.gmra.mxu0 %v1992
        %v2032 = vpop.f32.mrf.mxu0
        %v2033 = vadd.f32 0.0, %v2032
        %v2034 = vpop.f32.mrf.mxu0
        %v2035 = vpop.f32.mrf.mxu0
        %v2036 = vpop.f32.mrf.mxu0
        %2037 = vdwg.mxu0
        %2038 = vrot.lane.b32.xlu0 %v576, 64
        %v2039 = vpop.permute.xlu0 %2038
        %v2041 = vsel %vm1796, %v1974, 0
        %v2044 = vsel %vm1994, %v2039, 0
        %2046 = vmatprep.subr.bf16.mxu0 0
        %2047 = vmatpush1.bf16.msra.mxu0 0
        %2048 = vmatprep.subr.bf16.mxu0 0
        %2049 = vmatpush1.bf16.msra.mxu0 0
        %2050 = vmatprep.subr.bf16.mxu0 0
        %2051 = vmatpush1.bf16.msra.mxu0 0
        %2052 = vmatprep.subr.bf16.mxu0 0
        %2053 = vmatpush1.bf16.msra.mxu0 0
        %2054 = vmatprep.subr.bf16.mxu0 0
        %2055 = vmatpush1.bf16.msra.mxu0 0
        %2056 = vmatprep.subr.bf16.mxu0 0
        %2057 = vmatpush1.bf16.msra.mxu0 0
        %2058 = vmatprep.subr.bf16.mxu0 0
        %2059 = vmatpush1.bf16.msra.mxu0 0
        %2060 = vmatprep.subr.bf16.mxu0 0
        %2061 = vmatpush1.bf16.msra.mxu0 %v2044
        %2062 = vmatprep.subr.bf16.mxu0 0
        %2063 = vmatpush2.bf16.msra.mxu0 0
        %2064 = vmatprep.subr.bf16.mxu0 0
        %2065 = vmatpush2.bf16.msra.mxu0 0
        %2066 = vmatprep.subr.bf16.mxu0 0
        %2067 = vmatpush2.bf16.msra.mxu0 0
        %2068 = vmatprep.subr.bf16.mxu0 0
        %2069 = vmatpush2.bf16.msra.mxu0 0
        %2070 = vmatprep.subr.bf16.mxu0 0
        %2071 = vmatpush2.bf16.msra.mxu0 0
        %2072 = vmatprep.subr.bf16.mxu0 0
        %2073 = vmatpush2.bf16.msra.mxu0 0
        %2074 = vmatprep.subr.bf16.mxu0 0
        %2075 = vmatpush2.bf16.msra.mxu0 0
        %2076 = vmatprep.subr.bf16.mxu0 0
        %2077 = vmatpush2.bf16.msra.mxu0 0
        %2078 = vmatprep.mubr.bf16.mxu0 0
        %2079 = vmatmul.mubr.bf16.gmra.mxu0 %v2041
        %v2080 = vpop.f32.mrf.mxu0
        %v2081 = vadd.f32 0.0, %v2080
        %v2082 = vpop.f32.mrf.mxu0
        %v2083 = vpop.f32.mrf.mxu0
        %v2084 = vpop.f32.mrf.mxu0
        %2085 = vdwg.mxu0
        %2086 = vrot.lane.b32.xlu0 %v577, 64
        %v2087 = vpop.permute.xlu0 %2086
        %v2089 = vsel %vm1796, %v1975, 0
        %v2092 = vsel %vm1994, %v2087, 0
        %2094 = vmatprep.subr.bf16.mxu0 0
        %2095 = vmatpush1.bf16.msra.mxu0 0
        %2096 = vmatprep.subr.bf16.mxu0 0
        %2097 = vmatpush1.bf16.msra.mxu0 0
        %2098 = vmatprep.subr.bf16.mxu0 0
        %2099 = vmatpush1.bf16.msra.mxu0 0
        %2100 = vmatprep.subr.bf16.mxu0 0
        %2101 = vmatpush1.bf16.msra.mxu0 0
        %2102 = vmatprep.subr.bf16.mxu0 0
        %2103 = vmatpush1.bf16.msra.mxu0 0
        %2104 = vmatprep.subr.bf16.mxu0 0
        %2105 = vmatpush1.bf16.msra.mxu0 0
        %2106 = vmatprep.subr.bf16.mxu0 0
        %2107 = vmatpush1.bf16.msra.mxu0 0
        %2108 = vmatprep.subr.bf16.mxu0 0
        %2109 = vmatpush1.bf16.msra.mxu0 %v2092
        %2110 = vmatprep.subr.bf16.mxu0 0
        %2111 = vmatpush2.bf16.msra.mxu0 0
        %2112 = vmatprep.subr.bf16.mxu0 0
        %2113 = vmatpush2.bf16.msra.mxu0 0
        %2114 = vmatprep.subr.bf16.mxu0 0
        %2115 = vmatpush2.bf16.msra.mxu0 0
        %2116 = vmatprep.subr.bf16.mxu0 0
        %2117 = vmatpush2.bf16.msra.mxu0 0
        %2118 = vmatprep.subr.bf16.mxu0 0
        %2119 = vmatpush2.bf16.msra.mxu0 0
        %2120 = vmatprep.subr.bf16.mxu0 0
        %2121 = vmatpush2.bf16.msra.mxu0 0
        %2122 = vmatprep.subr.bf16.mxu0 0
        %2123 = vmatpush2.bf16.msra.mxu0 0
        %2124 = vmatprep.subr.bf16.mxu0 0
        %2125 = vmatpush2.bf16.msra.mxu0 0
        %2126 = vmatprep.mubr.bf16.mxu0 0
        %2127 = vmatmul.mubr.bf16.gmra.mxu0 %v2089
        %v2128 = vpop.f32.mrf.mxu0
        %v2129 = vadd.f32 0.0, %v2128
        %v2130 = vpop.f32.mrf.mxu0
        %v2131 = vpop.f32.mrf.mxu0
        %v2132 = vpop.f32.mrf.mxu0
        %2133 = vdwg.mxu0
        %2134 = vrot.lane.b32.xlu0 %v578, 64
        %v2135 = vpop.permute.xlu0 %2134
        %v2137 = vsel %vm1796, %v1976, 0
        %v2140 = vsel %vm1994, %v2135, 0
        %2142 = vmatprep.subr.bf16.mxu0 0
        %2143 = vmatpush1.bf16.msra.mxu0 0
        %2144 = vmatprep.subr.bf16.mxu0 0
        %2145 = vmatpush1.bf16.msra.mxu0 0
        %2146 = vmatprep.subr.bf16.mxu0 0
        %2147 = vmatpush1.bf16.msra.mxu0 0
        %2148 = vmatprep.subr.bf16.mxu0 0
        %2149 = vmatpush1.bf16.msra.mxu0 0
        %2150 = vmatprep.subr.bf16.mxu0 0
        %2151 = vmatpush1.bf16.msra.mxu0 0
        %2152 = vmatprep.subr.bf16.mxu0 0
        %2153 = vmatpush1.bf16.msra.mxu0 0
        %2154 = vmatprep.subr.bf16.mxu0 0
        %2155 = vmatpush1.bf16.msra.mxu0 0
        %2156 = vmatprep.subr.bf16.mxu0 0
        %2157 = vmatpush1.bf16.msra.mxu0 %v2140
        %2158 = vmatprep.subr.bf16.mxu0 0
        %2159 = vmatpush2.bf16.msra.mxu0 0
        %2160 = vmatprep.subr.bf16.mxu0 0
        %2161 = vmatpush2.bf16.msra.mxu0 0
        %2162 = vmatprep.subr.bf16.mxu0 0
        %2163 = vmatpush2.bf16.msra.mxu0 0
        %2164 = vmatprep.subr.bf16.mxu0 0
        %2165 = vmatpush2.bf16.msra.mxu0 0
        %2166 = vmatprep.subr.bf16.mxu0 0
        %2167 = vmatpush2.bf16.msra.mxu0 0
        %2168 = vmatprep.subr.bf16.mxu0 0
        %2169 = vmatpush2.bf16.msra.mxu0 0
        %2170 = vmatprep.subr.bf16.mxu0 0
        %2171 = vmatpush2.bf16.msra.mxu0 0
        %2172 = vmatprep.subr.bf16.mxu0 0
        %2173 = vmatpush2.bf16.msra.mxu0 0
        %2174 = vmatprep.mubr.bf16.mxu0 0
        %2175 = vmatmul.mubr.bf16.gmra.mxu0 %v2137
        %v2176 = vpop.f32.mrf.mxu0
        %v2177 = vadd.f32 0.0, %v2176
        %v2178 = vpop.f32.mrf.mxu0
        %v2179 = vpop.f32.mrf.mxu0
        %v2180 = vpop.f32.mrf.mxu0
        %2181 = vdwg.mxu0
        %2182 = vrot.lane.b32.xlu0 %v579, 64
        %v2183 = vpop.permute.xlu0 %2182
        %v2185 = vsel %vm1796, %v1977, 0
        %v2188 = vsel %vm1994, %v2183, 0
        %2190 = vmatprep.subr.bf16.mxu0 0
        %2191 = vmatpush1.bf16.msra.mxu0 0
        %2192 = vmatprep.subr.bf16.mxu0 0
        %2193 = vmatpush1.bf16.msra.mxu0 0
        %2194 = vmatprep.subr.bf16.mxu0 0
        %2195 = vmatpush1.bf16.msra.mxu0 0
        %2196 = vmatprep.subr.bf16.mxu0 0
        %2197 = vmatpush1.bf16.msra.mxu0 0
        %2198 = vmatprep.subr.bf16.mxu0 0
        %2199 = vmatpush1.bf16.msra.mxu0 0
        %2200 = vmatprep.subr.bf16.mxu0 0
        %2201 = vmatpush1.bf16.msra.mxu0 0
        %2202 = vmatprep.subr.bf16.mxu0 0
        %2203 = vmatpush1.bf16.msra.mxu0 0
        %2204 = vmatprep.subr.bf16.mxu0 0
        %2205 = vmatpush1.bf16.msra.mxu0 %v2188
        %2206 = vmatprep.subr.bf16.mxu0 0
        %2207 = vmatpush2.bf16.msra.mxu0 0
        %2208 = vmatprep.subr.bf16.mxu0 0
        %2209 = vmatpush2.bf16.msra.mxu0 0
        %2210 = vmatprep.subr.bf16.mxu0 0
        %2211 = vmatpush2.bf16.msra.mxu0 0
        %2212 = vmatprep.subr.bf16.mxu0 0
        %2213 = vmatpush2.bf16.msra.mxu0 0
        %2214 = vmatprep.subr.bf16.mxu0 0
        %2215 = vmatpush2.bf16.msra.mxu0 0
        %2216 = vmatprep.subr.bf16.mxu0 0
        %2217 = vmatpush2.bf16.msra.mxu0 0
        %2218 = vmatprep.subr.bf16.mxu0 0
        %2219 = vmatpush2.bf16.msra.mxu0 0
        %2220 = vmatprep.subr.bf16.mxu0 0
        %2221 = vmatpush2.bf16.msra.mxu0 0
        %2222 = vmatprep.mubr.bf16.mxu0 0
        %2223 = vmatmul.mubr.bf16.gmra.mxu0 %v2185
        %v2224 = vpop.f32.mrf.mxu0
        %v2225 = vadd.f32 0.0, %v2224
        %v2226 = vpop.f32.mrf.mxu0
        %v2227 = vpop.f32.mrf.mxu0
        %v2228 = vpop.f32.mrf.mxu0
        %2229 = vdwg.mxu0
        %2230 = vrot.lane.b32.xlu0 %v580, 64
        %v2231 = vpop.permute.xlu0 %2230
        %v2233 = vsel %vm1796, %v1978, 0
        %v2236 = vsel %vm1994, %v2231, 0
        %2238 = vmatprep.subr.bf16.mxu0 0
        %2239 = vmatpush1.bf16.msra.mxu0 0
        %2240 = vmatprep.subr.bf16.mxu0 0
        %2241 = vmatpush1.bf16.msra.mxu0 0
        %2242 = vmatprep.subr.bf16.mxu0 0
        %2243 = vmatpush1.bf16.msra.mxu0 0
        %2244 = vmatprep.subr.bf16.mxu0 0
        %2245 = vmatpush1.bf16.msra.mxu0 0
        %2246 = vmatprep.subr.bf16.mxu0 0
        %2247 = vmatpush1.bf16.msra.mxu0 0
        %2248 = vmatprep.subr.bf16.mxu0 0
        %2249 = vmatpush1.bf16.msra.mxu0 0
        %2250 = vmatprep.subr.bf16.mxu0 0
        %2251 = vmatpush1.bf16.msra.mxu0 0
        %2252 = vmatprep.subr.bf16.mxu0 0
        %2253 = vmatpush1.bf16.msra.mxu0 %v2236
        %2254 = vmatprep.subr.bf16.mxu0 0
        %2255 = vmatpush2.bf16.msra.mxu0 0
        %2256 = vmatprep.subr.bf16.mxu0 0
        %2257 = vmatpush2.bf16.msra.mxu0 0
        %2258 = vmatprep.subr.bf16.mxu0 0
        %2259 = vmatpush2.bf16.msra.mxu0 0
        %2260 = vmatprep.subr.bf16.mxu0 0
        %2261 = vmatpush2.bf16.msra.mxu0 0
        %2262 = vmatprep.subr.bf16.mxu0 0
        %2263 = vmatpush2.bf16.msra.mxu0 0
        %2264 = vmatprep.subr.bf16.mxu0 0
        %2265 = vmatpush2.bf16.msra.mxu0 0
        %2266 = vmatprep.subr.bf16.mxu0 0
        %2267 = vmatpush2.bf16.msra.mxu0 0
        %2268 = vmatprep.subr.bf16.mxu0 0
        %2269 = vmatpush2.bf16.msra.mxu0 0
        %2270 = vmatprep.mubr.bf16.mxu0 0
        %2271 = vmatmul.mubr.bf16.gmra.mxu0 %v2233
        %v2272 = vpop.f32.mrf.mxu0
        %v2273 = vadd.f32 0.0, %v2272
        %v2274 = vpop.f32.mrf.mxu0
        %v2275 = vpop.f32.mrf.mxu0
        %v2276 = vpop.f32.mrf.mxu0
        %2277 = vdwg.mxu0
        %2278 = vrot.lane.b32.xlu0 %v581, 64
        %v2279 = vpop.permute.xlu0 %2278
        %v2281 = vsel %vm1796, %v1979, 0
        %v2284 = vsel %vm1994, %v2279, 0
        %2286 = vmatprep.subr.bf16.mxu0 0
        %2287 = vmatpush1.bf16.msra.mxu0 0
        %2288 = vmatprep.subr.bf16.mxu0 0
        %2289 = vmatpush1.bf16.msra.mxu0 0
        %2290 = vmatprep.subr.bf16.mxu0 0
        %2291 = vmatpush1.bf16.msra.mxu0 0
        %2292 = vmatprep.subr.bf16.mxu0 0
        %2293 = vmatpush1.bf16.msra.mxu0 0
        %2294 = vmatprep.subr.bf16.mxu0 0
        %2295 = vmatpush1.bf16.msra.mxu0 0
        %2296 = vmatprep.subr.bf16.mxu0 0
        %2297 = vmatpush1.bf16.msra.mxu0 0
        %2298 = vmatprep.subr.bf16.mxu0 0
        %2299 = vmatpush1.bf16.msra.mxu0 0
        %2300 = vmatprep.subr.bf16.mxu0 0
        %2301 = vmatpush1.bf16.msra.mxu0 %v2284
        %2302 = vmatprep.subr.bf16.mxu0 0
        %2303 = vmatpush2.bf16.msra.mxu0 0
        %2304 = vmatprep.subr.bf16.mxu0 0
        %2305 = vmatpush2.bf16.msra.mxu0 0
        %2306 = vmatprep.subr.bf16.mxu0 0
        %2307 = vmatpush2.bf16.msra.mxu0 0
        %2308 = vmatprep.subr.bf16.mxu0 0
        %2309 = vmatpush2.bf16.msra.mxu0 0
        %2310 = vmatprep.subr.bf16.mxu0 0
        %2311 = vmatpush2.bf16.msra.mxu0 0
        %2312 = vmatprep.subr.bf16.mxu0 0
        %2313 = vmatpush2.bf16.msra.mxu0 0
        %2314 = vmatprep.subr.bf16.mxu0 0
        %2315 = vmatpush2.bf16.msra.mxu0 0
        %2316 = vmatprep.subr.bf16.mxu0 0
        %2317 = vmatpush2.bf16.msra.mxu0 0
        %2318 = vmatprep.mubr.bf16.mxu0 0
        %2319 = vmatmul.mubr.bf16.gmra.mxu0 %v2281
        %v2320 = vpop.f32.mrf.mxu0
        %v2321 = vadd.f32 0.0, %v2320
        %v2322 = vpop.f32.mrf.mxu0
        %v2323 = vpop.f32.mrf.mxu0
        %v2324 = vpop.f32.mrf.mxu0
        %2325 = vdwg.mxu0
        %2326 = vrot.lane.b32.xlu0 %v582, 64
        %v2327 = vpop.permute.xlu0 %2326
        %v2329 = vsel %vm1796, %v1980, 0
        %v2332 = vsel %vm1994, %v2327, 0
        %2334 = vmatprep.subr.bf16.mxu0 0
        %2335 = vmatpush1.bf16.msra.mxu0 0
        %2336 = vmatprep.subr.bf16.mxu0 0
        %2337 = vmatpush1.bf16.msra.mxu0 0
        %2338 = vmatprep.subr.bf16.mxu0 0
        %2339 = vmatpush1.bf16.msra.mxu0 0
        %2340 = vmatprep.subr.bf16.mxu0 0
        %2341 = vmatpush1.bf16.msra.mxu0 0
        %2342 = vmatprep.subr.bf16.mxu0 0
        %2343 = vmatpush1.bf16.msra.mxu0 0
        %2344 = vmatprep.subr.bf16.mxu0 0
        %2345 = vmatpush1.bf16.msra.mxu0 0
        %2346 = vmatprep.subr.bf16.mxu0 0
        %2347 = vmatpush1.bf16.msra.mxu0 0
        %2348 = vmatprep.subr.bf16.mxu0 0
        %2349 = vmatpush1.bf16.msra.mxu0 %v2332
        %2350 = vmatprep.subr.bf16.mxu0 0
        %2351 = vmatpush2.bf16.msra.mxu0 0
        %2352 = vmatprep.subr.bf16.mxu0 0
        %2353 = vmatpush2.bf16.msra.mxu0 0
        %2354 = vmatprep.subr.bf16.mxu0 0
        %2355 = vmatpush2.bf16.msra.mxu0 0
        %2356 = vmatprep.subr.bf16.mxu0 0
        %2357 = vmatpush2.bf16.msra.mxu0 0
        %2358 = vmatprep.subr.bf16.mxu0 0
        %2359 = vmatpush2.bf16.msra.mxu0 0
        %2360 = vmatprep.subr.bf16.mxu0 0
        %2361 = vmatpush2.bf16.msra.mxu0 0
        %2362 = vmatprep.subr.bf16.mxu0 0
        %2363 = vmatpush2.bf16.msra.mxu0 0
        %2364 = vmatprep.subr.bf16.mxu0 0
        %2365 = vmatpush2.bf16.msra.mxu0 0
        %2366 = vmatprep.mubr.bf16.mxu0 0
        %2367 = vmatmul.mubr.bf16.gmra.mxu0 %v2329
        %v2368 = vpop.f32.mrf.mxu0
        %v2369 = vadd.f32 0.0, %v2368
        %v2370 = vpop.f32.mrf.mxu0
        %v2371 = vpop.f32.mrf.mxu0
        %v2372 = vpop.f32.mrf.mxu0
        %2373 = vdwg.mxu0
        %v2374 = vunpack.c.l.b16 %v636
        %v2375 = vpack.c.b16 %v2374, %v2374
        %2376 = vrot.lane.b32.xlu0 %v2375, 64
        %v2377 = vpop.permute.xlu0 %2376
        %v2379 = vsel %vm1796, %v1981, 0
        %v2382 = vsel %vm1994, %v2377, 0
        %2384 = vmatprep.subr.bf16.mxu0 0
        %2385 = vmatpush1.bf16.msra.mxu0 0
        %2386 = vmatprep.subr.bf16.mxu0 0
        %2387 = vmatpush1.bf16.msra.mxu0 0
        %2388 = vmatprep.subr.bf16.mxu0 0
        %2389 = vmatpush1.bf16.msra.mxu0 0
        %2390 = vmatprep.subr.bf16.mxu0 0
        %2391 = vmatpush1.bf16.msra.mxu0 0
        %2392 = vmatprep.subr.bf16.mxu0 0
        %2393 = vmatpush1.bf16.msra.mxu0 0
        %2394 = vmatprep.subr.bf16.mxu0 0
        %2395 = vmatpush1.bf16.msra.mxu0 0
        %2396 = vmatprep.subr.bf16.mxu0 0
        %2397 = vmatpush1.bf16.msra.mxu0 0
        %2398 = vmatprep.subr.bf16.mxu0 0
        %2399 = vmatpush1.bf16.msra.mxu0 %v2382
        %2400 = vmatprep.subr.bf16.mxu0 0
        %2401 = vmatpush2.bf16.msra.mxu0 0
        %2402 = vmatprep.subr.bf16.mxu0 0
        %2403 = vmatpush2.bf16.msra.mxu0 0
        %2404 = vmatprep.subr.bf16.mxu0 0
        %2405 = vmatpush2.bf16.msra.mxu0 0
        %2406 = vmatprep.subr.bf16.mxu0 0
        %2407 = vmatpush2.bf16.msra.mxu0 0
        %2408 = vmatprep.subr.bf16.mxu0 0
        %2409 = vmatpush2.bf16.msra.mxu0 0
        %2410 = vmatprep.subr.bf16.mxu0 0
        %2411 = vmatpush2.bf16.msra.mxu0 0
        %2412 = vmatprep.subr.bf16.mxu0 0
        %2413 = vmatpush2.bf16.msra.mxu0 0
        %2414 = vmatprep.subr.bf16.mxu0 0
        %2415 = vmatpush2.bf16.msra.mxu0 0
        %2416 = vmatprep.mubr.bf16.mxu0 0
        %2417 = vmatmul.mubr.bf16.gmra.mxu0 %v2379
        %v2418 = vpop.f32.mrf.mxu0
        %v2419 = vadd.f32 0.0, %v2418
        %v2420 = vpop.f32.mrf.mxu0
        %v2421 = vpop.f32.mrf.mxu0
        %v2422 = vpop.f32.mrf.mxu0
        %2423 = vdwg.mxu0
        %v2424 = vunpack.c.l.b16 %v637
        %v2425 = vpack.c.b16 %v2424, %v2424
        %2426 = vrot.lane.b32.xlu0 %v2425, 64
        %v2427 = vpop.permute.xlu0 %2426
        %v2429 = vsel %vm1796, %v1982, 0
        %v2432 = vsel %vm1994, %v2427, 0
        %2434 = vmatprep.subr.bf16.mxu0 0
        %2435 = vmatpush1.bf16.msra.mxu0 0
        %2436 = vmatprep.subr.bf16.mxu0 0
        %2437 = vmatpush1.bf16.msra.mxu0 0
        %2438 = vmatprep.subr.bf16.mxu0 0
        %2439 = vmatpush1.bf16.msra.mxu0 0
        %2440 = vmatprep.subr.bf16.mxu0 0
        %2441 = vmatpush1.bf16.msra.mxu0 0
        %2442 = vmatprep.subr.bf16.mxu0 0
        %2443 = vmatpush1.bf16.msra.mxu0 0
        %2444 = vmatprep.subr.bf16.mxu0 0
        %2445 = vmatpush1.bf16.msra.mxu0 0
        %2446 = vmatprep.subr.bf16.mxu0 0
        %2447 = vmatpush1.bf16.msra.mxu0 0
        %2448 = vmatprep.subr.bf16.mxu0 0
        %2449 = vmatpush1.bf16.msra.mxu0 %v2432
        %2450 = vmatprep.subr.bf16.mxu0 0
        %2451 = vmatpush2.bf16.msra.mxu0 0
        %2452 = vmatprep.subr.bf16.mxu0 0
        %2453 = vmatpush2.bf16.msra.mxu0 0
        %2454 = vmatprep.subr.bf16.mxu0 0
        %2455 = vmatpush2.bf16.msra.mxu0 0
        %2456 = vmatprep.subr.bf16.mxu0 0
        %2457 = vmatpush2.bf16.msra.mxu0 0
        %2458 = vmatprep.subr.bf16.mxu0 0
        %2459 = vmatpush2.bf16.msra.mxu0 0
        %2460 = vmatprep.subr.bf16.mxu0 0
        %2461 = vmatpush2.bf16.msra.mxu0 0
        %2462 = vmatprep.subr.bf16.mxu0 0
        %2463 = vmatpush2.bf16.msra.mxu0 0
        %2464 = vmatprep.subr.bf16.mxu0 0
        %2465 = vmatpush2.bf16.msra.mxu0 0
        %2466 = vmatprep.mubr.bf16.mxu0 0
        %2467 = vmatmul.mubr.bf16.gmra.mxu0 %v2429
        %v2468 = vpop.f32.mrf.mxu0
        %v2469 = vadd.f32 0.0, %v2468
        %v2470 = vpop.f32.mrf.mxu0
        %v2471 = vpop.f32.mrf.mxu0
        %v2472 = vpop.f32.mrf.mxu0
        %2473 = vdwg.mxu0
        %v2474 = vunpack.c.l.b16 %v638
        %v2475 = vpack.c.b16 %v2474, %v2474
        %2476 = vrot.lane.b32.xlu0 %v2475, 64
        %v2477 = vpop.permute.xlu0 %2476
        %v2479 = vsel %vm1796, %v1983, 0
        %v2482 = vsel %vm1994, %v2477, 0
        %2484 = vmatprep.subr.bf16.mxu0 0
        %2485 = vmatpush1.bf16.msra.mxu0 0
        %2486 = vmatprep.subr.bf16.mxu0 0
        %2487 = vmatpush1.bf16.msra.mxu0 0
        %2488 = vmatprep.subr.bf16.mxu0 0
        %2489 = vmatpush1.bf16.msra.mxu0 0
        %2490 = vmatprep.subr.bf16.mxu0 0
        %2491 = vmatpush1.bf16.msra.mxu0 0
        %2492 = vmatprep.subr.bf16.mxu0 0
        %2493 = vmatpush1.bf16.msra.mxu0 0
        %2494 = vmatprep.subr.bf16.mxu0 0
        %2495 = vmatpush1.bf16.msra.mxu0 0
        %2496 = vmatprep.subr.bf16.mxu0 0
        %2497 = vmatpush1.bf16.msra.mxu0 0
        %2498 = vmatprep.subr.bf16.mxu0 0
        %2499 = vmatpush1.bf16.msra.mxu0 %v2482
        %2500 = vmatprep.subr.bf16.mxu0 0
        %2501 = vmatpush2.bf16.msra.mxu0 0
        %2502 = vmatprep.subr.bf16.mxu0 0
        %2503 = vmatpush2.bf16.msra.mxu0 0
        %2504 = vmatprep.subr.bf16.mxu0 0
        %2505 = vmatpush2.bf16.msra.mxu0 0
        %2506 = vmatprep.subr.bf16.mxu0 0
        %2507 = vmatpush2.bf16.msra.mxu0 0
        %2508 = vmatprep.subr.bf16.mxu0 0
        %2509 = vmatpush2.bf16.msra.mxu0 0
        %2510 = vmatprep.subr.bf16.mxu0 0
        %2511 = vmatpush2.bf16.msra.mxu0 0
        %2512 = vmatprep.subr.bf16.mxu0 0
        %2513 = vmatpush2.bf16.msra.mxu0 0
        %2514 = vmatprep.subr.bf16.mxu0 0
        %2515 = vmatpush2.bf16.msra.mxu0 0
        %2516 = vmatprep.mubr.bf16.mxu0 0
        %2517 = vmatmul.mubr.bf16.gmra.mxu0 %v2479
        %v2518 = vpop.f32.mrf.mxu0
        %v2519 = vadd.f32 0.0, %v2518
        %v2520 = vpop.f32.mrf.mxu0
        %v2521 = vpop.f32.mrf.mxu0
        %v2522 = vpop.f32.mrf.mxu0
        %2523 = vdwg.mxu0
        %v2524 = vunpack.c.l.b16 %v639
        %v2525 = vpack.c.b16 %v2524, %v2524
        %2526 = vrot.lane.b32.xlu0 %v2525, 64
        %v2527 = vpop.permute.xlu0 %2526
        %v2529 = vsel %vm1796, %v1984, 0
        %v2532 = vsel %vm1994, %v2527, 0
        %2534 = vmatprep.subr.bf16.mxu0 0
        %2535 = vmatpush1.bf16.msra.mxu0 0
        %2536 = vmatprep.subr.bf16.mxu0 0
        %2537 = vmatpush1.bf16.msra.mxu0 0
        %2538 = vmatprep.subr.bf16.mxu0 0
        %2539 = vmatpush1.bf16.msra.mxu0 0
        %2540 = vmatprep.subr.bf16.mxu0 0
        %2541 = vmatpush1.bf16.msra.mxu0 0
        %2542 = vmatprep.subr.bf16.mxu0 0
        %2543 = vmatpush1.bf16.msra.mxu0 0
        %2544 = vmatprep.subr.bf16.mxu0 0
        %2545 = vmatpush1.bf16.msra.mxu0 0
        %2546 = vmatprep.subr.bf16.mxu0 0
        %2547 = vmatpush1.bf16.msra.mxu0 0
        %2548 = vmatprep.subr.bf16.mxu0 0
        %2549 = vmatpush1.bf16.msra.mxu0 %v2532
        %2550 = vmatprep.subr.bf16.mxu0 0
        %2551 = vmatpush2.bf16.msra.mxu0 0
        %2552 = vmatprep.subr.bf16.mxu0 0
        %2553 = vmatpush2.bf16.msra.mxu0 0
        %2554 = vmatprep.subr.bf16.mxu0 0
        %2555 = vmatpush2.bf16.msra.mxu0 0
        %2556 = vmatprep.subr.bf16.mxu0 0
        %2557 = vmatpush2.bf16.msra.mxu0 0
        %2558 = vmatprep.subr.bf16.mxu0 0
        %2559 = vmatpush2.bf16.msra.mxu0 0
        %2560 = vmatprep.subr.bf16.mxu0 0
        %2561 = vmatpush2.bf16.msra.mxu0 0
        %2562 = vmatprep.subr.bf16.mxu0 0
        %2563 = vmatpush2.bf16.msra.mxu0 0
        %2564 = vmatprep.subr.bf16.mxu0 0
        %2565 = vmatpush2.bf16.msra.mxu0 0
        %2566 = vmatprep.mubr.bf16.mxu0 0
        %2567 = vmatmul.mubr.bf16.gmra.mxu0 %v2529
        %v2568 = vpop.f32.mrf.mxu0
        %v2569 = vadd.f32 0.0, %v2568
        %v2570 = vpop.f32.mrf.mxu0
        %v2571 = vpop.f32.mrf.mxu0
        %v2572 = vpop.f32.mrf.mxu0
        %2573 = vdwg.mxu0
        %v2574 = vunpack.c.l.b16 %v640
        %v2575 = vpack.c.b16 %v2574, %v2574
        %2576 = vrot.lane.b32.xlu0 %v2575, 64
        %v2577 = vpop.permute.xlu0 %2576
        %v2579 = vsel %vm1796, %v1985, 0
        %v2582 = vsel %vm1994, %v2577, 0
        %2584 = vmatprep.subr.bf16.mxu0 0
        %2585 = vmatpush1.bf16.msra.mxu0 0
        %2586 = vmatprep.subr.bf16.mxu0 0
        %2587 = vmatpush1.bf16.msra.mxu0 0
        %2588 = vmatprep.subr.bf16.mxu0 0
        %2589 = vmatpush1.bf16.msra.mxu0 0
        %2590 = vmatprep.subr.bf16.mxu0 0
        %2591 = vmatpush1.bf16.msra.mxu0 0
        %2592 = vmatprep.subr.bf16.mxu0 0
        %2593 = vmatpush1.bf16.msra.mxu0 0
        %2594 = vmatprep.subr.bf16.mxu0 0
        %2595 = vmatpush1.bf16.msra.mxu0 0
        %2596 = vmatprep.subr.bf16.mxu0 0
        %2597 = vmatpush1.bf16.msra.mxu0 0
        %2598 = vmatprep.subr.bf16.mxu0 0
        %2599 = vmatpush1.bf16.msra.mxu0 %v2582
        %2600 = vmatprep.subr.bf16.mxu0 0
        %2601 = vmatpush2.bf16.msra.mxu0 0
        %2602 = vmatprep.subr.bf16.mxu0 0
        %2603 = vmatpush2.bf16.msra.mxu0 0
        %2604 = vmatprep.subr.bf16.mxu0 0
        %2605 = vmatpush2.bf16.msra.mxu0 0
        %2606 = vmatprep.subr.bf16.mxu0 0
        %2607 = vmatpush2.bf16.msra.mxu0 0
        %2608 = vmatprep.subr.bf16.mxu0 0
        %2609 = vmatpush2.bf16.msra.mxu0 0
        %2610 = vmatprep.subr.bf16.mxu0 0
        %2611 = vmatpush2.bf16.msra.mxu0 0
        %2612 = vmatprep.subr.bf16.mxu0 0
        %2613 = vmatpush2.bf16.msra.mxu0 0
        %2614 = vmatprep.subr.bf16.mxu0 0
        %2615 = vmatpush2.bf16.msra.mxu0 0
        %2616 = vmatprep.mubr.bf16.mxu0 0
        %2617 = vmatmul.mubr.bf16.gmra.mxu0 %v2579
        %v2618 = vpop.f32.mrf.mxu0
        %v2619 = vadd.f32 0.0, %v2618
        %v2620 = vpop.f32.mrf.mxu0
        %v2621 = vpop.f32.mrf.mxu0
        %v2622 = vpop.f32.mrf.mxu0
        %2623 = vdwg.mxu0
        %v2624 = vunpack.c.l.b16 %v641
        %v2625 = vpack.c.b16 %v2624, %v2624
        %2626 = vrot.lane.b32.xlu0 %v2625, 64
        %v2627 = vpop.permute.xlu0 %2626
        %v2629 = vsel %vm1796, %v1986, 0
        %v2632 = vsel %vm1994, %v2627, 0
        %2634 = vmatprep.subr.bf16.mxu0 0
        %2635 = vmatpush1.bf16.msra.mxu0 0
        %2636 = vmatprep.subr.bf16.mxu0 0
        %2637 = vmatpush1.bf16.msra.mxu0 0
        %2638 = vmatprep.subr.bf16.mxu0 0
        %2639 = vmatpush1.bf16.msra.mxu0 0
        %2640 = vmatprep.subr.bf16.mxu0 0
        %2641 = vmatpush1.bf16.msra.mxu0 0
        %2642 = vmatprep.subr.bf16.mxu0 0
        %2643 = vmatpush1.bf16.msra.mxu0 0
        %2644 = vmatprep.subr.bf16.mxu0 0
        %2645 = vmatpush1.bf16.msra.mxu0 0
        %2646 = vmatprep.subr.bf16.mxu0 0
        %2647 = vmatpush1.bf16.msra.mxu0 0
        %2648 = vmatprep.subr.bf16.mxu0 0
        %2649 = vmatpush1.bf16.msra.mxu0 %v2632
        %2650 = vmatprep.subr.bf16.mxu0 0
        %2651 = vmatpush2.bf16.msra.mxu0 0
        %2652 = vmatprep.subr.bf16.mxu0 0
        %2653 = vmatpush2.bf16.msra.mxu0 0
        %2654 = vmatprep.subr.bf16.mxu0 0
        %2655 = vmatpush2.bf16.msra.mxu0 0
        %2656 = vmatprep.subr.bf16.mxu0 0
        %2657 = vmatpush2.bf16.msra.mxu0 0
        %2658 = vmatprep.subr.bf16.mxu0 0
        %2659 = vmatpush2.bf16.msra.mxu0 0
        %2660 = vmatprep.subr.bf16.mxu0 0
        %2661 = vmatpush2.bf16.msra.mxu0 0
        %2662 = vmatprep.subr.bf16.mxu0 0
        %2663 = vmatpush2.bf16.msra.mxu0 0
        %2664 = vmatprep.subr.bf16.mxu0 0
        %2665 = vmatpush2.bf16.msra.mxu0 0
        %2666 = vmatprep.mubr.bf16.mxu0 0
        %2667 = vmatmul.mubr.bf16.gmra.mxu0 %v2629
        %v2668 = vpop.f32.mrf.mxu0
        %v2669 = vadd.f32 0.0, %v2668
        %v2670 = vpop.f32.mrf.mxu0
        %v2671 = vpop.f32.mrf.mxu0
        %v2672 = vpop.f32.mrf.mxu0
        %2673 = vdwg.mxu0
        %v2674 = vunpack.c.l.b16 %v642
        %v2675 = vpack.c.b16 %v2674, %v2674
        %2676 = vrot.lane.b32.xlu0 %v2675, 64
        %v2677 = vpop.permute.xlu0 %2676
        %v2679 = vsel %vm1796, %v1987, 0
        %v2682 = vsel %vm1994, %v2677, 0
        %2684 = vmatprep.subr.bf16.mxu0 0
        %2685 = vmatpush1.bf16.msra.mxu0 0
        %2686 = vmatprep.subr.bf16.mxu0 0
        %2687 = vmatpush1.bf16.msra.mxu0 0
        %2688 = vmatprep.subr.bf16.mxu0 0
        %2689 = vmatpush1.bf16.msra.mxu0 0
        %2690 = vmatprep.subr.bf16.mxu0 0
        %2691 = vmatpush1.bf16.msra.mxu0 0
        %2692 = vmatprep.subr.bf16.mxu0 0
        %2693 = vmatpush1.bf16.msra.mxu0 0
        %2694 = vmatprep.subr.bf16.mxu0 0
        %2695 = vmatpush1.bf16.msra.mxu0 0
        %2696 = vmatprep.subr.bf16.mxu0 0
        %2697 = vmatpush1.bf16.msra.mxu0 0
        %2698 = vmatprep.subr.bf16.mxu0 0
        %2699 = vmatpush1.bf16.msra.mxu0 %v2682
        %2700 = vmatprep.subr.bf16.mxu0 0
        %2701 = vmatpush2.bf16.msra.mxu0 0
        %2702 = vmatprep.subr.bf16.mxu0 0
        %2703 = vmatpush2.bf16.msra.mxu0 0
        %2704 = vmatprep.subr.bf16.mxu0 0
        %2705 = vmatpush2.bf16.msra.mxu0 0
        %2706 = vmatprep.subr.bf16.mxu0 0
        %2707 = vmatpush2.bf16.msra.mxu0 0
        %2708 = vmatprep.subr.bf16.mxu0 0
        %2709 = vmatpush2.bf16.msra.mxu0 0
        %2710 = vmatprep.subr.bf16.mxu0 0
        %2711 = vmatpush2.bf16.msra.mxu0 0
        %2712 = vmatprep.subr.bf16.mxu0 0
        %2713 = vmatpush2.bf16.msra.mxu0 0
        %2714 = vmatprep.subr.bf16.mxu0 0
        %2715 = vmatpush2.bf16.msra.mxu0 0
        %2716 = vmatprep.mubr.bf16.mxu0 0
        %2717 = vmatmul.mubr.bf16.gmra.mxu0 %v2679
        %v2718 = vpop.f32.mrf.mxu0
        %v2719 = vadd.f32 0.0, %v2718
        %v2720 = vpop.f32.mrf.mxu0
        %v2721 = vpop.f32.mrf.mxu0
        %v2722 = vpop.f32.mrf.mxu0
        %2723 = vdwg.mxu0
        %v2724 = vunpack.c.l.b16 %v643
        %v2725 = vpack.c.b16 %v2724, %v2724
        %2726 = vrot.lane.b32.xlu0 %v2725, 64
        %v2727 = vpop.permute.xlu0 %2726
        %v2729 = vsel %vm1796, %v1988, 0
        %v2732 = vsel %vm1994, %v2727, 0
        %2734 = vmatprep.subr.bf16.mxu0 0
        %2735 = vmatpush1.bf16.msra.mxu0 0
        %2736 = vmatprep.subr.bf16.mxu0 0
        %2737 = vmatpush1.bf16.msra.mxu0 0
        %2738 = vmatprep.subr.bf16.mxu0 0
        %2739 = vmatpush1.bf16.msra.mxu0 0
        %2740 = vmatprep.subr.bf16.mxu0 0
        %2741 = vmatpush1.bf16.msra.mxu0 0
        %2742 = vmatprep.subr.bf16.mxu0 0
        %2743 = vmatpush1.bf16.msra.mxu0 0
        %2744 = vmatprep.subr.bf16.mxu0 0
        %2745 = vmatpush1.bf16.msra.mxu0 0
        %2746 = vmatprep.subr.bf16.mxu0 0
        %2747 = vmatpush1.bf16.msra.mxu0 0
        %2748 = vmatprep.subr.bf16.mxu0 0
        %2749 = vmatpush1.bf16.msra.mxu0 %v2732
        %2750 = vmatprep.subr.bf16.mxu0 0
        %2751 = vmatpush2.bf16.msra.mxu0 0
        %2752 = vmatprep.subr.bf16.mxu0 0
        %2753 = vmatpush2.bf16.msra.mxu0 0
        %2754 = vmatprep.subr.bf16.mxu0 0
        %2755 = vmatpush2.bf16.msra.mxu0 0
        %2756 = vmatprep.subr.bf16.mxu0 0
        %2757 = vmatpush2.bf16.msra.mxu0 0
        %2758 = vmatprep.subr.bf16.mxu0 0
        %2759 = vmatpush2.bf16.msra.mxu0 0
        %2760 = vmatprep.subr.bf16.mxu0 0
        %2761 = vmatpush2.bf16.msra.mxu0 0
        %2762 = vmatprep.subr.bf16.mxu0 0
        %2763 = vmatpush2.bf16.msra.mxu0 0
        %2764 = vmatprep.subr.bf16.mxu0 0
        %2765 = vmatpush2.bf16.msra.mxu0 0
        %2766 = vmatprep.mubr.bf16.mxu0 0
        %2767 = vmatmul.mubr.bf16.gmra.mxu0 %v2729
        %v2768 = vpop.f32.mrf.mxu0
        %v2769 = vadd.f32 0.0, %v2768
        %v2770 = vpop.f32.mrf.mxu0
        %v2771 = vpop.f32.mrf.mxu0
        %v2772 = vpop.f32.mrf.mxu0
        %2773 = vdwg.mxu0
        %v2774 = vpack.c.bf16 %v2033, %v2033
        %v2775 = vpack.c.bf16 %v2081, %v2081
        %v2776 = vpack.c.bf16 %v2129, %v2129
        %v2777 = vpack.c.bf16 %v2177, %v2177
        %v2778 = vpack.c.bf16 %v2225, %v2225
        %v2779 = vpack.c.bf16 %v2273, %v2273
        %v2780 = vpack.c.bf16 %v2321, %v2321
        %v2781 = vpack.c.bf16 %v2369, %v2369
        %v2782 = vpack.c.bf16 %v2419, %v2419
        %v2783 = vpack.c.bf16 %v2469, %v2469
        %v2784 = vpack.c.bf16 %v2519, %v2519
        %v2785 = vpack.c.bf16 %v2569, %v2569
        %v2786 = vpack.c.bf16 %v2619, %v2619
        %v2787 = vpack.c.bf16 %v2669, %v2669
        %v2788 = vpack.c.bf16 %v2719, %v2719
        %v2789 = vpack.c.bf16 %v2769, %v2769
        %2798 = vrot.lane.b32.xlu0 %v2782, 32
        %v2799 = vpop.permute.xlu0 %2798
        %2800 = vrot.lane.b32.xlu0 %v2783, 32
        %v2801 = vpop.permute.xlu0 %2800
        %2802 = vrot.lane.b32.xlu0 %v2784, 32
        %v2803 = vpop.permute.xlu0 %2802
        %2804 = vrot.lane.b32.xlu0 %v2785, 32
        %v2805 = vpop.permute.xlu0 %2804
        %2806 = vrot.lane.b32.xlu0 %v2786, 32
        %v2807 = vpop.permute.xlu0 %2806
        %2808 = vrot.lane.b32.xlu0 %v2787, 32
        %v2809 = vpop.permute.xlu0 %2808
        %2810 = vrot.lane.b32.xlu0 %v2788, 32
        %v2811 = vpop.permute.xlu0 %2810
        %2812 = vrot.lane.b32.xlu0 %v2789, 32
        %v2813 = vpop.permute.xlu0 %2812
        %v2816 = vsel %vm684, %v2774, %v2799
        %v2819 = vsel %vm684, %v2775, %v2801
        %v2822 = vsel %vm684, %v2776, %v2803
        %v2825 = vsel %vm684, %v2777, %v2805
        %v2828 = vsel %vm684, %v2778, %v2807
        %v2831 = vsel %vm684, %v2779, %v2809
        %v2834 = vsel %vm684, %v2780, %v2811
        %v2837 = vsel %vm684, %v2781, %v2813
        %v2838 = vld [vmem:[#allocation10] sm:$0xf]
        %v2839 = vld [vmem:[#allocation10 + $0x4] sm:$0xf]
        %v2840 = vld [vmem:[#allocation10 + $0x8] sm:$0xf]
        %v2841 = vld [vmem:[#allocation10 + $0xc] sm:$0xf]
        %v2842 = vld [vmem:[#allocation10 + $0x10] sm:$0xf]
        %v2843 = vld [vmem:[#allocation10 + $0x14] sm:$0xf]
        %v2844 = vld [vmem:[#allocation10 + $0x18] sm:$0xf]
        %v2845 = vld [vmem:[#allocation10 + $0x1c] sm:$0xf]
        %v2846 = vld [vmem:[%s5] sm:$0x1]
        %v2848 = vlaneseq
        %v2849 = vshrl.u32 %v2848, 7
        %v2850 = vsub.s32 0, %v2849
        %v2851 = vrot.slane %v2846, %v2850
        %v2861 = vunpack.c.l.b16 %v2816
        %v2862 = vunpack.c.l.b16 %v2819
        %v2863 = vunpack.c.l.b16 %v2822
        %v2864 = vunpack.c.l.b16 %v2825
        %v2865 = vunpack.c.l.b16 %v2828
        %v2866 = vunpack.c.l.b16 %v2831
        %v2867 = vunpack.c.l.b16 %v2834
        %v2868 = vunpack.c.l.b16 %v2837
        %v2869 = vpack.c.b16 %v2862, %v2861
        %v2870 = vpack.c.b16 %v2864, %v2863
        %v2871 = vpack.c.b16 %v2866, %v2865
        %v2872 = vpack.c.b16 %v2868, %v2867
        %v2881 = vunpack.c.l.b16 %v2838
        %v2882 = vunpack.c.l.b16 %v2839
        %v2883 = vunpack.c.l.b16 %v2840
        %v2884 = vunpack.c.l.b16 %v2841
        %v2885 = vunpack.c.l.b16 %v2842
        %v2886 = vunpack.c.l.b16 %v2843
        %v2887 = vunpack.c.l.b16 %v2844
        %v2888 = vunpack.c.l.b16 %v2845
        %v2889 = vpack.c.b16 %v2882, %v2881
        %v2890 = vpack.c.b16 %v2884, %v2883
        %v2891 = vpack.c.b16 %v2886, %v2885
        %v2892 = vpack.c.b16 %v2888, %v2887
        %v2898 = vsel %vm469, %v2869, 0
        %v2901 = vsel %vm469, %v2870, 0
        %v2904 = vsel %vm469, %v2871, 0
        %v2907 = vsel %vm469, %v2872, 0
        %2909 = vmatprep.subr.bf16.mxu0 0
        %2910 = vmatpush1.bf16.msra.mxu0 0
        %2911 = vmatprep.subr.bf16.mxu0 0
        %2912 = vmatpush1.bf16.msra.mxu0 0
        %2913 = vmatprep.subr.bf16.mxu0 0
        %2914 = vmatpush1.bf16.msra.mxu0 0
        %2915 = vmatprep.subr.bf16.mxu0 0
        %2916 = vmatpush1.bf16.msra.mxu0 0
        %2917 = vmatprep.subr.bf16.mxu0 0
        %2918 = vmatpush1.bf16.msra.mxu0 %v2892
        %2919 = vmatprep.subr.bf16.mxu0 0
        %2920 = vmatpush1.bf16.msra.mxu0 %v2891
        %2921 = vmatprep.subr.bf16.mxu0 0
        %2922 = vmatpush1.bf16.msra.mxu0 %v2890
        %2923 = vmatprep.subr.bf16.mxu0 0
        %2924 = vmatpush1.bf16.msra.mxu0 %v2889
        %2925 = vmatprep.subr.bf16.mxu0 0
        %2926 = vmatpush2.bf16.msra.mxu0 0
        %2927 = vmatprep.subr.bf16.mxu0 0
        %2928 = vmatpush2.bf16.msra.mxu0 0
        %2929 = vmatprep.subr.bf16.mxu0 0
        %2930 = vmatpush2.bf16.msra.mxu0 0
        %2931 = vmatprep.subr.bf16.mxu0 0
        %2932 = vmatpush2.bf16.msra.mxu0 0
        %2933 = vmatprep.subr.bf16.mxu0 0
        %2934 = vmatpush2.bf16.msra.mxu0 0
        %2935 = vmatprep.subr.bf16.mxu0 0
        %2936 = vmatpush2.bf16.msra.mxu0 0
        %2937 = vmatprep.subr.bf16.mxu0 0
        %2938 = vmatpush2.bf16.msra.mxu0 0
        %2939 = vmatprep.subr.bf16.mxu0 0
        %2940 = vmatpush2.bf16.msra.mxu0 0
        %2941 = vmatprep.mubr.bf16.mxu0 0
        %2942 = vmatmul.mubr.bf16.gmra.mxu0 %v2898
        %v2943 = vpop.f32.mrf.mxu0
        %v2944 = vadd.f32 %v2851, %v2943
        %v2945 = vpop.f32.mrf.mxu0
        %v2946 = vpop.f32.mrf.mxu0
        %v2947 = vadd.f32 %v2851, %v2946
        %v2948 = vpop.f32.mrf.mxu0
        %2949 = vmatprep.mubr.bf16.mxu0 0
        %2950 = vmatmul.mubr.bf16.gmra.mxu0 %v2901
        %v2951 = vpop.f32.mrf.mxu0
        %v2952 = vadd.f32 %v2851, %v2951
        %v2953 = vpop.f32.mrf.mxu0
        %v2954 = vpop.f32.mrf.mxu0
        %v2955 = vadd.f32 %v2851, %v2954
        %v2956 = vpop.f32.mrf.mxu0
        %2957 = vmatprep.mubr.bf16.mxu0 0
        %2958 = vmatmul.mubr.bf16.gmra.mxu0 %v2904
        %v2959 = vpop.f32.mrf.mxu0
        %v2960 = vadd.f32 %v2851, %v2959
        %v2961 = vpop.f32.mrf.mxu0
        %v2962 = vpop.f32.mrf.mxu0
        %v2963 = vadd.f32 %v2851, %v2962
        %v2964 = vpop.f32.mrf.mxu0
        %2965 = vmatprep.mubr.bf16.mxu0 0
        %2966 = vmatmul.mubr.bf16.gmra.mxu0 %v2907
        %v2967 = vpop.f32.mrf.mxu0
        %v2968 = vadd.f32 %v2851, %v2967
        %v2969 = vpop.f32.mrf.mxu0
        %v2970 = vpop.f32.mrf.mxu0
        %v2971 = vadd.f32 %v2851, %v2970
        %v2972 = vpop.f32.mrf.mxu0
        %2973 = vdwg.mxu0
        %v2974 = vld [vmem:[%s323] sm:$0xff]
        %v2975 = vld [vmem:[%s323 + $0x8] sm:$0xff]
        %v2976 = vld [vmem:[%s323 + $0x10] sm:$0xff]
        %v2977 = vld [vmem:[%s323 + $0x18] sm:$0xff]
        %v2978 = vld [vmem:[%s323 + $0x20] sm:$0xff]
        %v2979 = vld [vmem:[%s323 + $0x28] sm:$0xff]
        %v2980 = vld [vmem:[%s323 + $0x30] sm:$0xff]
        %v2981 = vld [vmem:[%s323 + $0x38] sm:$0xff]
        %v2982 = vadd.f32 %v2974, %v2944
        %v2983 = vadd.f32 %v2975, %v2947
        %v2984 = vadd.f32 %v2976, %v2952
        %v2985 = vadd.f32 %v2977, %v2955
        %v2986 = vadd.f32 %v2978, %v2960
        %v2987 = vadd.f32 %v2979, %v2963
        %v2988 = vadd.f32 %v2980, %v2968
        %v2989 = vadd.f32 %v2981, %v2971
        %2990 = vst.msk [vmem:[%s387] sm:$0xff] %vm469, %v2982
        %2991 = vst.msk [vmem:[%s387 + $0x8] sm:$0xff] %vm469, %v2983
        %2992 = vst.msk [vmem:[%s387 + $0x10] sm:$0xff] %vm469, %v2984
        %2993 = vst.msk [vmem:[%s387 + $0x18] sm:$0xff] %vm469, %v2985
        %2994 = vst.msk [vmem:[%s387 + $0x20] sm:$0xff] %vm469, %v2986
        %2995 = vst.msk [vmem:[%s387 + $0x28] sm:$0xff] %vm469, %v2987
        %2996 = vst.msk [vmem:[%s387 + $0x30] sm:$0xff] %vm469, %v2988
        %2997 = vst.msk [vmem:[%s387 + $0x38] sm:$0xff] %vm469, %v2989
        %s2998 = sand.u32 %s192, 1
        %s2999 = scalar_lea.sflag [#allocation4], %s2998
        %s3000 = sand.u32 %s192, 1
        %s3001 = smul.addr %s3000, 64
        %s3002 = scalar_lea.vmem [#allocation11], %s3001
        // Predicated region
        $region65: #{tpu_custom_call.1} parent=43 // pred_check
          %p3003 = pneg %p202
        $region66: #{tpu_custom_call.1} parent=43 // pred_check_branch
          %3005 = sbr.rel (%p3003) target = $region68
        $region67: #{tpu_custom_call.1} parent=43 // pred_region
          %s3006 = smul.u32 8, %s32
          %s3008 = ssub.s32 1024, 1024
          %3009 = vsyncadd %s2999, %s3008
          %s3010 = smul.addr %s31, 16
          %s3011 = sadd.s32 %s3006, %s3010
          %s3012 = smul.addr %s3011, 128
          %s3013 = scalar_lea.hbm %s6, %s3012
          %s3014 = sshll.u32 %s3002, 4
          %s3015 = int_to_ptr.vmem [resolvable:$true] %s3014
          %3020 = dma.vmem_to_hbm [thread:$0]  %s3015, 1024, %s3013, %s2999, 128, 128, 8
        $region68: #{tpu_custom_call.1} parent=43 // pred_fallthru
          _
      $region44: #{tpu_custom_call.1} parent=5 // pred_fallthru
        _
      %p3021 = scmp.le.s32.totalorder 2, %s22
      // Predicated region
      $region69: #{tpu_custom_call.1} parent=5 // pred_check
        %p3022 = pneg %p3021
      $region70: #{tpu_custom_call.1} parent=5 // pred_check_branch
        %3024 = sbr.rel (%p3022) target = $region72
      $region71: #{tpu_custom_call.1} parent=5 // pred_region
        %s3025 = ssub.s32 %s22, 2
        // Predicated region
        $region73: #{tpu_custom_call.1} parent=71 // pred_check
          %p3026 = pneg %p208
        $region74: #{tpu_custom_call.1} parent=71 // pred_check_branch
          %3028 = sbr.rel (%p3026) target = $region76
        $region75: #{tpu_custom_call.1} parent=71 // pred_region
          %s3029 = sand.u32 %s193, 1
          %s3030 = scalar_lea.sflag [#allocation4], %s3029
          %s3031 = sand.u32 %s193, 1
          %s3032 = smul.addr %s3031, 64
          %s3033 = scalar_lea.vmem [#allocation11], %s3032
          %3034 = dma.done %s3030, 1024
        $region76: #{tpu_custom_call.1} parent=71 // pred_fallthru
          _
      $region72: #{tpu_custom_call.1} parent=5 // pred_fallthru
        _
    $region6: #{tpu_custom_call.1} parent=1 // loop_footer
      %s26 = sadd.s32 1, %s22
    $region7: #{tpu_custom_call.1} parent=1 // loop_footer_branch
      %21 = sbr.rel target = $region3
    $region8: #{tpu_custom_call.1} parent=1 // loop_exit
      _
    %3035 = vsyncpa [#allocation3], 1
    %s3036 = scalar_lea.sflag [#allocation3], 1
    %3037 = vsyncpa %s3036, 1
    %3038 = vsyncpa [#allocation6], 1
    %s3039 = scalar_lea.sflag [#allocation6], 1
    %3040 = vsyncpa %s3039, 1
    %3041 = vsyncpa [#allocation9], 1
    %3042 = vsyncpa [#allocation4], 1
    %s3043 = scalar_lea.sflag [#allocation4], 1
    %3044 = vsyncpa %s3043, 1

</llo_original>
